<compile_context>
chip_gen: v7x
topology: tpu7x:2x2x1
jax: 0.10.0
libtpu: 0.0.40
codegen_flags: <defaults>
</compile_context>

<pallas_src>
import jax
import jax.numpy as jnp
from jax import lax
from jax.experimental import pallas as pl
from jax.experimental.pallas import tpu as pltpu


def _pool_kernel(b_ref, x_ref, o_ref):
    # b_ref: (L, Lo)   pooling matrix (0.25 entries), VMEM-resident (constant index_map)
    # x_ref: (BM, L)   lane-dense slab of flattened image rows
    # o_ref: (BM, Lo)  pooled slab (lane-dense output)
    o_ref[...] = jnp.dot(
        x_ref[...],
        b_ref[...],
        preferred_element_type=jnp.float32,
        precision=lax.Precision.HIGHEST,   # exact f32 averaging; kernel stays HBM-bound
    ).astype(o_ref.dtype)


def _device_kind():
    try:
        return jax.devices()[0].device_kind.lower()
    except Exception:
        return ""


def _sublane_multiple(dtype):
    # 8 rows per sublane tile for 4-byte dtypes, 16 for bf16, 32 for int8/fp8.
    return max(8, 32 // jnp.dtype(dtype).itemsize)


def _pick_group(total_rows, width, target_l, max_l):
    """Pick an even group size G dividing total_rows so L = G*width is (in priority
    order) <= max_l, a multiple of 512 (=> Lo = L/4 lane-aligned), a multiple of 128,
    and close to target_l.  total_rows is always even, so G=2 is a valid fallback."""
    best_g, best_score = None, None
    g = 2
    while g <= total_rows:
        L = g * width
        if L > max_l and best_g is not None:
            break
        if total_rows % g == 0:
            score = (L <= max_l, L % 512 == 0, L % 128 == 0, -abs(L - target_l))
            if best_score is None or score > best_score:
                best_score, best_g = score, g
        g += 2
    return 2 if best_g is None else best_g


@jax.jit
def transition_forward(x):
    """AvgPool2d(kernel_size=2, stride=2) on NCHW input via one lane-dense Pallas matmul."""
    N, C, H, W = x.shape
    Ho, Wo = H // 2, W // 2
    assert Ho > 0 and Wo > 0, "AvgPool2d(2,2) needs H,W >= 2"
    H2, W2 = 2 * Ho, 2 * Wo

    # Floor mode: drop trailing odd row/col.  Only slice when actually needed so the
    # common even-size case keeps the downstream reshape metadata-only.
    if (H2, W2) != (H, W):
        # TODO(synk): odd H/W breaks contiguity here and costs one extra HBM copy; could
        # be folded into the kernel's index_map if it ever matters for this model.
        x = x[:, :, :H2, :W2]

    kind = _device_kind()
    is_v5e = ("v5e" in kind) or ("v5 lite" in kind) or ("v5litepod" in kind)
    is_v7 = "v7" in kind

    # Lane-length targets: Lo = L/4 should be 256 on v6e/v7x (256-wide MXU) and 128 on
    # v5e (128x128 MXU; larger Lo risks flipping MXU-bound).  Cap L so B = L*Lo stays a
    # small VMEM-resident constant and MAC redundancy stays bounded.
    target_l = 512 if is_v5e else 1024
    max_l = 1024 if is_v5e else 2048

    R = N * C * H2                      # total image rows (even, since H2 is even)
    G = _pick_group(R, W2, target_l, max_l)
    L = G * W2
    Lo = L // 4
    M = R // G

    # TODO(synk): extremely wide feature maps (L > 4096 even at G=2) would need an extra
    # column tiling; CondenseNetV2 transition layers never see such widths.
    assert L <= 4096, f"feature-map width {W2} too large for the lane-dense pooling matmul"

    xf = x.reshape(M, L)                # metadata-only for contiguous NCHW

    # Pooling matrix B (L, Lo): flattened in-group element k = (row r, col c) feeds
    # output element m = (r//2)*Wo + (c//2) with weight 0.25 (scale folded in).
    k = jnp.arange(L)
    r = k // W2
    c = k % W2
    m_of_k = (r // 2) * Wo + (c // 2)
    B = jnp.where(
        m_of_k[:, None] == jnp.arange(Lo)[None, :],
        jnp.asarray(0.25, x.dtype),
        jnp.asarray(0.0, x.dtype),
    )

    # Streaming block over M: ~8 MiB of input per grid step (4 MiB on v5e).  On v7x,
    # cap at ceil(M/2) rows so the "parallel" grid axis has >= 2 steps and both
    # TensorCores get work.  Sublane rounding is dtype-aware.
    itemsize = jnp.dtype(x.dtype).itemsize
    sub = _sublane_multiple(x.dtype)
    target_bytes = (4 if is_v5e else 8) * 1024 * 1024
    rows = max(sub, target_bytes // (L * itemsize))
    if is_v7 and M >= 2 * sub:
        rows = min(rows, pl.cdiv(M, 2))
    if rows >= M:
        BM = M                          # single block; block dim == full array dim is legal
    else:
        BM = max(sub, (rows // sub) * sub)
    grid = (pl.cdiv(M, BM),)

    # Explicit VMEM budget: 2x input block + 2x output block + B (budgeted double even
    # though single-buffered) + slack.  v7x only has 64 MiB VMEM per TensorCore.
    in_bytes = BM * L * itemsize
    out_bytes = BM * Lo * itemsize
    b_bytes = L * Lo * itemsize
    need = 2 * in_bytes + 2 * out_bytes + 2 * b_bytes + (4 << 20)
    vmem_cap = (56 << 20) if is_v7 else (100 << 20)
    vmem_limit = int(min(vmem_cap, max(32 << 20, need)))

    cost = pl.CostEstimate(
        flops=2 * M * L * Lo,
        bytes_accessed=(M * L + M * Lo + L * Lo) * itemsize,
        transcendentals=0,
    )

    out_flat = pl.pallas_call(
        _pool_kernel,
        out_shape=jax.ShapeDtypeStruct((M, Lo), x.dtype),
        grid_spec=pltpu.PrefetchScalarGridSpec(
            num_scalar_prefetch=0,
            grid=grid,
            in_specs=[
                # Pooling matrix: constant index_map, never refetched -> single buffer.
                pl.BlockSpec((L, Lo), lambda i: (0, 0), pipeline_mode=pl.Buffered(1)),
                # Lane-dense input slab, streamed over the row axis.
                pl.BlockSpec((BM, L), lambda i: (i, 0)),
            ],
            out_specs=pl.BlockSpec((BM, Lo), lambda i: (i, 0)),
        ),
        compiler_params=pltpu.CompilerParams(
            dimension_semantics=("parallel",),   # shards the row axis across v7x's 2 TCs
            vmem_limit_bytes=vmem_limit,
        ),
        cost_estimate=cost,
    )(B, xf)

    # Metadata-only reshape back to NCHW output.
    return out_flat.reshape(N, C, Ho, Wo)


if __name__ == "__main__":
    key = jax.random.PRNGKey(0)
    x = jax.random.normal(key, (2, 4, 16, 16), dtype=jnp.float32)

    out = jax.block_until_ready(transition_forward(x))

    # Pure-JAX reference for AvgPool2d(2, 2) on NCHW.
    N, C, H, W = x.shape
    ref = x.reshape(N, C, H // 2, 2, W // 2, 2).mean(axis=(3, 5))

    assert out.shape == (2, 4, 8, 8), out.shape
    assert jnp.allclose(out, ref, atol=1e-5, rtol=1e-5), "mismatch vs reference"
    print("KERNEL_OK")
</pallas_src>

<mosaic_0001>
module attributes {stable_mosaic.version = 11 : i64} {
  func.func @_pool_kernel(%arg0: i32, %arg1: memref<1024x256xf32, #tpu.memory_space<vmem>>, %arg2: memref<2x1024xf32, #tpu.memory_space<vmem>>, %arg3: memref<2x256xf32, #tpu.memory_space<vmem>>) attributes {dimension_semantics = [#tpu.dimension_semantics<parallel>], iteration_bounds = array<i64: 1>, scalar_prefetch = 0 : i64, scratch_operands = 0 : i64, tpu.core_type = #tpu.core_type<tc>, window_params = [{pipeline_mode = #tpu.pipeline_mode<synchronous>, transform_indices = @transform_0, window_bounds = array<i64: 1024, 256>}, {transform_indices = @transform_1, window_bounds = array<i64: 2, 1024>}, {transform_indices = @transform_2, window_bounds = array<i64: 2, 256>}]} {
    %c0 = arith.constant 0 : index
    %c0_0 = arith.constant 0 : index
    %0 = vector.load %arg2[%c0, %c0_0] : memref<2x1024xf32, #tpu.memory_space<vmem>>, vector<2x1024xf32>
    %c0_1 = arith.constant 0 : index
    %c0_2 = arith.constant 0 : index
    %1 = vector.load %arg1[%c0_1, %c0_2] : memref<1024x256xf32, #tpu.memory_space<vmem>>, vector<1024x256xf32>
    %cst = arith.constant dense<0.000000e+00> : vector<2x256xf32>
    %2 = tpu.matmul %0, %1, %cst {dimension_numbers = #tpu.dot_dimension_numbers<[1], [0], [0], [1], [0, 0, 1, 1], [], []>, precision = #tpu.contract_precision<fp32>} : vector<2x1024xf32>, vector<1024x256xf32>, vector<2x256xf32> -> vector<2x256xf32>
    %c0_3 = arith.constant 0 : index
    %c0_4 = arith.constant 0 : index
    %3 = vector.load %arg3[%c0_3, %c0_4] : memref<2x256xf32, #tpu.memory_space<vmem>>, vector<2x256xf32>
    tpu.vector_store %arg3[%c0_3, %c0_4], %2 {strides = array<i32>} : memref<2x256xf32, #tpu.memory_space<vmem>>, vector<2x256xf32>,
    return
  }
  func.func @transform_0(%arg0: i32) -> (i32, i32) {
    %c0_i32 = arith.constant 0 : i32
    %c0_i32_0 = arith.constant 0 : i32
    %c0_i32_1 = arith.constant 0 : i32
    return %c0_i32, %c0_i32_0 : i32, i32
  }
  func.func @transform_1(%arg0: i32) -> (i32, i32) {
    %c0_i32 = arith.constant 0 : i32
    %c0_i32_0 = arith.constant 0 : i32
    return %arg0, %c0_i32 : i32, i32
  }
  func.func @transform_2(%arg0: i32) -> (i32, i32) {
    %c0_i32 = arith.constant 0 : i32
    %c0_i32_0 = arith.constant 0 : i32
    return %arg0, %c0_i32 : i32, i32
  }
}

</mosaic_0001>

<llo_original>
// kernel: transition_forward.1
$region0: #{transition_forward.1}
  #allocation0 [shape = 'u32[]', space=smem, size = 0x4, offset = 0x4, fixed_abs, tag = 'smem constant byte address 0x4 - core index']
  #allocation1 [shape = 'u32[144,128]{1,0:T(1,128)}', space=vmem, size = 0x12000, scoped, tag = 'internal scratch']
  %s0 = inlined_call_operand.vmem [shape: f32[1024,256], index: 0, kind: input, shape index: {}]
  %s1 = inlined_call_operand.vmem [shape: f32[2,1024], index: 1, kind: input, shape index: {}]
  %s2 = inlined_call_operand.vmem [shape: f32[2,256], index: 2, kind: output, shape index: {}]
  %s3 = sld [smem:[#allocation0]]
  $region18: #{transition_forward.1} parent=0
    _
  %s5 = ssub.s32 1, %s3
  %s6 = scalar_select 0, %s5, %s3
  // Predicated region
  $region2: #{transition_forward.1} parent=0 // pred_check
    _
  $region3: #{transition_forward.1} parent=0 // pred_check_branch
    %8 = sbr.rel (0) target = $region5
  $region4: #{transition_forward.1} parent=0 // pred_region
    _
  $region5: #{transition_forward.1} parent=0 // pred_fallthru
    _
  // Predicated region
  $region6: #{transition_forward.1} parent=0 // pred_check
    _
  $region7: #{transition_forward.1} parent=0 // pred_check_branch
    %10 = sbr.rel (0) target = $region9
  $region8: #{transition_forward.1} parent=0 // pred_region
    _
  $region9: #{transition_forward.1} parent=0 // pred_fallthru
    _
  %v11 = vld [vmem:[%s1] sm:$0xff]
  %v12 = vld [vmem:[%s1 + $0x8] sm:$0xff]
  %v13 = vld [vmem:[%s0] sm:$0xff]
  %v14 = vld [vmem:[%s0 + $0x8] sm:$0xff]
  %v15 = vld [vmem:[%s0 + $0x10] sm:$0xff]
  %v16 = vld [vmem:[%s0 + $0x18] sm:$0xff]
  %v17 = vld [vmem:[%s0 + $0x20] sm:$0xff]
  %v18 = vld [vmem:[%s0 + $0x28] sm:$0xff]
  %v19 = vld [vmem:[%s0 + $0x30] sm:$0xff]
  %v20 = vld [vmem:[%s0 + $0x38] sm:$0xff]
  %v21 = vld [vmem:[%s0 + $0x40] sm:$0xff]
  %v22 = vld [vmem:[%s0 + $0x48] sm:$0xff]
  %v23 = vld [vmem:[%s0 + $0x50] sm:$0xff]
  %v24 = vld [vmem:[%s0 + $0x58] sm:$0xff]
  %v25 = vld [vmem:[%s0 + $0x60] sm:$0xff]
  %v26 = vld [vmem:[%s0 + $0x68] sm:$0xff]
  %v27 = vld [vmem:[%s0 + $0x70] sm:$0xff]
  %v28 = vld [vmem:[%s0 + $0x78] sm:$0xff]
  %v29 = vld [vmem:[%s0 + $0x80] sm:$0xff]
  %v30 = vld [vmem:[%s0 + $0x88] sm:$0xff]
  %v31 = vld [vmem:[%s0 + $0x90] sm:$0xff]
  %v32 = vld [vmem:[%s0 + $0x98] sm:$0xff]
  %v33 = vld [vmem:[%s0 + $0xa0] sm:$0xff]
  %v34 = vld [vmem:[%s0 + $0xa8] sm:$0xff]
  %v35 = vld [vmem:[%s0 + $0xb0] sm:$0xff]
  %v36 = vld [vmem:[%s0 + $0xb8] sm:$0xff]
  %v37 = vld [vmem:[%s0 + $0xc0] sm:$0xff]
  %v38 = vld [vmem:[%s0 + $0xc8] sm:$0xff]
  %v39 = vld [vmem:[%s0 + $0xd0] sm:$0xff]
  %v40 = vld [vmem:[%s0 + $0xd8] sm:$0xff]
  %v41 = vld [vmem:[%s0 + $0xe0] sm:$0xff]
  %v42 = vld [vmem:[%s0 + $0xe8] sm:$0xff]
  %v43 = vld [vmem:[%s0 + $0xf0] sm:$0xff]
  %v44 = vld [vmem:[%s0 + $0xf8] sm:$0xff]
  %v45 = vld [vmem:[%s0 + $0x100] sm:$0xff]
  %v46 = vld [vmem:[%s0 + $0x108] sm:$0xff]
  %v47 = vld [vmem:[%s0 + $0x110] sm:$0xff]
  %v48 = vld [vmem:[%s0 + $0x118] sm:$0xff]
  %v49 = vld [vmem:[%s0 + $0x120] sm:$0xff]
  %v50 = vld [vmem:[%s0 + $0x128] sm:$0xff]
  %v51 = vld [vmem:[%s0 + $0x130] sm:$0xff]
  %v52 = vld [vmem:[%s0 + $0x138] sm:$0xff]
  %v53 = vld [vmem:[%s0 + $0x140] sm:$0xff]
  %v54 = vld [vmem:[%s0 + $0x148] sm:$0xff]
  %v55 = vld [vmem:[%s0 + $0x150] sm:$0xff]
  %v56 = vld [vmem:[%s0 + $0x158] sm:$0xff]
  %v57 = vld [vmem:[%s0 + $0x160] sm:$0xff]
  %v58 = vld [vmem:[%s0 + $0x168] sm:$0xff]
  %v59 = vld [vmem:[%s0 + $0x170] sm:$0xff]
  %v60 = vld [vmem:[%s0 + $0x178] sm:$0xff]
  %v61 = vld [vmem:[%s0 + $0x180] sm:$0xff]
  %v62 = vld [vmem:[%s0 + $0x188] sm:$0xff]
  %v63 = vld [vmem:[%s0 + $0x190] sm:$0xff]
  %v64 = vld [vmem:[%s0 + $0x198] sm:$0xff]
  %v65 = vld [vmem:[%s0 + $0x1a0] sm:$0xff]
  %v66 = vld [vmem:[%s0 + $0x1a8] sm:$0xff]
  %v67 = vld [vmem:[%s0 + $0x1b0] sm:$0xff]
  %v68 = vld [vmem:[%s0 + $0x1b8] sm:$0xff]
  %v69 = vld [vmem:[%s0 + $0x1c0] sm:$0xff]
  %v70 = vld [vmem:[%s0 + $0x1c8] sm:$0xff]
  %v71 = vld [vmem:[%s0 + $0x1d0] sm:$0xff]
  %v72 = vld [vmem:[%s0 + $0x1d8] sm:$0xff]
  %v73 = vld [vmem:[%s0 + $0x1e0] sm:$0xff]
  %v74 = vld [vmem:[%s0 + $0x1e8] sm:$0xff]
  %v75 = vld [vmem:[%s0 + $0x1f0] sm:$0xff]
  %v76 = vld [vmem:[%s0 + $0x1f8] sm:$0xff]
  %v77 = vld [vmem:[%s0 + $0x200] sm:$0xff]
  %v78 = vld [vmem:[%s0 + $0x208] sm:$0xff]
  %v79 = vld [vmem:[%s0 + $0x210] sm:$0xff]
  %v80 = vld [vmem:[%s0 + $0x218] sm:$0xff]
  %v81 = vld [vmem:[%s0 + $0x220] sm:$0xff]
  %v82 = vld [vmem:[%s0 + $0x228] sm:$0xff]
  %v83 = vld [vmem:[%s0 + $0x230] sm:$0xff]
  %v84 = vld [vmem:[%s0 + $0x238] sm:$0xff]
  %v85 = vld [vmem:[%s0 + $0x240] sm:$0xff]
  %v86 = vld [vmem:[%s0 + $0x248] sm:$0xff]
  %v87 = vld [vmem:[%s0 + $0x250] sm:$0xff]
  %v88 = vld [vmem:[%s0 + $0x258] sm:$0xff]
  %v89 = vld [vmem:[%s0 + $0x260] sm:$0xff]
  %v90 = vld [vmem:[%s0 + $0x268] sm:$0xff]
  %v91 = vld [vmem:[%s0 + $0x270] sm:$0xff]
  %v92 = vld [vmem:[%s0 + $0x278] sm:$0xff]
  %v93 = vld [vmem:[%s0 + $0x280] sm:$0xff]
  %v94 = vld [vmem:[%s0 + $0x288] sm:$0xff]
  %v95 = vld [vmem:[%s0 + $0x290] sm:$0xff]
  %v96 = vld [vmem:[%s0 + $0x298] sm:$0xff]
  %v97 = vld [vmem:[%s0 + $0x2a0] sm:$0xff]
  %v98 = vld [vmem:[%s0 + $0x2a8] sm:$0xff]
  %v99 = vld [vmem:[%s0 + $0x2b0] sm:$0xff]
  %v100 = vld [vmem:[%s0 + $0x2b8] sm:$0xff]
  %v101 = vld [vmem:[%s0 + $0x2c0] sm:$0xff]
  %v102 = vld [vmem:[%s0 + $0x2c8] sm:$0xff]
  %v103 = vld [vmem:[%s0 + $0x2d0] sm:$0xff]
  %v104 = vld [vmem:[%s0 + $0x2d8] sm:$0xff]
  %v105 = vld [vmem:[%s0 + $0x2e0] sm:$0xff]
  %v106 = vld [vmem:[%s0 + $0x2e8] sm:$0xff]
  %v107 = vld [vmem:[%s0 + $0x2f0] sm:$0xff]
  %v108 = vld [vmem:[%s0 + $0x2f8] sm:$0xff]
  %v109 = vld [vmem:[%s0 + $0x300] sm:$0xff]
  %v110 = vld [vmem:[%s0 + $0x308] sm:$0xff]
  %v111 = vld [vmem:[%s0 + $0x310] sm:$0xff]
  %v112 = vld [vmem:[%s0 + $0x318] sm:$0xff]
  %v113 = vld [vmem:[%s0 + $0x320] sm:$0xff]
  %v114 = vld [vmem:[%s0 + $0x328] sm:$0xff]
  %v115 = vld [vmem:[%s0 + $0x330] sm:$0xff]
  %v116 = vld [vmem:[%s0 + $0x338] sm:$0xff]
  %v117 = vld [vmem:[%s0 + $0x340] sm:$0xff]
  %v118 = vld [vmem:[%s0 + $0x348] sm:$0xff]
  %v119 = vld [vmem:[%s0 + $0x350] sm:$0xff]
  %v120 = vld [vmem:[%s0 + $0x358] sm:$0xff]
  %v121 = vld [vmem:[%s0 + $0x360] sm:$0xff]
  %v122 = vld [vmem:[%s0 + $0x368] sm:$0xff]
  %v123 = vld [vmem:[%s0 + $0x370] sm:$0xff]
  %v124 = vld [vmem:[%s0 + $0x378] sm:$0xff]
  %v125 = vld [vmem:[%s0 + $0x380] sm:$0xff]
  %v126 = vld [vmem:[%s0 + $0x388] sm:$0xff]
  %v127 = vld [vmem:[%s0 + $0x390] sm:$0xff]
  %v128 = vld [vmem:[%s0 + $0x398] sm:$0xff]
  %v129 = vld [vmem:[%s0 + $0x3a0] sm:$0xff]
  %v130 = vld [vmem:[%s0 + $0x3a8] sm:$0xff]
  %v131 = vld [vmem:[%s0 + $0x3b0] sm:$0xff]
  %v132 = vld [vmem:[%s0 + $0x3b8] sm:$0xff]
  %v133 = vld [vmem:[%s0 + $0x3c0] sm:$0xff]
  %v134 = vld [vmem:[%s0 + $0x3c8] sm:$0xff]
  %v135 = vld [vmem:[%s0 + $0x3d0] sm:$0xff]
  %v136 = vld [vmem:[%s0 + $0x3d8] sm:$0xff]
  %v137 = vld [vmem:[%s0 + $0x3e0] sm:$0xff]
  %v138 = vld [vmem:[%s0 + $0x3e8] sm:$0xff]
  %v139 = vld [vmem:[%s0 + $0x3f0] sm:$0xff]
  %v140 = vld [vmem:[%s0 + $0x3f8] sm:$0xff]
  %v141 = vld [vmem:[%s0 + $0x400] sm:$0xff]
  %v142 = vld [vmem:[%s0 + $0x408] sm:$0xff]
  %v143 = vld [vmem:[%s0 + $0x410] sm:$0xff]
  %v144 = vld [vmem:[%s0 + $0x418] sm:$0xff]
  %v145 = vld [vmem:[%s0 + $0x420] sm:$0xff]
  %v146 = vld [vmem:[%s0 + $0x428] sm:$0xff]
  %v147 = vld [vmem:[%s0 + $0x430] sm:$0xff]
  %v148 = vld [vmem:[%s0 + $0x438] sm:$0xff]
  %v149 = vld [vmem:[%s0 + $0x440] sm:$0xff]
  %v150 = vld [vmem:[%s0 + $0x448] sm:$0xff]
  %v151 = vld [vmem:[%s0 + $0x450] sm:$0xff]
  %v152 = vld [vmem:[%s0 + $0x458] sm:$0xff]
  %v153 = vld [vmem:[%s0 + $0x460] sm:$0xff]
  %v154 = vld [vmem:[%s0 + $0x468] sm:$0xff]
  %v155 = vld [vmem:[%s0 + $0x470] sm:$0xff]
  %v156 = vld [vmem:[%s0 + $0x478] sm:$0xff]
  %v157 = vld [vmem:[%s0 + $0x480] sm:$0xff]
  %v158 = vld [vmem:[%s0 + $0x488] sm:$0xff]
  %v159 = vld [vmem:[%s0 + $0x490] sm:$0xff]
  %v160 = vld [vmem:[%s0 + $0x498] sm:$0xff]
  %v161 = vld [vmem:[%s0 + $0x4a0] sm:$0xff]
  %v162 = vld [vmem:[%s0 + $0x4a8] sm:$0xff]
  %v163 = vld [vmem:[%s0 + $0x4b0] sm:$0xff]
  %v164 = vld [vmem:[%s0 + $0x4b8] sm:$0xff]
  %v165 = vld [vmem:[%s0 + $0x4c0] sm:$0xff]
  %v166 = vld [vmem:[%s0 + $0x4c8] sm:$0xff]
  %v167 = vld [vmem:[%s0 + $0x4d0] sm:$0xff]
  %v168 = vld [vmem:[%s0 + $0x4d8] sm:$0xff]
  %v169 = vld [vmem:[%s0 + $0x4e0] sm:$0xff]
  %v170 = vld [vmem:[%s0 + $0x4e8] sm:$0xff]
  %v171 = vld [vmem:[%s0 + $0x4f0] sm:$0xff]
  %v172 = vld [vmem:[%s0 + $0x4f8] sm:$0xff]
  %v173 = vld [vmem:[%s0 + $0x500] sm:$0xff]
  %v174 = vld [vmem:[%s0 + $0x508] sm:$0xff]
  %v175 = vld [vmem:[%s0 + $0x510] sm:$0xff]
  %v176 = vld [vmem:[%s0 + $0x518] sm:$0xff]
  %v177 = vld [vmem:[%s0 + $0x520] sm:$0xff]
  %v178 = vld [vmem:[%s0 + $0x528] sm:$0xff]
  %v179 = vld [vmem:[%s0 + $0x530] sm:$0xff]
  %v180 = vld [vmem:[%s0 + $0x538] sm:$0xff]
  %v181 = vld [vmem:[%s0 + $0x540] sm:$0xff]
  %v182 = vld [vmem:[%s0 + $0x548] sm:$0xff]
  %v183 = vld [vmem:[%s0 + $0x550] sm:$0xff]
  %v184 = vld [vmem:[%s0 + $0x558] sm:$0xff]
  %v185 = vld [vmem:[%s0 + $0x560] sm:$0xff]
  %v186 = vld [vmem:[%s0 + $0x568] sm:$0xff]
  %v187 = vld [vmem:[%s0 + $0x570] sm:$0xff]
  %v188 = vld [vmem:[%s0 + $0x578] sm:$0xff]
  %v189 = vld [vmem:[%s0 + $0x580] sm:$0xff]
  %v190 = vld [vmem:[%s0 + $0x588] sm:$0xff]
  %v191 = vld [vmem:[%s0 + $0x590] sm:$0xff]
  %v192 = vld [vmem:[%s0 + $0x598] sm:$0xff]
  %v193 = vld [vmem:[%s0 + $0x5a0] sm:$0xff]
  %v194 = vld [vmem:[%s0 + $0x5a8] sm:$0xff]
  %v195 = vld [vmem:[%s0 + $0x5b0] sm:$0xff]
  %v196 = vld [vmem:[%s0 + $0x5b8] sm:$0xff]
  %v197 = vld [vmem:[%s0 + $0x5c0] sm:$0xff]
  %v198 = vld [vmem:[%s0 + $0x5c8] sm:$0xff]
  %v199 = vld [vmem:[%s0 + $0x5d0] sm:$0xff]
  %v200 = vld [vmem:[%s0 + $0x5d8] sm:$0xff]
  %v201 = vld [vmem:[%s0 + $0x5e0] sm:$0xff]
  %v202 = vld [vmem:[%s0 + $0x5e8] sm:$0xff]
  %v203 = vld [vmem:[%s0 + $0x5f0] sm:$0xff]
  %v204 = vld [vmem:[%s0 + $0x5f8] sm:$0xff]
  %v205 = vld [vmem:[%s0 + $0x600] sm:$0xff]
  %v206 = vld [vmem:[%s0 + $0x608] sm:$0xff]
  %v207 = vld [vmem:[%s0 + $0x610] sm:$0xff]
  %v208 = vld [vmem:[%s0 + $0x618] sm:$0xff]
  %v209 = vld [vmem:[%s0 + $0x620] sm:$0xff]
  %v210 = vld [vmem:[%s0 + $0x628] sm:$0xff]
  %v211 = vld [vmem:[%s0 + $0x630] sm:$0xff]
  %v212 = vld [vmem:[%s0 + $0x638] sm:$0xff]
  %v213 = vld [vmem:[%s0 + $0x640] sm:$0xff]
  %v214 = vld [vmem:[%s0 + $0x648] sm:$0xff]
  %v215 = vld [vmem:[%s0 + $0x650] sm:$0xff]
  %v216 = vld [vmem:[%s0 + $0x658] sm:$0xff]
  %v217 = vld [vmem:[%s0 + $0x660] sm:$0xff]
  %v218 = vld [vmem:[%s0 + $0x668] sm:$0xff]
  %v219 = vld [vmem:[%s0 + $0x670] sm:$0xff]
  %v220 = vld [vmem:[%s0 + $0x678] sm:$0xff]
  %v221 = vld [vmem:[%s0 + $0x680] sm:$0xff]
  %v222 = vld [vmem:[%s0 + $0x688] sm:$0xff]
  %v223 = vld [vmem:[%s0 + $0x690] sm:$0xff]
  %v224 = vld [vmem:[%s0 + $0x698] sm:$0xff]
  %v225 = vld [vmem:[%s0 + $0x6a0] sm:$0xff]
  %v226 = vld [vmem:[%s0 + $0x6a8] sm:$0xff]
  %v227 = vld [vmem:[%s0 + $0x6b0] sm:$0xff]
  %v228 = vld [vmem:[%s0 + $0x6b8] sm:$0xff]
  %v229 = vld [vmem:[%s0 + $0x6c0] sm:$0xff]
  %v230 = vld [vmem:[%s0 + $0x6c8] sm:$0xff]
  %v231 = vld [vmem:[%s0 + $0x6d0] sm:$0xff]
  %v232 = vld [vmem:[%s0 + $0x6d8] sm:$0xff]
  %v233 = vld [vmem:[%s0 + $0x6e0] sm:$0xff]
  %v234 = vld [vmem:[%s0 + $0x6e8] sm:$0xff]
  %v235 = vld [vmem:[%s0 + $0x6f0] sm:$0xff]
  %v236 = vld [vmem:[%s0 + $0x6f8] sm:$0xff]
  %v237 = vld [vmem:[%s0 + $0x700] sm:$0xff]
  %v238 = vld [vmem:[%s0 + $0x708] sm:$0xff]
  %v239 = vld [vmem:[%s0 + $0x710] sm:$0xff]
  %v240 = vld [vmem:[%s0 + $0x718] sm:$0xff]
  %v241 = vld [vmem:[%s0 + $0x720] sm:$0xff]
  %v242 = vld [vmem:[%s0 + $0x728] sm:$0xff]
  %v243 = vld [vmem:[%s0 + $0x730] sm:$0xff]
  %v244 = vld [vmem:[%s0 + $0x738] sm:$0xff]
  %v245 = vld [vmem:[%s0 + $0x740] sm:$0xff]
  %v246 = vld [vmem:[%s0 + $0x748] sm:$0xff]
  %v247 = vld [vmem:[%s0 + $0x750] sm:$0xff]
  %v248 = vld [vmem:[%s0 + $0x758] sm:$0xff]
  %v249 = vld [vmem:[%s0 + $0x760] sm:$0xff]
  %v250 = vld [vmem:[%s0 + $0x768] sm:$0xff]
  %v251 = vld [vmem:[%s0 + $0x770] sm:$0xff]
  %v252 = vld [vmem:[%s0 + $0x778] sm:$0xff]
  %v253 = vld [vmem:[%s0 + $0x780] sm:$0xff]
  %v254 = vld [vmem:[%s0 + $0x788] sm:$0xff]
  %v255 = vld [vmem:[%s0 + $0x790] sm:$0xff]
  %v256 = vld [vmem:[%s0 + $0x798] sm:$0xff]
  %v257 = vld [vmem:[%s0 + $0x7a0] sm:$0xff]
  %v258 = vld [vmem:[%s0 + $0x7a8] sm:$0xff]
  %v259 = vld [vmem:[%s0 + $0x7b0] sm:$0xff]
  %v260 = vld [vmem:[%s0 + $0x7b8] sm:$0xff]
  %v261 = vld [vmem:[%s0 + $0x7c0] sm:$0xff]
  %v262 = vld [vmem:[%s0 + $0x7c8] sm:$0xff]
  %v263 = vld [vmem:[%s0 + $0x7d0] sm:$0xff]
  %v264 = vld [vmem:[%s0 + $0x7d8] sm:$0xff]
  %v265 = vld [vmem:[%s0 + $0x7e0] sm:$0xff]
  %v266 = vld [vmem:[%s0 + $0x7e8] sm:$0xff]
  %v267 = vld [vmem:[%s0 + $0x7f0] sm:$0xff]
  %v268 = vld [vmem:[%s0 + $0x7f8] sm:$0xff]
  %v271 = vcombine.high %v11, %v11
  %v273 = vunpack.c.l.s4 1983009808
  %v274 = vunpack.c.0.s8 %v273
  %v275 = vlaneseq
  %v276 = vshrl.u32 %v275, 7
  %v277 = vsub.s32 %v274, %v276
  %v278 = vrot.slane %v11, %v277
  %v280 = vunpack.c.l.s4 1983009808
  %v281 = vunpack.c.0.s8 %v280
  %v282 = vlaneseq
  %v283 = vshrl.u32 %v282, 7
  %v284 = vsub.s32 %v281, %v283
  %v285 = vrot.slane %v271, %v284
  %v286 = vcombine.high %v278, %v278
  %v287 = vcombine.high %v285, %v285
  %v288 = vcombine.high %v12, %v12
  %v290 = vunpack.c.l.s4 1983009808
  %v291 = vunpack.c.0.s8 %v290
  %v292 = vlaneseq
  %v293 = vshrl.u32 %v292, 7
  %v294 = vsub.s32 %v291, %v293
  %v295 = vrot.slane %v12, %v294
  %v297 = vunpack.c.l.s4 1983009808
  %v298 = vunpack.c.0.s8 %v297
  %v299 = vlaneseq
  %v300 = vshrl.u32 %v299, 7
  %v301 = vsub.s32 %v298, %v300
  %v302 = vrot.slane %v288, %v301
  %v303 = vcombine.high %v295, %v295
  %v304 = vcombine.high %v302, %v302
  %v313 = vand.u32 %v14, 4294901760
  %314 = vmatprep.subr.mxu0 %v313
  %v315 = vand.u32 %v13, 4294901760
  %316 = vmatpush1.msra.mxu0 %v315
  %v317 = vand.u32 %v16, 4294901760
  %318 = vmatprep.subr.mxu0 %v317
  %v319 = vand.u32 %v15, 4294901760
  %320 = vmatpush1.msra.mxu0 %v319
  %v321 = vand.u32 %v18, 4294901760
  %322 = vmatprep.subr.mxu0 %v321
  %v323 = vand.u32 %v17, 4294901760
  %324 = vmatpush1.msra.mxu0 %v323
  %v325 = vand.u32 %v20, 4294901760
  %326 = vmatprep.subr.mxu0 %v325
  %v327 = vand.u32 %v19, 4294901760
  %328 = vmatpush1.msra.mxu0 %v327
  %v329 = vand.u32 %v22, 4294901760
  %330 = vmatprep.subr.mxu0 %v329
  %v331 = vand.u32 %v21, 4294901760
  %332 = vmatpush1.msra.mxu0 %v331
  %v333 = vand.u32 %v24, 4294901760
  %334 = vmatprep.subr.mxu0 %v333
  %v335 = vand.u32 %v23, 4294901760
  %336 = vmatpush1.msra.mxu0 %v335
  %v337 = vand.u32 %v26, 4294901760
  %338 = vmatprep.subr.mxu0 %v337
  %v339 = vand.u32 %v25, 4294901760
  %340 = vmatpush1.msra.mxu0 %v339
  %v341 = vand.u32 %v28, 4294901760
  %342 = vmatprep.subr.mxu0 %v341
  %v343 = vand.u32 %v27, 4294901760
  %344 = vmatpush1.msra.mxu0 %v343
  %v345 = vand.u32 %v30, 4294901760
  %346 = vmatprep.subr.mxu0 %v345
  %v347 = vand.u32 %v29, 4294901760
  %348 = vmatpush1.msra.mxu0 %v347
  %v349 = vand.u32 %v32, 4294901760
  %350 = vmatprep.subr.mxu0 %v349
  %v351 = vand.u32 %v31, 4294901760
  %352 = vmatpush1.msra.mxu0 %v351
  %v353 = vand.u32 %v34, 4294901760
  %354 = vmatprep.subr.mxu0 %v353
  %v355 = vand.u32 %v33, 4294901760
  %356 = vmatpush1.msra.mxu0 %v355
  %v357 = vand.u32 %v36, 4294901760
  %358 = vmatprep.subr.mxu0 %v357
  %v359 = vand.u32 %v35, 4294901760
  %360 = vmatpush1.msra.mxu0 %v359
  %v361 = vand.u32 %v38, 4294901760
  %362 = vmatprep.subr.mxu0 %v361
  %v363 = vand.u32 %v37, 4294901760
  %364 = vmatpush1.msra.mxu0 %v363
  %v365 = vand.u32 %v40, 4294901760
  %366 = vmatprep.subr.mxu0 %v365
  %v367 = vand.u32 %v39, 4294901760
  %368 = vmatpush1.msra.mxu0 %v367
  %v369 = vand.u32 %v42, 4294901760
  %370 = vmatprep.subr.mxu0 %v369
  %v371 = vand.u32 %v41, 4294901760
  %372 = vmatpush1.msra.mxu0 %v371
  %v373 = vand.u32 %v44, 4294901760
  %374 = vmatprep.subr.mxu0 %v373
  %v375 = vand.u32 %v43, 4294901760
  %376 = vmatpush1.msra.mxu0 %v375
  %v377 = vand.u32 %v46, 4294901760
  %378 = vmatprep.subr.mxu0 %v377
  %v379 = vand.u32 %v45, 4294901760
  %380 = vmatpush1.msra.mxu0 %v379
  %v381 = vand.u32 %v48, 4294901760
  %382 = vmatprep.subr.mxu0 %v381
  %v383 = vand.u32 %v47, 4294901760
  %384 = vmatpush1.msra.mxu0 %v383
  %v385 = vand.u32 %v50, 4294901760
  %386 = vmatprep.subr.mxu0 %v385
  %v387 = vand.u32 %v49, 4294901760
  %388 = vmatpush1.msra.mxu0 %v387
  %v389 = vand.u32 %v52, 4294901760
  %390 = vmatprep.subr.mxu0 %v389
  %v391 = vand.u32 %v51, 4294901760
  %392 = vmatpush1.msra.mxu0 %v391
  %v393 = vand.u32 %v54, 4294901760
  %394 = vmatprep.subr.mxu0 %v393
  %v395 = vand.u32 %v53, 4294901760
  %396 = vmatpush1.msra.mxu0 %v395
  %v397 = vand.u32 %v56, 4294901760
  %398 = vmatprep.subr.mxu0 %v397
  %v399 = vand.u32 %v55, 4294901760
  %400 = vmatpush1.msra.mxu0 %v399
  %v401 = vand.u32 %v58, 4294901760
  %402 = vmatprep.subr.mxu0 %v401
  %v403 = vand.u32 %v57, 4294901760
  %404 = vmatpush1.msra.mxu0 %v403
  %v405 = vand.u32 %v60, 4294901760
  %406 = vmatprep.subr.mxu0 %v405
  %v407 = vand.u32 %v59, 4294901760
  %408 = vmatpush1.msra.mxu0 %v407
  %v409 = vand.u32 %v62, 4294901760
  %410 = vmatprep.subr.mxu0 %v409
  %v411 = vand.u32 %v61, 4294901760
  %412 = vmatpush1.msra.mxu0 %v411
  %v413 = vand.u32 %v64, 4294901760
  %414 = vmatprep.subr.mxu0 %v413
  %v415 = vand.u32 %v63, 4294901760
  %416 = vmatpush1.msra.mxu0 %v415
  %v417 = vand.u32 %v66, 4294901760
  %418 = vmatprep.subr.mxu0 %v417
  %v419 = vand.u32 %v65, 4294901760
  %420 = vmatpush1.msra.mxu0 %v419
  %v421 = vand.u32 %v68, 4294901760
  %422 = vmatprep.subr.mxu0 %v421
  %v423 = vand.u32 %v67, 4294901760
  %424 = vmatpush1.msra.mxu0 %v423
  %v425 = vand.u32 %v70, 4294901760
  %426 = vmatprep.subr.mxu0 %v425
  %v427 = vand.u32 %v69, 4294901760
  %428 = vmatpush1.msra.mxu0 %v427
  %v429 = vand.u32 %v72, 4294901760
  %430 = vmatprep.subr.mxu0 %v429
  %v431 = vand.u32 %v71, 4294901760
  %432 = vmatpush1.msra.mxu0 %v431
  %v433 = vand.u32 %v74, 4294901760
  %434 = vmatprep.subr.mxu0 %v433
  %v435 = vand.u32 %v73, 4294901760
  %436 = vmatpush1.msra.mxu0 %v435
  %v437 = vand.u32 %v76, 4294901760
  %438 = vmatprep.subr.mxu0 %v437
  %v439 = vand.u32 %v75, 4294901760
  %440 = vmatpush1.msra.mxu0 %v439
  %v441 = vand.u32 %v286, 4294901760
  %v442 = vsub.f32 %v286, %v441
  %v443 = vand.u32 %v442, 4294901760
  %v444 = vsub.f32 %v442, %v443
  %v445 = vand.u32 %v444, 4294901760
  %446 = vmatprep.mubr.f32.mxu0 %v445
  %v447 = vand.u32 %v278, 4294901760
  %v448 = vsub.f32 %v278, %v447
  %v449 = vand.u32 %v448, 4294901760
  %v450 = vsub.f32 %v448, %v449
  %v451 = vand.u32 %v450, 4294901760
  %452 = vmatmul.mubr.f32.gmra.mrb[0].mxu0 %v451
  %v453 = vpop.f32.mrb[0].mxu0
  %v454 = vadd.f32 0.0, %v453
  %v455 = vpop.f32.mrb[0].mxu0
  %v456 = vadd.f32 0.0, %v455
  %457 = vdwg.mxu0
  %v458 = vand.u32 %v14, 4294901760
  %v459 = vsub.f32 %v14, %v458
  %v460 = vand.u32 %v459, 4294901760
  %v461 = vsub.f32 %v459, %v460
  %v462 = vand.u32 %v461, 4294901760
  %463 = vmatprep.subr.mxu0 %v462
  %v464 = vand.u32 %v13, 4294901760
  %v465 = vsub.f32 %v13, %v464
  %v466 = vand.u32 %v465, 4294901760
  %v467 = vsub.f32 %v465, %v466
  %v468 = vand.u32 %v467, 4294901760
  %469 = vmatpush1.msra.mxu0 %v468
  %v470 = vand.u32 %v16, 4294901760
  %v471 = vsub.f32 %v16, %v470
  %v472 = vand.u32 %v471, 4294901760
  %v473 = vsub.f32 %v471, %v472
  %v474 = vand.u32 %v473, 4294901760
  %475 = vmatprep.subr.mxu0 %v474
  %v476 = vand.u32 %v15, 4294901760
  %v477 = vsub.f32 %v15, %v476
  %v478 = vand.u32 %v477, 4294901760
  %v479 = vsub.f32 %v477, %v478
  %v480 = vand.u32 %v479, 4294901760
  %481 = vmatpush1.msra.mxu0 %v480
  %v482 = vand.u32 %v18, 4294901760
  %v483 = vsub.f32 %v18, %v482
  %v484 = vand.u32 %v483, 4294901760
  %v485 = vsub.f32 %v483, %v484
  %v486 = vand.u32 %v485, 4294901760
  %487 = vmatprep.subr.mxu0 %v486
  %v488 = vand.u32 %v17, 4294901760
  %v489 = vsub.f32 %v17, %v488
  %v490 = vand.u32 %v489, 4294901760
  %v491 = vsub.f32 %v489, %v490
  %v492 = vand.u32 %v491, 4294901760
  %493 = vmatpush1.msra.mxu0 %v492
  %v494 = vand.u32 %v20, 4294901760
  %v495 = vsub.f32 %v20, %v494
  %v496 = vand.u32 %v495, 4294901760
  %v497 = vsub.f32 %v495, %v496
  %v498 = vand.u32 %v497, 4294901760
  %499 = vmatprep.subr.mxu0 %v498
  %v500 = vand.u32 %v19, 4294901760
  %v501 = vsub.f32 %v19, %v500
  %v502 = vand.u32 %v501, 4294901760
  %v503 = vsub.f32 %v501, %v502
  %v504 = vand.u32 %v503, 4294901760
  %505 = vmatpush1.msra.mxu0 %v504
  %v506 = vand.u32 %v22, 4294901760
  %v507 = vsub.f32 %v22, %v506
  %v508 = vand.u32 %v507, 4294901760
  %v509 = vsub.f32 %v507, %v508
  %v510 = vand.u32 %v509, 4294901760
  %511 = vmatprep.subr.mxu0 %v510
  %v512 = vand.u32 %v21, 4294901760
  %v513 = vsub.f32 %v21, %v512
  %v514 = vand.u32 %v513, 4294901760
  %v515 = vsub.f32 %v513, %v514
  %v516 = vand.u32 %v515, 4294901760
  %517 = vmatpush1.msra.mxu0 %v516
  %v518 = vand.u32 %v24, 4294901760
  %v519 = vsub.f32 %v24, %v518
  %v520 = vand.u32 %v519, 4294901760
  %v521 = vsub.f32 %v519, %v520
  %v522 = vand.u32 %v521, 4294901760
  %523 = vmatprep.subr.mxu0 %v522
  %v524 = vand.u32 %v23, 4294901760
  %v525 = vsub.f32 %v23, %v524
  %v526 = vand.u32 %v525, 4294901760
  %v527 = vsub.f32 %v525, %v526
  %v528 = vand.u32 %v527, 4294901760
  %529 = vmatpush1.msra.mxu0 %v528
  %v530 = vand.u32 %v26, 4294901760
  %v531 = vsub.f32 %v26, %v530
  %v532 = vand.u32 %v531, 4294901760
  %v533 = vsub.f32 %v531, %v532
  %v534 = vand.u32 %v533, 4294901760
  %535 = vmatprep.subr.mxu0 %v534
  %v536 = vand.u32 %v25, 4294901760
  %v537 = vsub.f32 %v25, %v536
  %v538 = vand.u32 %v537, 4294901760
  %v539 = vsub.f32 %v537, %v538
  %v540 = vand.u32 %v539, 4294901760
  %541 = vmatpush1.msra.mxu0 %v540
  %v542 = vand.u32 %v28, 4294901760
  %v543 = vsub.f32 %v28, %v542
  %v544 = vand.u32 %v543, 4294901760
  %v545 = vsub.f32 %v543, %v544
  %v546 = vand.u32 %v545, 4294901760
  %547 = vmatprep.subr.mxu0 %v546
  %v548 = vand.u32 %v27, 4294901760
  %v549 = vsub.f32 %v27, %v548
  %v550 = vand.u32 %v549, 4294901760
  %v551 = vsub.f32 %v549, %v550
  %v552 = vand.u32 %v551, 4294901760
  %553 = vmatpush1.msra.mxu0 %v552
  %v554 = vand.u32 %v30, 4294901760
  %v555 = vsub.f32 %v30, %v554
  %v556 = vand.u32 %v555, 4294901760
  %v557 = vsub.f32 %v555, %v556
  %v558 = vand.u32 %v557, 4294901760
  %559 = vmatprep.subr.mxu0 %v558
  %v560 = vand.u32 %v29, 4294901760
  %v561 = vsub.f32 %v29, %v560
  %v562 = vand.u32 %v561, 4294901760
  %v563 = vsub.f32 %v561, %v562
  %v564 = vand.u32 %v563, 4294901760
  %565 = vmatpush1.msra.mxu0 %v564
  %v566 = vand.u32 %v32, 4294901760
  %v567 = vsub.f32 %v32, %v566
  %v568 = vand.u32 %v567, 4294901760
  %v569 = vsub.f32 %v567, %v568
  %v570 = vand.u32 %v569, 4294901760
  %571 = vmatprep.subr.mxu0 %v570
  %v572 = vand.u32 %v31, 4294901760
  %v573 = vsub.f32 %v31, %v572
  %v574 = vand.u32 %v573, 4294901760
  %v575 = vsub.f32 %v573, %v574
  %v576 = vand.u32 %v575, 4294901760
  %577 = vmatpush1.msra.mxu0 %v576
  %v578 = vand.u32 %v34, 4294901760
  %v579 = vsub.f32 %v34, %v578
  %v580 = vand.u32 %v579, 4294901760
  %v581 = vsub.f32 %v579, %v580
  %v582 = vand.u32 %v581, 4294901760
  %583 = vmatprep.subr.mxu0 %v582
  %v584 = vand.u32 %v33, 4294901760
  %v585 = vsub.f32 %v33, %v584
  %v586 = vand.u32 %v585, 4294901760
  %v587 = vsub.f32 %v585, %v586
  %v588 = vand.u32 %v587, 4294901760
  %589 = vmatpush1.msra.mxu0 %v588
  %v590 = vand.u32 %v36, 4294901760
  %v591 = vsub.f32 %v36, %v590
  %v592 = vand.u32 %v591, 4294901760
  %v593 = vsub.f32 %v591, %v592
  %v594 = vand.u32 %v593, 4294901760
  %595 = vmatprep.subr.mxu0 %v594
  %v596 = vand.u32 %v35, 4294901760
  %v597 = vsub.f32 %v35, %v596
  %v598 = vand.u32 %v597, 4294901760
  %v599 = vsub.f32 %v597, %v598
  %v600 = vand.u32 %v599, 4294901760
  %601 = vmatpush1.msra.mxu0 %v600
  %v602 = vand.u32 %v38, 4294901760
  %v603 = vsub.f32 %v38, %v602
  %v604 = vand.u32 %v603, 4294901760
  %v605 = vsub.f32 %v603, %v604
  %v606 = vand.u32 %v605, 4294901760
  %607 = vmatprep.subr.mxu0 %v606
  %v608 = vand.u32 %v37, 4294901760
  %v609 = vsub.f32 %v37, %v608
  %v610 = vand.u32 %v609, 4294901760
  %v611 = vsub.f32 %v609, %v610
  %v612 = vand.u32 %v611, 4294901760
  %613 = vmatpush1.msra.mxu0 %v612
  %v614 = vand.u32 %v40, 4294901760
  %v615 = vsub.f32 %v40, %v614
  %v616 = vand.u32 %v615, 4294901760
  %v617 = vsub.f32 %v615, %v616
  %v618 = vand.u32 %v617, 4294901760
  %619 = vmatprep.subr.mxu0 %v618
  %v620 = vand.u32 %v39, 4294901760
  %v621 = vsub.f32 %v39, %v620
  %v622 = vand.u32 %v621, 4294901760
  %v623 = vsub.f32 %v621, %v622
  %v624 = vand.u32 %v623, 4294901760
  %625 = vmatpush1.msra.mxu0 %v624
  %v626 = vand.u32 %v42, 4294901760
  %v627 = vsub.f32 %v42, %v626
  %v628 = vand.u32 %v627, 4294901760
  %v629 = vsub.f32 %v627, %v628
  %v630 = vand.u32 %v629, 4294901760
  %631 = vmatprep.subr.mxu0 %v630
  %v632 = vand.u32 %v41, 4294901760
  %v633 = vsub.f32 %v41, %v632
  %v634 = vand.u32 %v633, 4294901760
  %v635 = vsub.f32 %v633, %v634
  %v636 = vand.u32 %v635, 4294901760
  %637 = vmatpush1.msra.mxu0 %v636
  %v638 = vand.u32 %v44, 4294901760
  %v639 = vsub.f32 %v44, %v638
  %v640 = vand.u32 %v639, 4294901760
  %v641 = vsub.f32 %v639, %v640
  %v642 = vand.u32 %v641, 4294901760
  %643 = vmatprep.subr.mxu0 %v642
  %v644 = vand.u32 %v43, 4294901760
  %v645 = vsub.f32 %v43, %v644
  %v646 = vand.u32 %v645, 4294901760
  %v647 = vsub.f32 %v645, %v646
  %v648 = vand.u32 %v647, 4294901760
  %649 = vmatpush1.msra.mxu0 %v648
  %v650 = vand.u32 %v46, 4294901760
  %v651 = vsub.f32 %v46, %v650
  %v652 = vand.u32 %v651, 4294901760
  %v653 = vsub.f32 %v651, %v652
  %v654 = vand.u32 %v653, 4294901760
  %655 = vmatprep.subr.mxu0 %v654
  %v656 = vand.u32 %v45, 4294901760
  %v657 = vsub.f32 %v45, %v656
  %v658 = vand.u32 %v657, 4294901760
  %v659 = vsub.f32 %v657, %v658
  %v660 = vand.u32 %v659, 4294901760
  %661 = vmatpush1.msra.mxu0 %v660
  %v662 = vand.u32 %v48, 4294901760
  %v663 = vsub.f32 %v48, %v662
  %v664 = vand.u32 %v663, 4294901760
  %v665 = vsub.f32 %v663, %v664
  %v666 = vand.u32 %v665, 4294901760
  %667 = vmatprep.subr.mxu0 %v666
  %v668 = vand.u32 %v47, 4294901760
  %v669 = vsub.f32 %v47, %v668
  %v670 = vand.u32 %v669, 4294901760
  %v671 = vsub.f32 %v669, %v670
  %v672 = vand.u32 %v671, 4294901760
  %673 = vmatpush1.msra.mxu0 %v672
  %v674 = vand.u32 %v50, 4294901760
  %v675 = vsub.f32 %v50, %v674
  %v676 = vand.u32 %v675, 4294901760
  %v677 = vsub.f32 %v675, %v676
  %v678 = vand.u32 %v677, 4294901760
  %679 = vmatprep.subr.mxu0 %v678
  %v680 = vand.u32 %v49, 4294901760
  %v681 = vsub.f32 %v49, %v680
  %v682 = vand.u32 %v681, 4294901760
  %v683 = vsub.f32 %v681, %v682
  %v684 = vand.u32 %v683, 4294901760
  %685 = vmatpush1.msra.mxu0 %v684
  %v686 = vand.u32 %v52, 4294901760
  %v687 = vsub.f32 %v52, %v686
  %v688 = vand.u32 %v687, 4294901760
  %v689 = vsub.f32 %v687, %v688
  %v690 = vand.u32 %v689, 4294901760
  %691 = vmatprep.subr.mxu0 %v690
  %v692 = vand.u32 %v51, 4294901760
  %v693 = vsub.f32 %v51, %v692
  %v694 = vand.u32 %v693, 4294901760
  %v695 = vsub.f32 %v693, %v694
  %v696 = vand.u32 %v695, 4294901760
  %697 = vmatpush1.msra.mxu0 %v696
  %v698 = vand.u32 %v54, 4294901760
  %v699 = vsub.f32 %v54, %v698
  %v700 = vand.u32 %v699, 4294901760
  %v701 = vsub.f32 %v699, %v700
  %v702 = vand.u32 %v701, 4294901760
  %703 = vmatprep.subr.mxu0 %v702
  %v704 = vand.u32 %v53, 4294901760
  %v705 = vsub.f32 %v53, %v704
  %v706 = vand.u32 %v705, 4294901760
  %v707 = vsub.f32 %v705, %v706
  %v708 = vand.u32 %v707, 4294901760
  %709 = vmatpush1.msra.mxu0 %v708
  %v710 = vand.u32 %v56, 4294901760
  %v711 = vsub.f32 %v56, %v710
  %v712 = vand.u32 %v711, 4294901760
  %v713 = vsub.f32 %v711, %v712
  %v714 = vand.u32 %v713, 4294901760
  %715 = vmatprep.subr.mxu0 %v714
  %v716 = vand.u32 %v55, 4294901760
  %v717 = vsub.f32 %v55, %v716
  %v718 = vand.u32 %v717, 4294901760
  %v719 = vsub.f32 %v717, %v718
  %v720 = vand.u32 %v719, 4294901760
  %721 = vmatpush1.msra.mxu0 %v720
  %v722 = vand.u32 %v58, 4294901760
  %v723 = vsub.f32 %v58, %v722
  %v724 = vand.u32 %v723, 4294901760
  %v725 = vsub.f32 %v723, %v724
  %v726 = vand.u32 %v725, 4294901760
  %727 = vmatprep.subr.mxu0 %v726
  %v728 = vand.u32 %v57, 4294901760
  %v729 = vsub.f32 %v57, %v728
  %v730 = vand.u32 %v729, 4294901760
  %v731 = vsub.f32 %v729, %v730
  %v732 = vand.u32 %v731, 4294901760
  %733 = vmatpush1.msra.mxu0 %v732
  %v734 = vand.u32 %v60, 4294901760
  %v735 = vsub.f32 %v60, %v734
  %v736 = vand.u32 %v735, 4294901760
  %v737 = vsub.f32 %v735, %v736
  %v738 = vand.u32 %v737, 4294901760
  %739 = vmatprep.subr.mxu0 %v738
  %v740 = vand.u32 %v59, 4294901760
  %v741 = vsub.f32 %v59, %v740
  %v742 = vand.u32 %v741, 4294901760
  %v743 = vsub.f32 %v741, %v742
  %v744 = vand.u32 %v743, 4294901760
  %745 = vmatpush1.msra.mxu0 %v744
  %v746 = vand.u32 %v62, 4294901760
  %v747 = vsub.f32 %v62, %v746
  %v748 = vand.u32 %v747, 4294901760
  %v749 = vsub.f32 %v747, %v748
  %v750 = vand.u32 %v749, 4294901760
  %751 = vmatprep.subr.mxu0 %v750
  %v752 = vand.u32 %v61, 4294901760
  %v753 = vsub.f32 %v61, %v752
  %v754 = vand.u32 %v753, 4294901760
  %v755 = vsub.f32 %v753, %v754
  %v756 = vand.u32 %v755, 4294901760
  %757 = vmatpush1.msra.mxu0 %v756
  %v758 = vand.u32 %v64, 4294901760
  %v759 = vsub.f32 %v64, %v758
  %v760 = vand.u32 %v759, 4294901760
  %v761 = vsub.f32 %v759, %v760
  %v762 = vand.u32 %v761, 4294901760
  %763 = vmatprep.subr.mxu0 %v762
  %v764 = vand.u32 %v63, 4294901760
  %v765 = vsub.f32 %v63, %v764
  %v766 = vand.u32 %v765, 4294901760
  %v767 = vsub.f32 %v765, %v766
  %v768 = vand.u32 %v767, 4294901760
  %769 = vmatpush1.msra.mxu0 %v768
  %v770 = vand.u32 %v66, 4294901760
  %v771 = vsub.f32 %v66, %v770
  %v772 = vand.u32 %v771, 4294901760
  %v773 = vsub.f32 %v771, %v772
  %v774 = vand.u32 %v773, 4294901760
  %775 = vmatprep.subr.mxu0 %v774
  %v776 = vand.u32 %v65, 4294901760
  %v777 = vsub.f32 %v65, %v776
  %v778 = vand.u32 %v777, 4294901760
  %v779 = vsub.f32 %v777, %v778
  %v780 = vand.u32 %v779, 4294901760
  %781 = vmatpush1.msra.mxu0 %v780
  %v782 = vand.u32 %v68, 4294901760
  %v783 = vsub.f32 %v68, %v782
  %v784 = vand.u32 %v783, 4294901760
  %v785 = vsub.f32 %v783, %v784
  %v786 = vand.u32 %v785, 4294901760
  %787 = vmatprep.subr.mxu0 %v786
  %v788 = vand.u32 %v67, 4294901760
  %v789 = vsub.f32 %v67, %v788
  %v790 = vand.u32 %v789, 4294901760
  %v791 = vsub.f32 %v789, %v790
  %v792 = vand.u32 %v791, 4294901760
  %793 = vmatpush1.msra.mxu0 %v792
  %v794 = vand.u32 %v70, 4294901760
  %v795 = vsub.f32 %v70, %v794
  %v796 = vand.u32 %v795, 4294901760
  %v797 = vsub.f32 %v795, %v796
  %v798 = vand.u32 %v797, 4294901760
  %799 = vmatprep.subr.mxu0 %v798
  %v800 = vand.u32 %v69, 4294901760
  %v801 = vsub.f32 %v69, %v800
  %v802 = vand.u32 %v801, 4294901760
  %v803 = vsub.f32 %v801, %v802
  %v804 = vand.u32 %v803, 4294901760
  %805 = vmatpush1.msra.mxu0 %v804
  %v806 = vand.u32 %v72, 4294901760
  %v807 = vsub.f32 %v72, %v806
  %v808 = vand.u32 %v807, 4294901760
  %v809 = vsub.f32 %v807, %v808
  %v810 = vand.u32 %v809, 4294901760
  %811 = vmatprep.subr.mxu0 %v810
  %v812 = vand.u32 %v71, 4294901760
  %v813 = vsub.f32 %v71, %v812
  %v814 = vand.u32 %v813, 4294901760
  %v815 = vsub.f32 %v813, %v814
  %v816 = vand.u32 %v815, 4294901760
  %817 = vmatpush1.msra.mxu0 %v816
  %v818 = vand.u32 %v74, 4294901760
  %v819 = vsub.f32 %v74, %v818
  %v820 = vand.u32 %v819, 4294901760
  %v821 = vsub.f32 %v819, %v820
  %v822 = vand.u32 %v821, 4294901760
  %823 = vmatprep.subr.mxu0 %v822
  %v824 = vand.u32 %v73, 4294901760
  %v825 = vsub.f32 %v73, %v824
  %v826 = vand.u32 %v825, 4294901760
  %v827 = vsub.f32 %v825, %v826
  %v828 = vand.u32 %v827, 4294901760
  %829 = vmatpush1.msra.mxu0 %v828
  %v830 = vand.u32 %v76, 4294901760
  %v831 = vsub.f32 %v76, %v830
  %v832 = vand.u32 %v831, 4294901760
  %v833 = vsub.f32 %v831, %v832
  %v834 = vand.u32 %v833, 4294901760
  %835 = vmatprep.subr.mxu0 %v834
  %v836 = vand.u32 %v75, 4294901760
  %v837 = vsub.f32 %v75, %v836
  %v838 = vand.u32 %v837, 4294901760
  %v839 = vsub.f32 %v837, %v838
  %v840 = vand.u32 %v839, 4294901760
  %841 = vmatpush1.msra.mxu0 %v840
  %v842 = vand.u32 %v286, 4294901760
  %843 = vmatprep.mubr.f32.mxu0 %v842
  %v844 = vand.u32 %v278, 4294901760
  %845 = vmatmul.mubr.f32.gmra.mrb[0].mxu0 %v844
  %v846 = vpop.f32.mrb[0].mxu0
  %v847 = vadd.f32 %v454, %v846
  %v848 = vpop.f32.mrb[0].mxu0
  %v849 = vadd.f32 %v456, %v848
  %850 = vdwg.mxu0
  %v851 = vand.u32 %v14, 4294901760
  %v852 = vsub.f32 %v14, %v851
  %853 = vmatprep.subr.mxu0 %v852
  %v854 = vand.u32 %v13, 4294901760
  %v855 = vsub.f32 %v13, %v854
  %856 = vmatpush1.msra.mxu0 %v855
  %v857 = vand.u32 %v16, 4294901760
  %v858 = vsub.f32 %v16, %v857
  %859 = vmatprep.subr.mxu0 %v858
  %v860 = vand.u32 %v15, 4294901760
  %v861 = vsub.f32 %v15, %v860
  %862 = vmatpush1.msra.mxu0 %v861
  %v863 = vand.u32 %v18, 4294901760
  %v864 = vsub.f32 %v18, %v863
  %865 = vmatprep.subr.mxu0 %v864
  %v866 = vand.u32 %v17, 4294901760
  %v867 = vsub.f32 %v17, %v866
  %868 = vmatpush1.msra.mxu0 %v867
  %v869 = vand.u32 %v20, 4294901760
  %v870 = vsub.f32 %v20, %v869
  %871 = vmatprep.subr.mxu0 %v870
  %v872 = vand.u32 %v19, 4294901760
  %v873 = vsub.f32 %v19, %v872
  %874 = vmatpush1.msra.mxu0 %v873
  %v875 = vand.u32 %v22, 4294901760
  %v876 = vsub.f32 %v22, %v875
  %877 = vmatprep.subr.mxu0 %v876
  %v878 = vand.u32 %v21, 4294901760
  %v879 = vsub.f32 %v21, %v878
  %880 = vmatpush1.msra.mxu0 %v879
  %v881 = vand.u32 %v24, 4294901760
  %v882 = vsub.f32 %v24, %v881
  %883 = vmatprep.subr.mxu0 %v882
  %v884 = vand.u32 %v23, 4294901760
  %v885 = vsub.f32 %v23, %v884
  %886 = vmatpush1.msra.mxu0 %v885
  %v887 = vand.u32 %v26, 4294901760
  %v888 = vsub.f32 %v26, %v887
  %889 = vmatprep.subr.mxu0 %v888
  %v890 = vand.u32 %v25, 4294901760
  %v891 = vsub.f32 %v25, %v890
  %892 = vmatpush1.msra.mxu0 %v891
  %v893 = vand.u32 %v28, 4294901760
  %v894 = vsub.f32 %v28, %v893
  %895 = vmatprep.subr.mxu0 %v894
  %v896 = vand.u32 %v27, 4294901760
  %v897 = vsub.f32 %v27, %v896
  %898 = vmatpush1.msra.mxu0 %v897
  %v899 = vand.u32 %v30, 4294901760
  %v900 = vsub.f32 %v30, %v899
  %901 = vmatprep.subr.mxu0 %v900
  %v902 = vand.u32 %v29, 4294901760
  %v903 = vsub.f32 %v29, %v902
  %904 = vmatpush1.msra.mxu0 %v903
  %v905 = vand.u32 %v32, 4294901760
  %v906 = vsub.f32 %v32, %v905
  %907 = vmatprep.subr.mxu0 %v906
  %v908 = vand.u32 %v31, 4294901760
  %v909 = vsub.f32 %v31, %v908
  %910 = vmatpush1.msra.mxu0 %v909
  %v911 = vand.u32 %v34, 4294901760
  %v912 = vsub.f32 %v34, %v911
  %913 = vmatprep.subr.mxu0 %v912
  %v914 = vand.u32 %v33, 4294901760
  %v915 = vsub.f32 %v33, %v914
  %916 = vmatpush1.msra.mxu0 %v915
  %v917 = vand.u32 %v36, 4294901760
  %v918 = vsub.f32 %v36, %v917
  %919 = vmatprep.subr.mxu0 %v918
  %v920 = vand.u32 %v35, 4294901760
  %v921 = vsub.f32 %v35, %v920
  %922 = vmatpush1.msra.mxu0 %v921
  %v923 = vand.u32 %v38, 4294901760
  %v924 = vsub.f32 %v38, %v923
  %925 = vmatprep.subr.mxu0 %v924
  %v926 = vand.u32 %v37, 4294901760
  %v927 = vsub.f32 %v37, %v926
  %928 = vmatpush1.msra.mxu0 %v927
  %v929 = vand.u32 %v40, 4294901760
  %v930 = vsub.f32 %v40, %v929
  %931 = vmatprep.subr.mxu0 %v930
  %v932 = vand.u32 %v39, 4294901760
  %v933 = vsub.f32 %v39, %v932
  %934 = vmatpush1.msra.mxu0 %v933
  %v935 = vand.u32 %v42, 4294901760
  %v936 = vsub.f32 %v42, %v935
  %937 = vmatprep.subr.mxu0 %v936
  %v938 = vand.u32 %v41, 4294901760
  %v939 = vsub.f32 %v41, %v938
  %940 = vmatpush1.msra.mxu0 %v939
  %v941 = vand.u32 %v44, 4294901760
  %v942 = vsub.f32 %v44, %v941
  %943 = vmatprep.subr.mxu0 %v942
  %v944 = vand.u32 %v43, 4294901760
  %v945 = vsub.f32 %v43, %v944
  %946 = vmatpush1.msra.mxu0 %v945
  %v947 = vand.u32 %v46, 4294901760
  %v948 = vsub.f32 %v46, %v947
  %949 = vmatprep.subr.mxu0 %v948
  %v950 = vand.u32 %v45, 4294901760
  %v951 = vsub.f32 %v45, %v950
  %952 = vmatpush1.msra.mxu0 %v951
  %v953 = vand.u32 %v48, 4294901760
  %v954 = vsub.f32 %v48, %v953
  %955 = vmatprep.subr.mxu0 %v954
  %v956 = vand.u32 %v47, 4294901760
  %v957 = vsub.f32 %v47, %v956
  %958 = vmatpush1.msra.mxu0 %v957
  %v959 = vand.u32 %v50, 4294901760
  %v960 = vsub.f32 %v50, %v959
  %961 = vmatprep.subr.mxu0 %v960
  %v962 = vand.u32 %v49, 4294901760
  %v963 = vsub.f32 %v49, %v962
  %964 = vmatpush1.msra.mxu0 %v963
  %v965 = vand.u32 %v52, 4294901760
  %v966 = vsub.f32 %v52, %v965
  %967 = vmatprep.subr.mxu0 %v966
  %v968 = vand.u32 %v51, 4294901760
  %v969 = vsub.f32 %v51, %v968
  %970 = vmatpush1.msra.mxu0 %v969
  %v971 = vand.u32 %v54, 4294901760
  %v972 = vsub.f32 %v54, %v971
  %973 = vmatprep.subr.mxu0 %v972
  %v974 = vand.u32 %v53, 4294901760
  %v975 = vsub.f32 %v53, %v974
  %976 = vmatpush1.msra.mxu0 %v975
  %v977 = vand.u32 %v56, 4294901760
  %v978 = vsub.f32 %v56, %v977
  %979 = vmatprep.subr.mxu0 %v978
  %v980 = vand.u32 %v55, 4294901760
  %v981 = vsub.f32 %v55, %v980
  %982 = vmatpush1.msra.mxu0 %v981
  %v983 = vand.u32 %v58, 4294901760
  %v984 = vsub.f32 %v58, %v983
  %985 = vmatprep.subr.mxu0 %v984
  %v986 = vand.u32 %v57, 4294901760
  %v987 = vsub.f32 %v57, %v986
  %988 = vmatpush1.msra.mxu0 %v987
  %v989 = vand.u32 %v60, 4294901760
  %v990 = vsub.f32 %v60, %v989
  %991 = vmatprep.subr.mxu0 %v990
  %v992 = vand.u32 %v59, 4294901760
  %v993 = vsub.f32 %v59, %v992
  %994 = vmatpush1.msra.mxu0 %v993
  %v995 = vand.u32 %v62, 4294901760
  %v996 = vsub.f32 %v62, %v995
  %997 = vmatprep.subr.mxu0 %v996
  %v998 = vand.u32 %v61, 4294901760
  %v999 = vsub.f32 %v61, %v998
  %1000 = vmatpush1.msra.mxu0 %v999
  %v1001 = vand.u32 %v64, 4294901760
  %v1002 = vsub.f32 %v64, %v1001
  %1003 = vmatprep.subr.mxu0 %v1002
  %v1004 = vand.u32 %v63, 4294901760
  %v1005 = vsub.f32 %v63, %v1004
  %1006 = vmatpush1.msra.mxu0 %v1005
  %v1007 = vand.u32 %v66, 4294901760
  %v1008 = vsub.f32 %v66, %v1007
  %1009 = vmatprep.subr.mxu0 %v1008
  %v1010 = vand.u32 %v65, 4294901760
  %v1011 = vsub.f32 %v65, %v1010
  %1012 = vmatpush1.msra.mxu0 %v1011
  %v1013 = vand.u32 %v68, 4294901760
  %v1014 = vsub.f32 %v68, %v1013
  %1015 = vmatprep.subr.mxu0 %v1014
  %v1016 = vand.u32 %v67, 4294901760
  %v1017 = vsub.f32 %v67, %v1016
  %1018 = vmatpush1.msra.mxu0 %v1017
  %v1019 = vand.u32 %v70, 4294901760
  %v1020 = vsub.f32 %v70, %v1019
  %1021 = vmatprep.subr.mxu0 %v1020
  %v1022 = vand.u32 %v69, 4294901760
  %v1023 = vsub.f32 %v69, %v1022
  %1024 = vmatpush1.msra.mxu0 %v1023
  %v1025 = vand.u32 %v72, 4294901760
  %v1026 = vsub.f32 %v72, %v1025
  %1027 = vmatprep.subr.mxu0 %v1026
  %v1028 = vand.u32 %v71, 4294901760
  %v1029 = vsub.f32 %v71, %v1028
  %1030 = vmatpush1.msra.mxu0 %v1029
  %v1031 = vand.u32 %v74, 4294901760
  %v1032 = vsub.f32 %v74, %v1031
  %1033 = vmatprep.subr.mxu0 %v1032
  %v1034 = vand.u32 %v73, 4294901760
  %v1035 = vsub.f32 %v73, %v1034
  %1036 = vmatpush1.msra.mxu0 %v1035
  %v1037 = vand.u32 %v76, 4294901760
  %v1038 = vsub.f32 %v76, %v1037
  %1039 = vmatprep.subr.mxu0 %v1038
  %v1040 = vand.u32 %v75, 4294901760
  %v1041 = vsub.f32 %v75, %v1040
  %1042 = vmatpush1.msra.mxu0 %v1041
  %v1043 = vand.u32 %v286, 4294901760
  %v1044 = vsub.f32 %v286, %v1043
  %1045 = vmatprep.mubr.f32.mxu0 %v1044
  %v1046 = vand.u32 %v278, 4294901760
  %v1047 = vsub.f32 %v278, %v1046
  %1048 = vmatmul.mubr.f32.gmra.mrb[0].mxu0 %v1047
  %v1049 = vpop.f32.mrb[0].mxu0
  %v1050 = vadd.f32 %v847, %v1049
  %v1051 = vpop.f32.mrb[0].mxu0
  %v1052 = vadd.f32 %v849, %v1051
  %1053 = vdwg.mxu0
  %v1054 = vand.u32 %v14, 4294901760
  %1055 = vmatprep.subr.mxu0 %v1054
  %v1056 = vand.u32 %v13, 4294901760
  %1057 = vmatpush1.msra.mxu0 %v1056
  %v1058 = vand.u32 %v16, 4294901760
  %1059 = vmatprep.subr.mxu0 %v1058
  %v1060 = vand.u32 %v15, 4294901760
  %1061 = vmatpush1.msra.mxu0 %v1060
  %v1062 = vand.u32 %v18, 4294901760
  %1063 = vmatprep.subr.mxu0 %v1062
  %v1064 = vand.u32 %v17, 4294901760
  %1065 = vmatpush1.msra.mxu0 %v1064
  %v1066 = vand.u32 %v20, 4294901760
  %1067 = vmatprep.subr.mxu0 %v1066
  %v1068 = vand.u32 %v19, 4294901760
  %1069 = vmatpush1.msra.mxu0 %v1068
  %v1070 = vand.u32 %v22, 4294901760
  %1071 = vmatprep.subr.mxu0 %v1070
  %v1072 = vand.u32 %v21, 4294901760
  %1073 = vmatpush1.msra.mxu0 %v1072
  %v1074 = vand.u32 %v24, 4294901760
  %1075 = vmatprep.subr.mxu0 %v1074
  %v1076 = vand.u32 %v23, 4294901760
  %1077 = vmatpush1.msra.mxu0 %v1076
  %v1078 = vand.u32 %v26, 4294901760
  %1079 = vmatprep.subr.mxu0 %v1078
  %v1080 = vand.u32 %v25, 4294901760
  %1081 = vmatpush1.msra.mxu0 %v1080
  %v1082 = vand.u32 %v28, 4294901760
  %1083 = vmatprep.subr.mxu0 %v1082
  %v1084 = vand.u32 %v27, 4294901760
  %1085 = vmatpush1.msra.mxu0 %v1084
  %v1086 = vand.u32 %v30, 4294901760
  %1087 = vmatprep.subr.mxu0 %v1086
  %v1088 = vand.u32 %v29, 4294901760
  %1089 = vmatpush1.msra.mxu0 %v1088
  %v1090 = vand.u32 %v32, 4294901760
  %1091 = vmatprep.subr.mxu0 %v1090
  %v1092 = vand.u32 %v31, 4294901760
  %1093 = vmatpush1.msra.mxu0 %v1092
  %v1094 = vand.u32 %v34, 4294901760
  %1095 = vmatprep.subr.mxu0 %v1094
  %v1096 = vand.u32 %v33, 4294901760
  %1097 = vmatpush1.msra.mxu0 %v1096
  %v1098 = vand.u32 %v36, 4294901760
  %1099 = vmatprep.subr.mxu0 %v1098
  %v1100 = vand.u32 %v35, 4294901760
  %1101 = vmatpush1.msra.mxu0 %v1100
  %v1102 = vand.u32 %v38, 4294901760
  %1103 = vmatprep.subr.mxu0 %v1102
  %v1104 = vand.u32 %v37, 4294901760
  %1105 = vmatpush1.msra.mxu0 %v1104
  %v1106 = vand.u32 %v40, 4294901760
  %1107 = vmatprep.subr.mxu0 %v1106
  %v1108 = vand.u32 %v39, 4294901760
  %1109 = vmatpush1.msra.mxu0 %v1108
  %v1110 = vand.u32 %v42, 4294901760
  %1111 = vmatprep.subr.mxu0 %v1110
  %v1112 = vand.u32 %v41, 4294901760
  %1113 = vmatpush1.msra.mxu0 %v1112
  %v1114 = vand.u32 %v44, 4294901760
  %1115 = vmatprep.subr.mxu0 %v1114
  %v1116 = vand.u32 %v43, 4294901760
  %1117 = vmatpush1.msra.mxu0 %v1116
  %v1118 = vand.u32 %v46, 4294901760
  %1119 = vmatprep.subr.mxu0 %v1118
  %v1120 = vand.u32 %v45, 4294901760
  %1121 = vmatpush1.msra.mxu0 %v1120
  %v1122 = vand.u32 %v48, 4294901760
  %1123 = vmatprep.subr.mxu0 %v1122
  %v1124 = vand.u32 %v47, 4294901760
  %1125 = vmatpush1.msra.mxu0 %v1124
  %v1126 = vand.u32 %v50, 4294901760
  %1127 = vmatprep.subr.mxu0 %v1126
  %v1128 = vand.u32 %v49, 4294901760
  %1129 = vmatpush1.msra.mxu0 %v1128
  %v1130 = vand.u32 %v52, 4294901760
  %1131 = vmatprep.subr.mxu0 %v1130
  %v1132 = vand.u32 %v51, 4294901760
  %1133 = vmatpush1.msra.mxu0 %v1132
  %v1134 = vand.u32 %v54, 4294901760
  %1135 = vmatprep.subr.mxu0 %v1134
  %v1136 = vand.u32 %v53, 4294901760
  %1137 = vmatpush1.msra.mxu0 %v1136
  %v1138 = vand.u32 %v56, 4294901760
  %1139 = vmatprep.subr.mxu0 %v1138
  %v1140 = vand.u32 %v55, 4294901760
  %1141 = vmatpush1.msra.mxu0 %v1140
  %v1142 = vand.u32 %v58, 4294901760
  %1143 = vmatprep.subr.mxu0 %v1142
  %v1144 = vand.u32 %v57, 4294901760
  %1145 = vmatpush1.msra.mxu0 %v1144
  %v1146 = vand.u32 %v60, 4294901760
  %1147 = vmatprep.subr.mxu0 %v1146
  %v1148 = vand.u32 %v59, 4294901760
  %1149 = vmatpush1.msra.mxu0 %v1148
  %v1150 = vand.u32 %v62, 4294901760
  %1151 = vmatprep.subr.mxu0 %v1150
  %v1152 = vand.u32 %v61, 4294901760
  %1153 = vmatpush1.msra.mxu0 %v1152
  %v1154 = vand.u32 %v64, 4294901760
  %1155 = vmatprep.subr.mxu0 %v1154
  %v1156 = vand.u32 %v63, 4294901760
  %1157 = vmatpush1.msra.mxu0 %v1156
  %v1158 = vand.u32 %v66, 4294901760
  %1159 = vmatprep.subr.mxu0 %v1158
  %v1160 = vand.u32 %v65, 4294901760
  %1161 = vmatpush1.msra.mxu0 %v1160
  %v1162 = vand.u32 %v68, 4294901760
  %1163 = vmatprep.subr.mxu0 %v1162
  %v1164 = vand.u32 %v67, 4294901760
  %1165 = vmatpush1.msra.mxu0 %v1164
  %v1166 = vand.u32 %v70, 4294901760
  %1167 = vmatprep.subr.mxu0 %v1166
  %v1168 = vand.u32 %v69, 4294901760
  %1169 = vmatpush1.msra.mxu0 %v1168
  %v1170 = vand.u32 %v72, 4294901760
  %1171 = vmatprep.subr.mxu0 %v1170
  %v1172 = vand.u32 %v71, 4294901760
  %1173 = vmatpush1.msra.mxu0 %v1172
  %v1174 = vand.u32 %v74, 4294901760
  %1175 = vmatprep.subr.mxu0 %v1174
  %v1176 = vand.u32 %v73, 4294901760
  %1177 = vmatpush1.msra.mxu0 %v1176
  %v1178 = vand.u32 %v76, 4294901760
  %1179 = vmatprep.subr.mxu0 %v1178
  %v1180 = vand.u32 %v75, 4294901760
  %1181 = vmatpush1.msra.mxu0 %v1180
  %v1182 = vand.u32 %v286, 4294901760
  %v1183 = vsub.f32 %v286, %v1182
  %v1184 = vand.u32 %v1183, 4294901760
  %1185 = vmatprep.mubr.f32.mxu0 %v1184
  %v1186 = vand.u32 %v278, 4294901760
  %v1187 = vsub.f32 %v278, %v1186
  %v1188 = vand.u32 %v1187, 4294901760
  %1189 = vmatmul.mubr.f32.gmra.mrb[0].mxu0 %v1188
  %v1190 = vpop.f32.mrb[0].mxu0
  %v1191 = vadd.f32 %v1050, %v1190
  %v1192 = vpop.f32.mrb[0].mxu0
  %v1193 = vadd.f32 %v1052, %v1192
  %1194 = vdwg.mxu0
  %v1195 = vand.u32 %v14, 4294901760
  %v1196 = vsub.f32 %v14, %v1195
  %v1197 = vand.u32 %v1196, 4294901760
  %1198 = vmatprep.subr.mxu0 %v1197
  %v1199 = vand.u32 %v13, 4294901760
  %v1200 = vsub.f32 %v13, %v1199
  %v1201 = vand.u32 %v1200, 4294901760
  %1202 = vmatpush1.msra.mxu0 %v1201
  %v1203 = vand.u32 %v16, 4294901760
  %v1204 = vsub.f32 %v16, %v1203
  %v1205 = vand.u32 %v1204, 4294901760
  %1206 = vmatprep.subr.mxu0 %v1205
  %v1207 = vand.u32 %v15, 4294901760
  %v1208 = vsub.f32 %v15, %v1207
  %v1209 = vand.u32 %v1208, 4294901760
  %1210 = vmatpush1.msra.mxu0 %v1209
  %v1211 = vand.u32 %v18, 4294901760
  %v1212 = vsub.f32 %v18, %v1211
  %v1213 = vand.u32 %v1212, 4294901760
  %1214 = vmatprep.subr.mxu0 %v1213
  %v1215 = vand.u32 %v17, 4294901760
  %v1216 = vsub.f32 %v17, %v1215
  %v1217 = vand.u32 %v1216, 4294901760
  %1218 = vmatpush1.msra.mxu0 %v1217
  %v1219 = vand.u32 %v20, 4294901760
  %v1220 = vsub.f32 %v20, %v1219
  %v1221 = vand.u32 %v1220, 4294901760
  %1222 = vmatprep.subr.mxu0 %v1221
  %v1223 = vand.u32 %v19, 4294901760
  %v1224 = vsub.f32 %v19, %v1223
  %v1225 = vand.u32 %v1224, 4294901760
  %1226 = vmatpush1.msra.mxu0 %v1225
  %v1227 = vand.u32 %v22, 4294901760
  %v1228 = vsub.f32 %v22, %v1227
  %v1229 = vand.u32 %v1228, 4294901760
  %1230 = vmatprep.subr.mxu0 %v1229
  %v1231 = vand.u32 %v21, 4294901760
  %v1232 = vsub.f32 %v21, %v1231
  %v1233 = vand.u32 %v1232, 4294901760
  %1234 = vmatpush1.msra.mxu0 %v1233
  %v1235 = vand.u32 %v24, 4294901760
  %v1236 = vsub.f32 %v24, %v1235
  %v1237 = vand.u32 %v1236, 4294901760
  %1238 = vmatprep.subr.mxu0 %v1237
  %v1239 = vand.u32 %v23, 4294901760
  %v1240 = vsub.f32 %v23, %v1239
  %v1241 = vand.u32 %v1240, 4294901760
  %1242 = vmatpush1.msra.mxu0 %v1241
  %v1243 = vand.u32 %v26, 4294901760
  %v1244 = vsub.f32 %v26, %v1243
  %v1245 = vand.u32 %v1244, 4294901760
  %1246 = vmatprep.subr.mxu0 %v1245
  %v1247 = vand.u32 %v25, 4294901760
  %v1248 = vsub.f32 %v25, %v1247
  %v1249 = vand.u32 %v1248, 4294901760
  %1250 = vmatpush1.msra.mxu0 %v1249
  %v1251 = vand.u32 %v28, 4294901760
  %v1252 = vsub.f32 %v28, %v1251
  %v1253 = vand.u32 %v1252, 4294901760
  %1254 = vmatprep.subr.mxu0 %v1253
  %v1255 = vand.u32 %v27, 4294901760
  %v1256 = vsub.f32 %v27, %v1255
  %v1257 = vand.u32 %v1256, 4294901760
  %1258 = vmatpush1.msra.mxu0 %v1257
  %v1259 = vand.u32 %v30, 4294901760
  %v1260 = vsub.f32 %v30, %v1259
  %v1261 = vand.u32 %v1260, 4294901760
  %1262 = vmatprep.subr.mxu0 %v1261
  %v1263 = vand.u32 %v29, 4294901760
  %v1264 = vsub.f32 %v29, %v1263
  %v1265 = vand.u32 %v1264, 4294901760
  %1266 = vmatpush1.msra.mxu0 %v1265
  %v1267 = vand.u32 %v32, 4294901760
  %v1268 = vsub.f32 %v32, %v1267
  %v1269 = vand.u32 %v1268, 4294901760
  %1270 = vmatprep.subr.mxu0 %v1269
  %v1271 = vand.u32 %v31, 4294901760
  %v1272 = vsub.f32 %v31, %v1271
  %v1273 = vand.u32 %v1272, 4294901760
  %1274 = vmatpush1.msra.mxu0 %v1273
  %v1275 = vand.u32 %v34, 4294901760
  %v1276 = vsub.f32 %v34, %v1275
  %v1277 = vand.u32 %v1276, 4294901760
  %1278 = vmatprep.subr.mxu0 %v1277
  %v1279 = vand.u32 %v33, 4294901760
  %v1280 = vsub.f32 %v33, %v1279
  %v1281 = vand.u32 %v1280, 4294901760
  %1282 = vmatpush1.msra.mxu0 %v1281
  %v1283 = vand.u32 %v36, 4294901760
  %v1284 = vsub.f32 %v36, %v1283
  %v1285 = vand.u32 %v1284, 4294901760
  %1286 = vmatprep.subr.mxu0 %v1285
  %v1287 = vand.u32 %v35, 4294901760
  %v1288 = vsub.f32 %v35, %v1287
  %v1289 = vand.u32 %v1288, 4294901760
  %1290 = vmatpush1.msra.mxu0 %v1289
  %v1291 = vand.u32 %v38, 4294901760
  %v1292 = vsub.f32 %v38, %v1291
  %v1293 = vand.u32 %v1292, 4294901760
  %1294 = vmatprep.subr.mxu0 %v1293
  %v1295 = vand.u32 %v37, 4294901760
  %v1296 = vsub.f32 %v37, %v1295
  %v1297 = vand.u32 %v1296, 4294901760
  %1298 = vmatpush1.msra.mxu0 %v1297
  %v1299 = vand.u32 %v40, 4294901760
  %v1300 = vsub.f32 %v40, %v1299
  %v1301 = vand.u32 %v1300, 4294901760
  %1302 = vmatprep.subr.mxu0 %v1301
  %v1303 = vand.u32 %v39, 4294901760
  %v1304 = vsub.f32 %v39, %v1303
  %v1305 = vand.u32 %v1304, 4294901760
  %1306 = vmatpush1.msra.mxu0 %v1305
  %v1307 = vand.u32 %v42, 4294901760
  %v1308 = vsub.f32 %v42, %v1307
  %v1309 = vand.u32 %v1308, 4294901760
  %1310 = vmatprep.subr.mxu0 %v1309
  %v1311 = vand.u32 %v41, 4294901760
  %v1312 = vsub.f32 %v41, %v1311
  %v1313 = vand.u32 %v1312, 4294901760
  %1314 = vmatpush1.msra.mxu0 %v1313
  %v1315 = vand.u32 %v44, 4294901760
  %v1316 = vsub.f32 %v44, %v1315
  %v1317 = vand.u32 %v1316, 4294901760
  %1318 = vmatprep.subr.mxu0 %v1317
  %v1319 = vand.u32 %v43, 4294901760
  %v1320 = vsub.f32 %v43, %v1319
  %v1321 = vand.u32 %v1320, 4294901760
  %1322 = vmatpush1.msra.mxu0 %v1321
  %v1323 = vand.u32 %v46, 4294901760
  %v1324 = vsub.f32 %v46, %v1323
  %v1325 = vand.u32 %v1324, 4294901760
  %1326 = vmatprep.subr.mxu0 %v1325
  %v1327 = vand.u32 %v45, 4294901760
  %v1328 = vsub.f32 %v45, %v1327
  %v1329 = vand.u32 %v1328, 4294901760
  %1330 = vmatpush1.msra.mxu0 %v1329
  %v1331 = vand.u32 %v48, 4294901760
  %v1332 = vsub.f32 %v48, %v1331
  %v1333 = vand.u32 %v1332, 4294901760
  %1334 = vmatprep.subr.mxu0 %v1333
  %v1335 = vand.u32 %v47, 4294901760
  %v1336 = vsub.f32 %v47, %v1335
  %v1337 = vand.u32 %v1336, 4294901760
  %1338 = vmatpush1.msra.mxu0 %v1337
  %v1339 = vand.u32 %v50, 4294901760
  %v1340 = vsub.f32 %v50, %v1339
  %v1341 = vand.u32 %v1340, 4294901760
  %1342 = vmatprep.subr.mxu0 %v1341
  %v1343 = vand.u32 %v49, 4294901760
  %v1344 = vsub.f32 %v49, %v1343
  %v1345 = vand.u32 %v1344, 4294901760
  %1346 = vmatpush1.msra.mxu0 %v1345
  %v1347 = vand.u32 %v52, 4294901760
  %v1348 = vsub.f32 %v52, %v1347
  %v1349 = vand.u32 %v1348, 4294901760
  %1350 = vmatprep.subr.mxu0 %v1349
  %v1351 = vand.u32 %v51, 4294901760
  %v1352 = vsub.f32 %v51, %v1351
  %v1353 = vand.u32 %v1352, 4294901760
  %1354 = vmatpush1.msra.mxu0 %v1353
  %v1355 = vand.u32 %v54, 4294901760
  %v1356 = vsub.f32 %v54, %v1355
  %v1357 = vand.u32 %v1356, 4294901760
  %1358 = vmatprep.subr.mxu0 %v1357
  %v1359 = vand.u32 %v53, 4294901760
  %v1360 = vsub.f32 %v53, %v1359
  %v1361 = vand.u32 %v1360, 4294901760
  %1362 = vmatpush1.msra.mxu0 %v1361
  %v1363 = vand.u32 %v56, 4294901760
  %v1364 = vsub.f32 %v56, %v1363
  %v1365 = vand.u32 %v1364, 4294901760
  %1366 = vmatprep.subr.mxu0 %v1365
  %v1367 = vand.u32 %v55, 4294901760
  %v1368 = vsub.f32 %v55, %v1367
  %v1369 = vand.u32 %v1368, 4294901760
  %1370 = vmatpush1.msra.mxu0 %v1369
  %v1371 = vand.u32 %v58, 4294901760
  %v1372 = vsub.f32 %v58, %v1371
  %v1373 = vand.u32 %v1372, 4294901760
  %1374 = vmatprep.subr.mxu0 %v1373
  %v1375 = vand.u32 %v57, 4294901760
  %v1376 = vsub.f32 %v57, %v1375
  %v1377 = vand.u32 %v1376, 4294901760
  %1378 = vmatpush1.msra.mxu0 %v1377
  %v1379 = vand.u32 %v60, 4294901760
  %v1380 = vsub.f32 %v60, %v1379
  %v1381 = vand.u32 %v1380, 4294901760
  %1382 = vmatprep.subr.mxu0 %v1381
  %v1383 = vand.u32 %v59, 4294901760
  %v1384 = vsub.f32 %v59, %v1383
  %v1385 = vand.u32 %v1384, 4294901760
  %1386 = vmatpush1.msra.mxu0 %v1385
  %v1387 = vand.u32 %v62, 4294901760
  %v1388 = vsub.f32 %v62, %v1387
  %v1389 = vand.u32 %v1388, 4294901760
  %1390 = vmatprep.subr.mxu0 %v1389
  %v1391 = vand.u32 %v61, 4294901760
  %v1392 = vsub.f32 %v61, %v1391
  %v1393 = vand.u32 %v1392, 4294901760
  %1394 = vmatpush1.msra.mxu0 %v1393
  %v1395 = vand.u32 %v64, 4294901760
  %v1396 = vsub.f32 %v64, %v1395
  %v1397 = vand.u32 %v1396, 4294901760
  %1398 = vmatprep.subr.mxu0 %v1397
  %v1399 = vand.u32 %v63, 4294901760
  %v1400 = vsub.f32 %v63, %v1399
  %v1401 = vand.u32 %v1400, 4294901760
  %1402 = vmatpush1.msra.mxu0 %v1401
  %v1403 = vand.u32 %v66, 4294901760
  %v1404 = vsub.f32 %v66, %v1403
  %v1405 = vand.u32 %v1404, 4294901760
  %1406 = vmatprep.subr.mxu0 %v1405
  %v1407 = vand.u32 %v65, 4294901760
  %v1408 = vsub.f32 %v65, %v1407
  %v1409 = vand.u32 %v1408, 4294901760
  %1410 = vmatpush1.msra.mxu0 %v1409
  %v1411 = vand.u32 %v68, 4294901760
  %v1412 = vsub.f32 %v68, %v1411
  %v1413 = vand.u32 %v1412, 4294901760
  %1414 = vmatprep.subr.mxu0 %v1413
  %v1415 = vand.u32 %v67, 4294901760
  %v1416 = vsub.f32 %v67, %v1415
  %v1417 = vand.u32 %v1416, 4294901760
  %1418 = vmatpush1.msra.mxu0 %v1417
  %v1419 = vand.u32 %v70, 4294901760
  %v1420 = vsub.f32 %v70, %v1419
  %v1421 = vand.u32 %v1420, 4294901760
  %1422 = vmatprep.subr.mxu0 %v1421
  %v1423 = vand.u32 %v69, 4294901760
  %v1424 = vsub.f32 %v69, %v1423
  %v1425 = vand.u32 %v1424, 4294901760
  %1426 = vmatpush1.msra.mxu0 %v1425
  %v1427 = vand.u32 %v72, 4294901760
  %v1428 = vsub.f32 %v72, %v1427
  %v1429 = vand.u32 %v1428, 4294901760
  %1430 = vmatprep.subr.mxu0 %v1429
  %v1431 = vand.u32 %v71, 4294901760
  %v1432 = vsub.f32 %v71, %v1431
  %v1433 = vand.u32 %v1432, 4294901760
  %1434 = vmatpush1.msra.mxu0 %v1433
  %v1435 = vand.u32 %v74, 4294901760
  %v1436 = vsub.f32 %v74, %v1435
  %v1437 = vand.u32 %v1436, 4294901760
  %1438 = vmatprep.subr.mxu0 %v1437
  %v1439 = vand.u32 %v73, 4294901760
  %v1440 = vsub.f32 %v73, %v1439
  %v1441 = vand.u32 %v1440, 4294901760
  %1442 = vmatpush1.msra.mxu0 %v1441
  %v1443 = vand.u32 %v76, 4294901760
  %v1444 = vsub.f32 %v76, %v1443
  %v1445 = vand.u32 %v1444, 4294901760
  %1446 = vmatprep.subr.mxu0 %v1445
  %v1447 = vand.u32 %v75, 4294901760
  %v1448 = vsub.f32 %v75, %v1447
  %v1449 = vand.u32 %v1448, 4294901760
  %1450 = vmatpush1.msra.mxu0 %v1449
  %v1451 = vand.u32 %v286, 4294901760
  %1452 = vmatprep.mubr.f32.mxu0 %v1451
  %v1453 = vand.u32 %v278, 4294901760
  %1454 = vmatmul.mubr.f32.gmra.mrb[0].mxu0 %v1453
  %v1455 = vpop.f32.mrb[0].mxu0
  %v1456 = vadd.f32 %v1191, %v1455
  %v1457 = vpop.f32.mrb[0].mxu0
  %v1458 = vadd.f32 %v1193, %v1457
  %1459 = vdwg.mxu0
  %v1460 = vand.u32 %v14, 4294901760
  %1461 = vmatprep.subr.mxu0 %v1460
  %v1462 = vand.u32 %v13, 4294901760
  %1463 = vmatpush1.msra.mxu0 %v1462
  %v1464 = vand.u32 %v16, 4294901760
  %1465 = vmatprep.subr.mxu0 %v1464
  %v1466 = vand.u32 %v15, 4294901760
  %1467 = vmatpush1.msra.mxu0 %v1466
  %v1468 = vand.u32 %v18, 4294901760
  %1469 = vmatprep.subr.mxu0 %v1468
  %v1470 = vand.u32 %v17, 4294901760
  %1471 = vmatpush1.msra.mxu0 %v1470
  %v1472 = vand.u32 %v20, 4294901760
  %1473 = vmatprep.subr.mxu0 %v1472
  %v1474 = vand.u32 %v19, 4294901760
  %1475 = vmatpush1.msra.mxu0 %v1474
  %v1476 = vand.u32 %v22, 4294901760
  %1477 = vmatprep.subr.mxu0 %v1476
  %v1478 = vand.u32 %v21, 4294901760
  %1479 = vmatpush1.msra.mxu0 %v1478
  %v1480 = vand.u32 %v24, 4294901760
  %1481 = vmatprep.subr.mxu0 %v1480
  %v1482 = vand.u32 %v23, 4294901760
  %1483 = vmatpush1.msra.mxu0 %v1482
  %v1484 = vand.u32 %v26, 4294901760
  %1485 = vmatprep.subr.mxu0 %v1484
  %v1486 = vand.u32 %v25, 4294901760
  %1487 = vmatpush1.msra.mxu0 %v1486
  %v1488 = vand.u32 %v28, 4294901760
  %1489 = vmatprep.subr.mxu0 %v1488
  %v1490 = vand.u32 %v27, 4294901760
  %1491 = vmatpush1.msra.mxu0 %v1490
  %v1492 = vand.u32 %v30, 4294901760
  %1493 = vmatprep.subr.mxu0 %v1492
  %v1494 = vand.u32 %v29, 4294901760
  %1495 = vmatpush1.msra.mxu0 %v1494
  %v1496 = vand.u32 %v32, 4294901760
  %1497 = vmatprep.subr.mxu0 %v1496
  %v1498 = vand.u32 %v31, 4294901760
  %1499 = vmatpush1.msra.mxu0 %v1498
  %v1500 = vand.u32 %v34, 4294901760
  %1501 = vmatprep.subr.mxu0 %v1500
  %v1502 = vand.u32 %v33, 4294901760
  %1503 = vmatpush1.msra.mxu0 %v1502
  %v1504 = vand.u32 %v36, 4294901760
  %1505 = vmatprep.subr.mxu0 %v1504
  %v1506 = vand.u32 %v35, 4294901760
  %1507 = vmatpush1.msra.mxu0 %v1506
  %v1508 = vand.u32 %v38, 4294901760
  %1509 = vmatprep.subr.mxu0 %v1508
  %v1510 = vand.u32 %v37, 4294901760
  %1511 = vmatpush1.msra.mxu0 %v1510
  %v1512 = vand.u32 %v40, 4294901760
  %1513 = vmatprep.subr.mxu0 %v1512
  %v1514 = vand.u32 %v39, 4294901760
  %1515 = vmatpush1.msra.mxu0 %v1514
  %v1516 = vand.u32 %v42, 4294901760
  %1517 = vmatprep.subr.mxu0 %v1516
  %v1518 = vand.u32 %v41, 4294901760
  %1519 = vmatpush1.msra.mxu0 %v1518
  %v1520 = vand.u32 %v44, 4294901760
  %1521 = vmatprep.subr.mxu0 %v1520
  %v1522 = vand.u32 %v43, 4294901760
  %1523 = vmatpush1.msra.mxu0 %v1522
  %v1524 = vand.u32 %v46, 4294901760
  %1525 = vmatprep.subr.mxu0 %v1524
  %v1526 = vand.u32 %v45, 4294901760
  %1527 = vmatpush1.msra.mxu0 %v1526
  %v1528 = vand.u32 %v48, 4294901760
  %1529 = vmatprep.subr.mxu0 %v1528
  %v1530 = vand.u32 %v47, 4294901760
  %1531 = vmatpush1.msra.mxu0 %v1530
  %v1532 = vand.u32 %v50, 4294901760
  %1533 = vmatprep.subr.mxu0 %v1532
  %v1534 = vand.u32 %v49, 4294901760
  %1535 = vmatpush1.msra.mxu0 %v1534
  %v1536 = vand.u32 %v52, 4294901760
  %1537 = vmatprep.subr.mxu0 %v1536
  %v1538 = vand.u32 %v51, 4294901760
  %1539 = vmatpush1.msra.mxu0 %v1538
  %v1540 = vand.u32 %v54, 4294901760
  %1541 = vmatprep.subr.mxu0 %v1540
  %v1542 = vand.u32 %v53, 4294901760
  %1543 = vmatpush1.msra.mxu0 %v1542
  %v1544 = vand.u32 %v56, 4294901760
  %1545 = vmatprep.subr.mxu0 %v1544
  %v1546 = vand.u32 %v55, 4294901760
  %1547 = vmatpush1.msra.mxu0 %v1546
  %v1548 = vand.u32 %v58, 4294901760
  %1549 = vmatprep.subr.mxu0 %v1548
  %v1550 = vand.u32 %v57, 4294901760
  %1551 = vmatpush1.msra.mxu0 %v1550
  %v1552 = vand.u32 %v60, 4294901760
  %1553 = vmatprep.subr.mxu0 %v1552
  %v1554 = vand.u32 %v59, 4294901760
  %1555 = vmatpush1.msra.mxu0 %v1554
  %v1556 = vand.u32 %v62, 4294901760
  %1557 = vmatprep.subr.mxu0 %v1556
  %v1558 = vand.u32 %v61, 4294901760
  %1559 = vmatpush1.msra.mxu0 %v1558
  %v1560 = vand.u32 %v64, 4294901760
  %1561 = vmatprep.subr.mxu0 %v1560
  %v1562 = vand.u32 %v63, 4294901760
  %1563 = vmatpush1.msra.mxu0 %v1562
  %v1564 = vand.u32 %v66, 4294901760
  %1565 = vmatprep.subr.mxu0 %v1564
  %v1566 = vand.u32 %v65, 4294901760
  %1567 = vmatpush1.msra.mxu0 %v1566
  %v1568 = vand.u32 %v68, 4294901760
  %1569 = vmatprep.subr.mxu0 %v1568
  %v1570 = vand.u32 %v67, 4294901760
  %1571 = vmatpush1.msra.mxu0 %v1570
  %v1572 = vand.u32 %v70, 4294901760
  %1573 = vmatprep.subr.mxu0 %v1572
  %v1574 = vand.u32 %v69, 4294901760
  %1575 = vmatpush1.msra.mxu0 %v1574
  %v1576 = vand.u32 %v72, 4294901760
  %1577 = vmatprep.subr.mxu0 %v1576
  %v1578 = vand.u32 %v71, 4294901760
  %1579 = vmatpush1.msra.mxu0 %v1578
  %v1580 = vand.u32 %v74, 4294901760
  %1581 = vmatprep.subr.mxu0 %v1580
  %v1582 = vand.u32 %v73, 4294901760
  %1583 = vmatpush1.msra.mxu0 %v1582
  %v1584 = vand.u32 %v76, 4294901760
  %1585 = vmatprep.subr.mxu0 %v1584
  %v1586 = vand.u32 %v75, 4294901760
  %1587 = vmatpush1.msra.mxu0 %v1586
  %v1588 = vand.u32 %v286, 4294901760
  %1589 = vmatprep.mubr.f32.mxu0 %v1588
  %v1590 = vand.u32 %v278, 4294901760
  %1591 = vmatmul.mubr.f32.gmra.mrb[0].mxu0 %v1590
  %v1592 = vpop.f32.mrb[0].mxu0
  %v1593 = vadd.f32 %v1456, %v1592
  %v1594 = vpop.f32.mrb[0].mxu0
  %v1595 = vadd.f32 %v1458, %v1594
  %1596 = vdwg.mxu0
  %v1597 = vand.u32 %v78, 4294901760
  %1598 = vmatprep.subr.mxu0 %v1597
  %v1599 = vand.u32 %v77, 4294901760
  %1600 = vmatpush1.msra.mxu0 %v1599
  %v1601 = vand.u32 %v80, 4294901760
  %1602 = vmatprep.subr.mxu0 %v1601
  %v1603 = vand.u32 %v79, 4294901760
  %1604 = vmatpush1.msra.mxu0 %v1603
  %v1605 = vand.u32 %v82, 4294901760
  %1606 = vmatprep.subr.mxu0 %v1605
  %v1607 = vand.u32 %v81, 4294901760
  %1608 = vmatpush1.msra.mxu0 %v1607
  %v1609 = vand.u32 %v84, 4294901760
  %1610 = vmatprep.subr.mxu0 %v1609
  %v1611 = vand.u32 %v83, 4294901760
  %1612 = vmatpush1.msra.mxu0 %v1611
  %v1613 = vand.u32 %v86, 4294901760
  %1614 = vmatprep.subr.mxu0 %v1613
  %v1615 = vand.u32 %v85, 4294901760
  %1616 = vmatpush1.msra.mxu0 %v1615
  %v1617 = vand.u32 %v88, 4294901760
  %1618 = vmatprep.subr.mxu0 %v1617
  %v1619 = vand.u32 %v87, 4294901760
  %1620 = vmatpush1.msra.mxu0 %v1619
  %v1621 = vand.u32 %v90, 4294901760
  %1622 = vmatprep.subr.mxu0 %v1621
  %v1623 = vand.u32 %v89, 4294901760
  %1624 = vmatpush1.msra.mxu0 %v1623
  %v1625 = vand.u32 %v92, 4294901760
  %1626 = vmatprep.subr.mxu0 %v1625
  %v1627 = vand.u32 %v91, 4294901760
  %1628 = vmatpush1.msra.mxu0 %v1627
  %v1629 = vand.u32 %v94, 4294901760
  %1630 = vmatprep.subr.mxu0 %v1629
  %v1631 = vand.u32 %v93, 4294901760
  %1632 = vmatpush1.msra.mxu0 %v1631
  %v1633 = vand.u32 %v96, 4294901760
  %1634 = vmatprep.subr.mxu0 %v1633
  %v1635 = vand.u32 %v95, 4294901760
  %1636 = vmatpush1.msra.mxu0 %v1635
  %v1637 = vand.u32 %v98, 4294901760
  %1638 = vmatprep.subr.mxu0 %v1637
  %v1639 = vand.u32 %v97, 4294901760
  %1640 = vmatpush1.msra.mxu0 %v1639
  %v1641 = vand.u32 %v100, 4294901760
  %1642 = vmatprep.subr.mxu0 %v1641
  %v1643 = vand.u32 %v99, 4294901760
  %1644 = vmatpush1.msra.mxu0 %v1643
  %v1645 = vand.u32 %v102, 4294901760
  %1646 = vmatprep.subr.mxu0 %v1645
  %v1647 = vand.u32 %v101, 4294901760
  %1648 = vmatpush1.msra.mxu0 %v1647
  %v1649 = vand.u32 %v104, 4294901760
  %1650 = vmatprep.subr.mxu0 %v1649
  %v1651 = vand.u32 %v103, 4294901760
  %1652 = vmatpush1.msra.mxu0 %v1651
  %v1653 = vand.u32 %v106, 4294901760
  %1654 = vmatprep.subr.mxu0 %v1653
  %v1655 = vand.u32 %v105, 4294901760
  %1656 = vmatpush1.msra.mxu0 %v1655
  %v1657 = vand.u32 %v108, 4294901760
  %1658 = vmatprep.subr.mxu0 %v1657
  %v1659 = vand.u32 %v107, 4294901760
  %1660 = vmatpush1.msra.mxu0 %v1659
  %v1661 = vand.u32 %v110, 4294901760
  %1662 = vmatprep.subr.mxu0 %v1661
  %v1663 = vand.u32 %v109, 4294901760
  %1664 = vmatpush1.msra.mxu0 %v1663
  %v1665 = vand.u32 %v112, 4294901760
  %1666 = vmatprep.subr.mxu0 %v1665
  %v1667 = vand.u32 %v111, 4294901760
  %1668 = vmatpush1.msra.mxu0 %v1667
  %v1669 = vand.u32 %v114, 4294901760
  %1670 = vmatprep.subr.mxu0 %v1669
  %v1671 = vand.u32 %v113, 4294901760
  %1672 = vmatpush1.msra.mxu0 %v1671
  %v1673 = vand.u32 %v116, 4294901760
  %1674 = vmatprep.subr.mxu0 %v1673
  %v1675 = vand.u32 %v115, 4294901760
  %1676 = vmatpush1.msra.mxu0 %v1675
  %v1677 = vand.u32 %v118, 4294901760
  %1678 = vmatprep.subr.mxu0 %v1677
  %v1679 = vand.u32 %v117, 4294901760
  %1680 = vmatpush1.msra.mxu0 %v1679
  %v1681 = vand.u32 %v120, 4294901760
  %1682 = vmatprep.subr.mxu0 %v1681
  %v1683 = vand.u32 %v119, 4294901760
  %1684 = vmatpush1.msra.mxu0 %v1683
  %v1685 = vand.u32 %v122, 4294901760
  %1686 = vmatprep.subr.mxu0 %v1685
  %v1687 = vand.u32 %v121, 4294901760
  %1688 = vmatpush1.msra.mxu0 %v1687
  %v1689 = vand.u32 %v124, 4294901760
  %1690 = vmatprep.subr.mxu0 %v1689
  %v1691 = vand.u32 %v123, 4294901760
  %1692 = vmatpush1.msra.mxu0 %v1691
  %v1693 = vand.u32 %v126, 4294901760
  %1694 = vmatprep.subr.mxu0 %v1693
  %v1695 = vand.u32 %v125, 4294901760
  %1696 = vmatpush1.msra.mxu0 %v1695
  %v1697 = vand.u32 %v128, 4294901760
  %1698 = vmatprep.subr.mxu0 %v1697
  %v1699 = vand.u32 %v127, 4294901760
  %1700 = vmatpush1.msra.mxu0 %v1699
  %v1701 = vand.u32 %v130, 4294901760
  %1702 = vmatprep.subr.mxu0 %v1701
  %v1703 = vand.u32 %v129, 4294901760
  %1704 = vmatpush1.msra.mxu0 %v1703
  %v1705 = vand.u32 %v132, 4294901760
  %1706 = vmatprep.subr.mxu0 %v1705
  %v1707 = vand.u32 %v131, 4294901760
  %1708 = vmatpush1.msra.mxu0 %v1707
  %v1709 = vand.u32 %v134, 4294901760
  %1710 = vmatprep.subr.mxu0 %v1709
  %v1711 = vand.u32 %v133, 4294901760
  %1712 = vmatpush1.msra.mxu0 %v1711
  %v1713 = vand.u32 %v136, 4294901760
  %1714 = vmatprep.subr.mxu0 %v1713
  %v1715 = vand.u32 %v135, 4294901760
  %1716 = vmatpush1.msra.mxu0 %v1715
  %v1717 = vand.u32 %v138, 4294901760
  %1718 = vmatprep.subr.mxu0 %v1717
  %v1719 = vand.u32 %v137, 4294901760
  %1720 = vmatpush1.msra.mxu0 %v1719
  %v1721 = vand.u32 %v140, 4294901760
  %1722 = vmatprep.subr.mxu0 %v1721
  %v1723 = vand.u32 %v139, 4294901760
  %1724 = vmatpush1.msra.mxu0 %v1723
  %v1725 = vand.u32 %v287, 4294901760
  %v1726 = vsub.f32 %v287, %v1725
  %v1727 = vand.u32 %v1726, 4294901760
  %v1728 = vsub.f32 %v1726, %v1727
  %v1729 = vand.u32 %v1728, 4294901760
  %1730 = vmatprep.mubr.f32.mxu0 %v1729
  %v1731 = vand.u32 %v285, 4294901760
  %v1732 = vsub.f32 %v285, %v1731
  %v1733 = vand.u32 %v1732, 4294901760
  %v1734 = vsub.f32 %v1732, %v1733
  %v1735 = vand.u32 %v1734, 4294901760
  %1736 = vmatmul.mubr.f32.gmra.mrb[0].mxu0 %v1735
  %v1737 = vpop.f32.mrb[0].mxu0
  %v1738 = vadd.f32 %v1593, %v1737
  %v1739 = vpop.f32.mrb[0].mxu0
  %v1740 = vadd.f32 %v1595, %v1739
  %1741 = vdwg.mxu0
  %v1742 = vand.u32 %v78, 4294901760
  %v1743 = vsub.f32 %v78, %v1742
  %v1744 = vand.u32 %v1743, 4294901760
  %v1745 = vsub.f32 %v1743, %v1744
  %v1746 = vand.u32 %v1745, 4294901760
  %1747 = vmatprep.subr.mxu0 %v1746
  %v1748 = vand.u32 %v77, 4294901760
  %v1749 = vsub.f32 %v77, %v1748
  %v1750 = vand.u32 %v1749, 4294901760
  %v1751 = vsub.f32 %v1749, %v1750
  %v1752 = vand.u32 %v1751, 4294901760
  %1753 = vmatpush1.msra.mxu0 %v1752
  %v1754 = vand.u32 %v80, 4294901760
  %v1755 = vsub.f32 %v80, %v1754
  %v1756 = vand.u32 %v1755, 4294901760
  %v1757 = vsub.f32 %v1755, %v1756
  %v1758 = vand.u32 %v1757, 4294901760
  %1759 = vmatprep.subr.mxu0 %v1758
  %v1760 = vand.u32 %v79, 4294901760
  %v1761 = vsub.f32 %v79, %v1760
  %v1762 = vand.u32 %v1761, 4294901760
  %v1763 = vsub.f32 %v1761, %v1762
  %v1764 = vand.u32 %v1763, 4294901760
  %1765 = vmatpush1.msra.mxu0 %v1764
  %v1766 = vand.u32 %v82, 4294901760
  %v1767 = vsub.f32 %v82, %v1766
  %v1768 = vand.u32 %v1767, 4294901760
  %v1769 = vsub.f32 %v1767, %v1768
  %v1770 = vand.u32 %v1769, 4294901760
  %1771 = vmatprep.subr.mxu0 %v1770
  %v1772 = vand.u32 %v81, 4294901760
  %v1773 = vsub.f32 %v81, %v1772
  %v1774 = vand.u32 %v1773, 4294901760
  %v1775 = vsub.f32 %v1773, %v1774
  %v1776 = vand.u32 %v1775, 4294901760
  %1777 = vmatpush1.msra.mxu0 %v1776
  %v1778 = vand.u32 %v84, 4294901760
  %v1779 = vsub.f32 %v84, %v1778
  %v1780 = vand.u32 %v1779, 4294901760
  %v1781 = vsub.f32 %v1779, %v1780
  %v1782 = vand.u32 %v1781, 4294901760
  %1783 = vmatprep.subr.mxu0 %v1782
  %v1784 = vand.u32 %v83, 4294901760
  %v1785 = vsub.f32 %v83, %v1784
  %v1786 = vand.u32 %v1785, 4294901760
  %v1787 = vsub.f32 %v1785, %v1786
  %v1788 = vand.u32 %v1787, 4294901760
  %1789 = vmatpush1.msra.mxu0 %v1788
  %v1790 = vand.u32 %v86, 4294901760
  %v1791 = vsub.f32 %v86, %v1790
  %v1792 = vand.u32 %v1791, 4294901760
  %v1793 = vsub.f32 %v1791, %v1792
  %v1794 = vand.u32 %v1793, 4294901760
  %1795 = vmatprep.subr.mxu0 %v1794
  %v1796 = vand.u32 %v85, 4294901760
  %v1797 = vsub.f32 %v85, %v1796
  %v1798 = vand.u32 %v1797, 4294901760
  %v1799 = vsub.f32 %v1797, %v1798
  %v1800 = vand.u32 %v1799, 4294901760
  %1801 = vmatpush1.msra.mxu0 %v1800
  %v1802 = vand.u32 %v88, 4294901760
  %v1803 = vsub.f32 %v88, %v1802
  %v1804 = vand.u32 %v1803, 4294901760
  %v1805 = vsub.f32 %v1803, %v1804
  %v1806 = vand.u32 %v1805, 4294901760
  %1807 = vmatprep.subr.mxu0 %v1806
  %v1808 = vand.u32 %v87, 4294901760
  %v1809 = vsub.f32 %v87, %v1808
  %v1810 = vand.u32 %v1809, 4294901760
  %v1811 = vsub.f32 %v1809, %v1810
  %v1812 = vand.u32 %v1811, 4294901760
  %1813 = vmatpush1.msra.mxu0 %v1812
  %v1814 = vand.u32 %v90, 4294901760
  %v1815 = vsub.f32 %v90, %v1814
  %v1816 = vand.u32 %v1815, 4294901760
  %v1817 = vsub.f32 %v1815, %v1816
  %v1818 = vand.u32 %v1817, 4294901760
  %1819 = vmatprep.subr.mxu0 %v1818
  %v1820 = vand.u32 %v89, 4294901760
  %v1821 = vsub.f32 %v89, %v1820
  %v1822 = vand.u32 %v1821, 4294901760
  %v1823 = vsub.f32 %v1821, %v1822
  %v1824 = vand.u32 %v1823, 4294901760
  %1825 = vmatpush1.msra.mxu0 %v1824
  %v1826 = vand.u32 %v92, 4294901760
  %v1827 = vsub.f32 %v92, %v1826
  %v1828 = vand.u32 %v1827, 4294901760
  %v1829 = vsub.f32 %v1827, %v1828
  %v1830 = vand.u32 %v1829, 4294901760
  %1831 = vmatprep.subr.mxu0 %v1830
  %v1832 = vand.u32 %v91, 4294901760
  %v1833 = vsub.f32 %v91, %v1832
  %v1834 = vand.u32 %v1833, 4294901760
  %v1835 = vsub.f32 %v1833, %v1834
  %v1836 = vand.u32 %v1835, 4294901760
  %1837 = vmatpush1.msra.mxu0 %v1836
  %v1838 = vand.u32 %v94, 4294901760
  %v1839 = vsub.f32 %v94, %v1838
  %v1840 = vand.u32 %v1839, 4294901760
  %v1841 = vsub.f32 %v1839, %v1840
  %v1842 = vand.u32 %v1841, 4294901760
  %1843 = vmatprep.subr.mxu0 %v1842
  %v1844 = vand.u32 %v93, 4294901760
  %v1845 = vsub.f32 %v93, %v1844
  %v1846 = vand.u32 %v1845, 4294901760
  %v1847 = vsub.f32 %v1845, %v1846
  %v1848 = vand.u32 %v1847, 4294901760
  %1849 = vmatpush1.msra.mxu0 %v1848
  %v1850 = vand.u32 %v96, 4294901760
  %v1851 = vsub.f32 %v96, %v1850
  %v1852 = vand.u32 %v1851, 4294901760
  %v1853 = vsub.f32 %v1851, %v1852
  %v1854 = vand.u32 %v1853, 4294901760
  %1855 = vmatprep.subr.mxu0 %v1854
  %v1856 = vand.u32 %v95, 4294901760
  %v1857 = vsub.f32 %v95, %v1856
  %v1858 = vand.u32 %v1857, 4294901760
  %v1859 = vsub.f32 %v1857, %v1858
  %v1860 = vand.u32 %v1859, 4294901760
  %1861 = vmatpush1.msra.mxu0 %v1860
  %v1862 = vand.u32 %v98, 4294901760
  %v1863 = vsub.f32 %v98, %v1862
  %v1864 = vand.u32 %v1863, 4294901760
  %v1865 = vsub.f32 %v1863, %v1864
  %v1866 = vand.u32 %v1865, 4294901760
  %1867 = vmatprep.subr.mxu0 %v1866
  %v1868 = vand.u32 %v97, 4294901760
  %v1869 = vsub.f32 %v97, %v1868
  %v1870 = vand.u32 %v1869, 4294901760
  %v1871 = vsub.f32 %v1869, %v1870
  %v1872 = vand.u32 %v1871, 4294901760
  %1873 = vmatpush1.msra.mxu0 %v1872
  %v1874 = vand.u32 %v100, 4294901760
  %v1875 = vsub.f32 %v100, %v1874
  %v1876 = vand.u32 %v1875, 4294901760
  %v1877 = vsub.f32 %v1875, %v1876
  %v1878 = vand.u32 %v1877, 4294901760
  %1879 = vmatprep.subr.mxu0 %v1878
  %v1880 = vand.u32 %v99, 4294901760
  %v1881 = vsub.f32 %v99, %v1880
  %v1882 = vand.u32 %v1881, 4294901760
  %v1883 = vsub.f32 %v1881, %v1882
  %v1884 = vand.u32 %v1883, 4294901760
  %1885 = vmatpush1.msra.mxu0 %v1884
  %v1886 = vand.u32 %v102, 4294901760
  %v1887 = vsub.f32 %v102, %v1886
  %v1888 = vand.u32 %v1887, 4294901760
  %v1889 = vsub.f32 %v1887, %v1888
  %v1890 = vand.u32 %v1889, 4294901760
  %1891 = vmatprep.subr.mxu0 %v1890
  %v1892 = vand.u32 %v101, 4294901760
  %v1893 = vsub.f32 %v101, %v1892
  %v1894 = vand.u32 %v1893, 4294901760
  %v1895 = vsub.f32 %v1893, %v1894
  %v1896 = vand.u32 %v1895, 4294901760
  %1897 = vmatpush1.msra.mxu0 %v1896
  %v1898 = vand.u32 %v104, 4294901760
  %v1899 = vsub.f32 %v104, %v1898
  %v1900 = vand.u32 %v1899, 4294901760
  %v1901 = vsub.f32 %v1899, %v1900
  %v1902 = vand.u32 %v1901, 4294901760
  %1903 = vmatprep.subr.mxu0 %v1902
  %v1904 = vand.u32 %v103, 4294901760
  %v1905 = vsub.f32 %v103, %v1904
  %v1906 = vand.u32 %v1905, 4294901760
  %v1907 = vsub.f32 %v1905, %v1906
  %v1908 = vand.u32 %v1907, 4294901760
  %1909 = vmatpush1.msra.mxu0 %v1908
  %v1910 = vand.u32 %v106, 4294901760
  %v1911 = vsub.f32 %v106, %v1910
  %v1912 = vand.u32 %v1911, 4294901760
  %v1913 = vsub.f32 %v1911, %v1912
  %v1914 = vand.u32 %v1913, 4294901760
  %1915 = vmatprep.subr.mxu0 %v1914
  %v1916 = vand.u32 %v105, 4294901760
  %v1917 = vsub.f32 %v105, %v1916
  %v1918 = vand.u32 %v1917, 4294901760
  %v1919 = vsub.f32 %v1917, %v1918
  %v1920 = vand.u32 %v1919, 4294901760
  %1921 = vmatpush1.msra.mxu0 %v1920
  %v1922 = vand.u32 %v108, 4294901760
  %v1923 = vsub.f32 %v108, %v1922
  %v1924 = vand.u32 %v1923, 4294901760
  %v1925 = vsub.f32 %v1923, %v1924
  %v1926 = vand.u32 %v1925, 4294901760
  %1927 = vmatprep.subr.mxu0 %v1926
  %v1928 = vand.u32 %v107, 4294901760
  %v1929 = vsub.f32 %v107, %v1928
  %v1930 = vand.u32 %v1929, 4294901760
  %v1931 = vsub.f32 %v1929, %v1930
  %v1932 = vand.u32 %v1931, 4294901760
  %1933 = vmatpush1.msra.mxu0 %v1932
  %v1934 = vand.u32 %v110, 4294901760
  %v1935 = vsub.f32 %v110, %v1934
  %v1936 = vand.u32 %v1935, 4294901760
  %v1937 = vsub.f32 %v1935, %v1936
  %v1938 = vand.u32 %v1937, 4294901760
  %1939 = vmatprep.subr.mxu0 %v1938
  %v1940 = vand.u32 %v109, 4294901760
  %v1941 = vsub.f32 %v109, %v1940
  %v1942 = vand.u32 %v1941, 4294901760
  %v1943 = vsub.f32 %v1941, %v1942
  %v1944 = vand.u32 %v1943, 4294901760
  %1945 = vmatpush1.msra.mxu0 %v1944
  %v1946 = vand.u32 %v112, 4294901760
  %v1947 = vsub.f32 %v112, %v1946
  %v1948 = vand.u32 %v1947, 4294901760
  %v1949 = vsub.f32 %v1947, %v1948
  %v1950 = vand.u32 %v1949, 4294901760
  %1951 = vmatprep.subr.mxu0 %v1950
  %v1952 = vand.u32 %v111, 4294901760
  %v1953 = vsub.f32 %v111, %v1952
  %v1954 = vand.u32 %v1953, 4294901760
  %v1955 = vsub.f32 %v1953, %v1954
  %v1956 = vand.u32 %v1955, 4294901760
  %1957 = vmatpush1.msra.mxu0 %v1956
  %v1958 = vand.u32 %v114, 4294901760
  %v1959 = vsub.f32 %v114, %v1958
  %v1960 = vand.u32 %v1959, 4294901760
  %v1961 = vsub.f32 %v1959, %v1960
  %v1962 = vand.u32 %v1961, 4294901760
  %1963 = vmatprep.subr.mxu0 %v1962
  %v1964 = vand.u32 %v113, 4294901760
  %v1965 = vsub.f32 %v113, %v1964
  %v1966 = vand.u32 %v1965, 4294901760
  %v1967 = vsub.f32 %v1965, %v1966
  %v1968 = vand.u32 %v1967, 4294901760
  %1969 = vmatpush1.msra.mxu0 %v1968
  %v1970 = vand.u32 %v116, 4294901760
  %v1971 = vsub.f32 %v116, %v1970
  %v1972 = vand.u32 %v1971, 4294901760
  %v1973 = vsub.f32 %v1971, %v1972
  %v1974 = vand.u32 %v1973, 4294901760
  %1975 = vmatprep.subr.mxu0 %v1974
  %v1976 = vand.u32 %v115, 4294901760
  %v1977 = vsub.f32 %v115, %v1976
  %v1978 = vand.u32 %v1977, 4294901760
  %v1979 = vsub.f32 %v1977, %v1978
  %v1980 = vand.u32 %v1979, 4294901760
  %1981 = vmatpush1.msra.mxu0 %v1980
  %v1982 = vand.u32 %v118, 4294901760
  %v1983 = vsub.f32 %v118, %v1982
  %v1984 = vand.u32 %v1983, 4294901760
  %v1985 = vsub.f32 %v1983, %v1984
  %v1986 = vand.u32 %v1985, 4294901760
  %1987 = vmatprep.subr.mxu0 %v1986
  %v1988 = vand.u32 %v117, 4294901760
  %v1989 = vsub.f32 %v117, %v1988
  %v1990 = vand.u32 %v1989, 4294901760
  %v1991 = vsub.f32 %v1989, %v1990
  %v1992 = vand.u32 %v1991, 4294901760
  %1993 = vmatpush1.msra.mxu0 %v1992
  %v1994 = vand.u32 %v120, 4294901760
  %v1995 = vsub.f32 %v120, %v1994
  %v1996 = vand.u32 %v1995, 4294901760
  %v1997 = vsub.f32 %v1995, %v1996
  %v1998 = vand.u32 %v1997, 4294901760
  %1999 = vmatprep.subr.mxu0 %v1998
  %v2000 = vand.u32 %v119, 4294901760
  %v2001 = vsub.f32 %v119, %v2000
  %v2002 = vand.u32 %v2001, 4294901760
  %v2003 = vsub.f32 %v2001, %v2002
  %v2004 = vand.u32 %v2003, 4294901760
  %2005 = vmatpush1.msra.mxu0 %v2004
  %v2006 = vand.u32 %v122, 4294901760
  %v2007 = vsub.f32 %v122, %v2006
  %v2008 = vand.u32 %v2007, 4294901760
  %v2009 = vsub.f32 %v2007, %v2008
  %v2010 = vand.u32 %v2009, 4294901760
  %2011 = vmatprep.subr.mxu0 %v2010
  %v2012 = vand.u32 %v121, 4294901760
  %v2013 = vsub.f32 %v121, %v2012
  %v2014 = vand.u32 %v2013, 4294901760
  %v2015 = vsub.f32 %v2013, %v2014
  %v2016 = vand.u32 %v2015, 4294901760
  %2017 = vmatpush1.msra.mxu0 %v2016
  %v2018 = vand.u32 %v124, 4294901760
  %v2019 = vsub.f32 %v124, %v2018
  %v2020 = vand.u32 %v2019, 4294901760
  %v2021 = vsub.f32 %v2019, %v2020
  %v2022 = vand.u32 %v2021, 4294901760
  %2023 = vmatprep.subr.mxu0 %v2022
  %v2024 = vand.u32 %v123, 4294901760
  %v2025 = vsub.f32 %v123, %v2024
  %v2026 = vand.u32 %v2025, 4294901760
  %v2027 = vsub.f32 %v2025, %v2026
  %v2028 = vand.u32 %v2027, 4294901760
  %2029 = vmatpush1.msra.mxu0 %v2028
  %v2030 = vand.u32 %v126, 4294901760
  %v2031 = vsub.f32 %v126, %v2030
  %v2032 = vand.u32 %v2031, 4294901760
  %v2033 = vsub.f32 %v2031, %v2032
  %v2034 = vand.u32 %v2033, 4294901760
  %2035 = vmatprep.subr.mxu0 %v2034
  %v2036 = vand.u32 %v125, 4294901760
  %v2037 = vsub.f32 %v125, %v2036
  %v2038 = vand.u32 %v2037, 4294901760
  %v2039 = vsub.f32 %v2037, %v2038
  %v2040 = vand.u32 %v2039, 4294901760
  %2041 = vmatpush1.msra.mxu0 %v2040
  %v2042 = vand.u32 %v128, 4294901760
  %v2043 = vsub.f32 %v128, %v2042
  %v2044 = vand.u32 %v2043, 4294901760
  %v2045 = vsub.f32 %v2043, %v2044
  %v2046 = vand.u32 %v2045, 4294901760
  %2047 = vmatprep.subr.mxu0 %v2046
  %v2048 = vand.u32 %v127, 4294901760
  %v2049 = vsub.f32 %v127, %v2048
  %v2050 = vand.u32 %v2049, 4294901760
  %v2051 = vsub.f32 %v2049, %v2050
  %v2052 = vand.u32 %v2051, 4294901760
  %2053 = vmatpush1.msra.mxu0 %v2052
  %v2054 = vand.u32 %v130, 4294901760
  %v2055 = vsub.f32 %v130, %v2054
  %v2056 = vand.u32 %v2055, 4294901760
  %v2057 = vsub.f32 %v2055, %v2056
  %v2058 = vand.u32 %v2057, 4294901760
  %2059 = vmatprep.subr.mxu0 %v2058
  %v2060 = vand.u32 %v129, 4294901760
  %v2061 = vsub.f32 %v129, %v2060
  %v2062 = vand.u32 %v2061, 4294901760
  %v2063 = vsub.f32 %v2061, %v2062
  %v2064 = vand.u32 %v2063, 4294901760
  %2065 = vmatpush1.msra.mxu0 %v2064
  %v2066 = vand.u32 %v132, 4294901760
  %v2067 = vsub.f32 %v132, %v2066
  %v2068 = vand.u32 %v2067, 4294901760
  %v2069 = vsub.f32 %v2067, %v2068
  %v2070 = vand.u32 %v2069, 4294901760
  %2071 = vmatprep.subr.mxu0 %v2070
  %v2072 = vand.u32 %v131, 4294901760
  %v2073 = vsub.f32 %v131, %v2072
  %v2074 = vand.u32 %v2073, 4294901760
  %v2075 = vsub.f32 %v2073, %v2074
  %v2076 = vand.u32 %v2075, 4294901760
  %2077 = vmatpush1.msra.mxu0 %v2076
  %v2078 = vand.u32 %v134, 4294901760
  %v2079 = vsub.f32 %v134, %v2078
  %v2080 = vand.u32 %v2079, 4294901760
  %v2081 = vsub.f32 %v2079, %v2080
  %v2082 = vand.u32 %v2081, 4294901760
  %2083 = vmatprep.subr.mxu0 %v2082
  %v2084 = vand.u32 %v133, 4294901760
  %v2085 = vsub.f32 %v133, %v2084
  %v2086 = vand.u32 %v2085, 4294901760
  %v2087 = vsub.f32 %v2085, %v2086
  %v2088 = vand.u32 %v2087, 4294901760
  %2089 = vmatpush1.msra.mxu0 %v2088
  %v2090 = vand.u32 %v136, 4294901760
  %v2091 = vsub.f32 %v136, %v2090
  %v2092 = vand.u32 %v2091, 4294901760
  %v2093 = vsub.f32 %v2091, %v2092
  %v2094 = vand.u32 %v2093, 4294901760
  %2095 = vmatprep.subr.mxu0 %v2094
  %v2096 = vand.u32 %v135, 4294901760
  %v2097 = vsub.f32 %v135, %v2096
  %v2098 = vand.u32 %v2097, 4294901760
  %v2099 = vsub.f32 %v2097, %v2098
  %v2100 = vand.u32 %v2099, 4294901760
  %2101 = vmatpush1.msra.mxu0 %v2100
  %v2102 = vand.u32 %v138, 4294901760
  %v2103 = vsub.f32 %v138, %v2102
  %v2104 = vand.u32 %v2103, 4294901760
  %v2105 = vsub.f32 %v2103, %v2104
  %v2106 = vand.u32 %v2105, 4294901760
  %2107 = vmatprep.subr.mxu0 %v2106
  %v2108 = vand.u32 %v137, 4294901760
  %v2109 = vsub.f32 %v137, %v2108
  %v2110 = vand.u32 %v2109, 4294901760
  %v2111 = vsub.f32 %v2109, %v2110
  %v2112 = vand.u32 %v2111, 4294901760
  %2113 = vmatpush1.msra.mxu0 %v2112
  %v2114 = vand.u32 %v140, 4294901760
  %v2115 = vsub.f32 %v140, %v2114
  %v2116 = vand.u32 %v2115, 4294901760
  %v2117 = vsub.f32 %v2115, %v2116
  %v2118 = vand.u32 %v2117, 4294901760
  %2119 = vmatprep.subr.mxu0 %v2118
  %v2120 = vand.u32 %v139, 4294901760
  %v2121 = vsub.f32 %v139, %v2120
  %v2122 = vand.u32 %v2121, 4294901760
  %v2123 = vsub.f32 %v2121, %v2122
  %v2124 = vand.u32 %v2123, 4294901760
  %2125 = vmatpush1.msra.mxu0 %v2124
  %v2126 = vand.u32 %v287, 4294901760
  %2127 = vmatprep.mubr.f32.mxu0 %v2126
  %v2128 = vand.u32 %v285, 4294901760
  %2129 = vmatmul.mubr.f32.gmra.mrb[0].mxu0 %v2128
  %v2130 = vpop.f32.mrb[0].mxu0
  %v2131 = vadd.f32 %v1738, %v2130
  %v2132 = vpop.f32.mrb[0].mxu0
  %v2133 = vadd.f32 %v1740, %v2132
  %2134 = vdwg.mxu0
  %v2135 = vand.u32 %v78, 4294901760
  %v2136 = vsub.f32 %v78, %v2135
  %2137 = vmatprep.subr.mxu0 %v2136
  %v2138 = vand.u32 %v77, 4294901760
  %v2139 = vsub.f32 %v77, %v2138
  %2140 = vmatpush1.msra.mxu0 %v2139
  %v2141 = vand.u32 %v80, 4294901760
  %v2142 = vsub.f32 %v80, %v2141
  %2143 = vmatprep.subr.mxu0 %v2142
  %v2144 = vand.u32 %v79, 4294901760
  %v2145 = vsub.f32 %v79, %v2144
  %2146 = vmatpush1.msra.mxu0 %v2145
  %v2147 = vand.u32 %v82, 4294901760
  %v2148 = vsub.f32 %v82, %v2147
  %2149 = vmatprep.subr.mxu0 %v2148
  %v2150 = vand.u32 %v81, 4294901760
  %v2151 = vsub.f32 %v81, %v2150
  %2152 = vmatpush1.msra.mxu0 %v2151
  %v2153 = vand.u32 %v84, 4294901760
  %v2154 = vsub.f32 %v84, %v2153
  %2155 = vmatprep.subr.mxu0 %v2154
  %v2156 = vand.u32 %v83, 4294901760
  %v2157 = vsub.f32 %v83, %v2156
  %2158 = vmatpush1.msra.mxu0 %v2157
  %v2159 = vand.u32 %v86, 4294901760
  %v2160 = vsub.f32 %v86, %v2159
  %2161 = vmatprep.subr.mxu0 %v2160
  %v2162 = vand.u32 %v85, 4294901760
  %v2163 = vsub.f32 %v85, %v2162
  %2164 = vmatpush1.msra.mxu0 %v2163
  %v2165 = vand.u32 %v88, 4294901760
  %v2166 = vsub.f32 %v88, %v2165
  %2167 = vmatprep.subr.mxu0 %v2166
  %v2168 = vand.u32 %v87, 4294901760
  %v2169 = vsub.f32 %v87, %v2168
  %2170 = vmatpush1.msra.mxu0 %v2169
  %v2171 = vand.u32 %v90, 4294901760
  %v2172 = vsub.f32 %v90, %v2171
  %2173 = vmatprep.subr.mxu0 %v2172
  %v2174 = vand.u32 %v89, 4294901760
  %v2175 = vsub.f32 %v89, %v2174
  %2176 = vmatpush1.msra.mxu0 %v2175
  %v2177 = vand.u32 %v92, 4294901760
  %v2178 = vsub.f32 %v92, %v2177
  %2179 = vmatprep.subr.mxu0 %v2178
  %v2180 = vand.u32 %v91, 4294901760
  %v2181 = vsub.f32 %v91, %v2180
  %2182 = vmatpush1.msra.mxu0 %v2181
  %v2183 = vand.u32 %v94, 4294901760
  %v2184 = vsub.f32 %v94, %v2183
  %2185 = vmatprep.subr.mxu0 %v2184
  %v2186 = vand.u32 %v93, 4294901760
  %v2187 = vsub.f32 %v93, %v2186
  %2188 = vmatpush1.msra.mxu0 %v2187
  %v2189 = vand.u32 %v96, 4294901760
  %v2190 = vsub.f32 %v96, %v2189
  %2191 = vmatprep.subr.mxu0 %v2190
  %v2192 = vand.u32 %v95, 4294901760
  %v2193 = vsub.f32 %v95, %v2192
  %2194 = vmatpush1.msra.mxu0 %v2193
  %v2195 = vand.u32 %v98, 4294901760
  %v2196 = vsub.f32 %v98, %v2195
  %2197 = vmatprep.subr.mxu0 %v2196
  %v2198 = vand.u32 %v97, 4294901760
  %v2199 = vsub.f32 %v97, %v2198
  %2200 = vmatpush1.msra.mxu0 %v2199
  %v2201 = vand.u32 %v100, 4294901760
  %v2202 = vsub.f32 %v100, %v2201
  %2203 = vmatprep.subr.mxu0 %v2202
  %v2204 = vand.u32 %v99, 4294901760
  %v2205 = vsub.f32 %v99, %v2204
  %2206 = vmatpush1.msra.mxu0 %v2205
  %v2207 = vand.u32 %v102, 4294901760
  %v2208 = vsub.f32 %v102, %v2207
  %2209 = vmatprep.subr.mxu0 %v2208
  %v2210 = vand.u32 %v101, 4294901760
  %v2211 = vsub.f32 %v101, %v2210
  %2212 = vmatpush1.msra.mxu0 %v2211
  %v2213 = vand.u32 %v104, 4294901760
  %v2214 = vsub.f32 %v104, %v2213
  %2215 = vmatprep.subr.mxu0 %v2214
  %v2216 = vand.u32 %v103, 4294901760
  %v2217 = vsub.f32 %v103, %v2216
  %2218 = vmatpush1.msra.mxu0 %v2217
  %v2219 = vand.u32 %v106, 4294901760
  %v2220 = vsub.f32 %v106, %v2219
  %2221 = vmatprep.subr.mxu0 %v2220
  %v2222 = vand.u32 %v105, 4294901760
  %v2223 = vsub.f32 %v105, %v2222
  %2224 = vmatpush1.msra.mxu0 %v2223
  %v2225 = vand.u32 %v108, 4294901760
  %v2226 = vsub.f32 %v108, %v2225
  %2227 = vmatprep.subr.mxu0 %v2226
  %v2228 = vand.u32 %v107, 4294901760
  %v2229 = vsub.f32 %v107, %v2228
  %2230 = vmatpush1.msra.mxu0 %v2229
  %v2231 = vand.u32 %v110, 4294901760
  %v2232 = vsub.f32 %v110, %v2231
  %2233 = vmatprep.subr.mxu0 %v2232
  %v2234 = vand.u32 %v109, 4294901760
  %v2235 = vsub.f32 %v109, %v2234
  %2236 = vmatpush1.msra.mxu0 %v2235
  %v2237 = vand.u32 %v112, 4294901760
  %v2238 = vsub.f32 %v112, %v2237
  %2239 = vmatprep.subr.mxu0 %v2238
  %v2240 = vand.u32 %v111, 4294901760
  %v2241 = vsub.f32 %v111, %v2240
  %2242 = vmatpush1.msra.mxu0 %v2241
  %v2243 = vand.u32 %v114, 4294901760
  %v2244 = vsub.f32 %v114, %v2243
  %2245 = vmatprep.subr.mxu0 %v2244
  %v2246 = vand.u32 %v113, 4294901760
  %v2247 = vsub.f32 %v113, %v2246
  %2248 = vmatpush1.msra.mxu0 %v2247
  %v2249 = vand.u32 %v116, 4294901760
  %v2250 = vsub.f32 %v116, %v2249
  %2251 = vmatprep.subr.mxu0 %v2250
  %v2252 = vand.u32 %v115, 4294901760
  %v2253 = vsub.f32 %v115, %v2252
  %2254 = vmatpush1.msra.mxu0 %v2253
  %v2255 = vand.u32 %v118, 4294901760
  %v2256 = vsub.f32 %v118, %v2255
  %2257 = vmatprep.subr.mxu0 %v2256
  %v2258 = vand.u32 %v117, 4294901760
  %v2259 = vsub.f32 %v117, %v2258
  %2260 = vmatpush1.msra.mxu0 %v2259
  %v2261 = vand.u32 %v120, 4294901760
  %v2262 = vsub.f32 %v120, %v2261
  %2263 = vmatprep.subr.mxu0 %v2262
  %v2264 = vand.u32 %v119, 4294901760
  %v2265 = vsub.f32 %v119, %v2264
  %2266 = vmatpush1.msra.mxu0 %v2265
  %v2267 = vand.u32 %v122, 4294901760
  %v2268 = vsub.f32 %v122, %v2267
  %2269 = vmatprep.subr.mxu0 %v2268
  %v2270 = vand.u32 %v121, 4294901760
  %v2271 = vsub.f32 %v121, %v2270
  %2272 = vmatpush1.msra.mxu0 %v2271
  %v2273 = vand.u32 %v124, 4294901760
  %v2274 = vsub.f32 %v124, %v2273
  %2275 = vmatprep.subr.mxu0 %v2274
  %v2276 = vand.u32 %v123, 4294901760
  %v2277 = vsub.f32 %v123, %v2276
  %2278 = vmatpush1.msra.mxu0 %v2277
  %v2279 = vand.u32 %v126, 4294901760
  %v2280 = vsub.f32 %v126, %v2279
  %2281 = vmatprep.subr.mxu0 %v2280
  %v2282 = vand.u32 %v125, 4294901760
  %v2283 = vsub.f32 %v125, %v2282
  %2284 = vmatpush1.msra.mxu0 %v2283
  %v2285 = vand.u32 %v128, 4294901760
  %v2286 = vsub.f32 %v128, %v2285
  %2287 = vmatprep.subr.mxu0 %v2286
  %v2288 = vand.u32 %v127, 4294901760
  %v2289 = vsub.f32 %v127, %v2288
  %2290 = vmatpush1.msra.mxu0 %v2289
  %v2291 = vand.u32 %v130, 4294901760
  %v2292 = vsub.f32 %v130, %v2291
  %2293 = vmatprep.subr.mxu0 %v2292
  %v2294 = vand.u32 %v129, 4294901760
  %v2295 = vsub.f32 %v129, %v2294
  %2296 = vmatpush1.msra.mxu0 %v2295
  %v2297 = vand.u32 %v132, 4294901760
  %v2298 = vsub.f32 %v132, %v2297
  %2299 = vmatprep.subr.mxu0 %v2298
  %v2300 = vand.u32 %v131, 4294901760
  %v2301 = vsub.f32 %v131, %v2300
  %2302 = vmatpush1.msra.mxu0 %v2301
  %v2303 = vand.u32 %v134, 4294901760
  %v2304 = vsub.f32 %v134, %v2303
  %2305 = vmatprep.subr.mxu0 %v2304
  %v2306 = vand.u32 %v133, 4294901760
  %v2307 = vsub.f32 %v133, %v2306
  %2308 = vmatpush1.msra.mxu0 %v2307
  %v2309 = vand.u32 %v136, 4294901760
  %v2310 = vsub.f32 %v136, %v2309
  %2311 = vmatprep.subr.mxu0 %v2310
  %v2312 = vand.u32 %v135, 4294901760
  %v2313 = vsub.f32 %v135, %v2312
  %2314 = vmatpush1.msra.mxu0 %v2313
  %v2315 = vand.u32 %v138, 4294901760
  %v2316 = vsub.f32 %v138, %v2315
  %2317 = vmatprep.subr.mxu0 %v2316
  %v2318 = vand.u32 %v137, 4294901760
  %v2319 = vsub.f32 %v137, %v2318
  %2320 = vmatpush1.msra.mxu0 %v2319
  %v2321 = vand.u32 %v140, 4294901760
  %v2322 = vsub.f32 %v140, %v2321
  %2323 = vmatprep.subr.mxu0 %v2322
  %v2324 = vand.u32 %v139, 4294901760
  %v2325 = vsub.f32 %v139, %v2324
  %2326 = vmatpush1.msra.mxu0 %v2325
  %v2327 = vand.u32 %v287, 4294901760
  %v2328 = vsub.f32 %v287, %v2327
  %2329 = vmatprep.mubr.f32.mxu0 %v2328
  %v2330 = vand.u32 %v285, 4294901760
  %v2331 = vsub.f32 %v285, %v2330
  %2332 = vmatmul.mubr.f32.gmra.mrb[0].mxu0 %v2331
  %v2333 = vpop.f32.mrb[0].mxu0
  %v2334 = vadd.f32 %v2131, %v2333
  %v2335 = vpop.f32.mrb[0].mxu0
  %v2336 = vadd.f32 %v2133, %v2335
  %2337 = vdwg.mxu0
  %v2338 = vand.u32 %v78, 4294901760
  %2339 = vmatprep.subr.mxu0 %v2338
  %v2340 = vand.u32 %v77, 4294901760
  %2341 = vmatpush1.msra.mxu0 %v2340
  %v2342 = vand.u32 %v80, 4294901760
  %2343 = vmatprep.subr.mxu0 %v2342
  %v2344 = vand.u32 %v79, 4294901760
  %2345 = vmatpush1.msra.mxu0 %v2344
  %v2346 = vand.u32 %v82, 4294901760
  %2347 = vmatprep.subr.mxu0 %v2346
  %v2348 = vand.u32 %v81, 4294901760
  %2349 = vmatpush1.msra.mxu0 %v2348
  %v2350 = vand.u32 %v84, 4294901760
  %2351 = vmatprep.subr.mxu0 %v2350
  %v2352 = vand.u32 %v83, 4294901760
  %2353 = vmatpush1.msra.mxu0 %v2352
  %v2354 = vand.u32 %v86, 4294901760
  %2355 = vmatprep.subr.mxu0 %v2354
  %v2356 = vand.u32 %v85, 4294901760
  %2357 = vmatpush1.msra.mxu0 %v2356
  %v2358 = vand.u32 %v88, 4294901760
  %2359 = vmatprep.subr.mxu0 %v2358
  %v2360 = vand.u32 %v87, 4294901760
  %2361 = vmatpush1.msra.mxu0 %v2360
  %v2362 = vand.u32 %v90, 4294901760
  %2363 = vmatprep.subr.mxu0 %v2362
  %v2364 = vand.u32 %v89, 4294901760
  %2365 = vmatpush1.msra.mxu0 %v2364
  %v2366 = vand.u32 %v92, 4294901760
  %2367 = vmatprep.subr.mxu0 %v2366
  %v2368 = vand.u32 %v91, 4294901760
  %2369 = vmatpush1.msra.mxu0 %v2368
  %v2370 = vand.u32 %v94, 4294901760
  %2371 = vmatprep.subr.mxu0 %v2370
  %v2372 = vand.u32 %v93, 4294901760
  %2373 = vmatpush1.msra.mxu0 %v2372
  %v2374 = vand.u32 %v96, 4294901760
  %2375 = vmatprep.subr.mxu0 %v2374
  %v2376 = vand.u32 %v95, 4294901760
  %2377 = vmatpush1.msra.mxu0 %v2376
  %v2378 = vand.u32 %v98, 4294901760
  %2379 = vmatprep.subr.mxu0 %v2378
  %v2380 = vand.u32 %v97, 4294901760
  %2381 = vmatpush1.msra.mxu0 %v2380
  %v2382 = vand.u32 %v100, 4294901760
  %2383 = vmatprep.subr.mxu0 %v2382
  %v2384 = vand.u32 %v99, 4294901760
  %2385 = vmatpush1.msra.mxu0 %v2384
  %v2386 = vand.u32 %v102, 4294901760
  %2387 = vmatprep.subr.mxu0 %v2386
  %v2388 = vand.u32 %v101, 4294901760
  %2389 = vmatpush1.msra.mxu0 %v2388
  %v2390 = vand.u32 %v104, 4294901760
  %2391 = vmatprep.subr.mxu0 %v2390
  %v2392 = vand.u32 %v103, 4294901760
  %2393 = vmatpush1.msra.mxu0 %v2392
  %v2394 = vand.u32 %v106, 4294901760
  %2395 = vmatprep.subr.mxu0 %v2394
  %v2396 = vand.u32 %v105, 4294901760
  %2397 = vmatpush1.msra.mxu0 %v2396
  %v2398 = vand.u32 %v108, 4294901760
  %2399 = vmatprep.subr.mxu0 %v2398
  %v2400 = vand.u32 %v107, 4294901760
  %2401 = vmatpush1.msra.mxu0 %v2400
  %v2402 = vand.u32 %v110, 4294901760
  %2403 = vmatprep.subr.mxu0 %v2402
  %v2404 = vand.u32 %v109, 4294901760
  %2405 = vmatpush1.msra.mxu0 %v2404
  %v2406 = vand.u32 %v112, 4294901760
  %2407 = vmatprep.subr.mxu0 %v2406
  %v2408 = vand.u32 %v111, 4294901760
  %2409 = vmatpush1.msra.mxu0 %v2408
  %v2410 = vand.u32 %v114, 4294901760
  %2411 = vmatprep.subr.mxu0 %v2410
  %v2412 = vand.u32 %v113, 4294901760
  %2413 = vmatpush1.msra.mxu0 %v2412
  %v2414 = vand.u32 %v116, 4294901760
  %2415 = vmatprep.subr.mxu0 %v2414
  %v2416 = vand.u32 %v115, 4294901760
  %2417 = vmatpush1.msra.mxu0 %v2416
  %v2418 = vand.u32 %v118, 4294901760
  %2419 = vmatprep.subr.mxu0 %v2418
  %v2420 = vand.u32 %v117, 4294901760
  %2421 = vmatpush1.msra.mxu0 %v2420
  %v2422 = vand.u32 %v120, 4294901760
  %2423 = vmatprep.subr.mxu0 %v2422
  %v2424 = vand.u32 %v119, 4294901760
  %2425 = vmatpush1.msra.mxu0 %v2424
  %v2426 = vand.u32 %v122, 4294901760
  %2427 = vmatprep.subr.mxu0 %v2426
  %v2428 = vand.u32 %v121, 4294901760
  %2429 = vmatpush1.msra.mxu0 %v2428
  %v2430 = vand.u32 %v124, 4294901760
  %2431 = vmatprep.subr.mxu0 %v2430
  %v2432 = vand.u32 %v123, 4294901760
  %2433 = vmatpush1.msra.mxu0 %v2432
  %v2434 = vand.u32 %v126, 4294901760
  %2435 = vmatprep.subr.mxu0 %v2434
  %v2436 = vand.u32 %v125, 4294901760
  %2437 = vmatpush1.msra.mxu0 %v2436
  %v2438 = vand.u32 %v128, 4294901760
  %2439 = vmatprep.subr.mxu0 %v2438
  %v2440 = vand.u32 %v127, 4294901760
  %2441 = vmatpush1.msra.mxu0 %v2440
  %v2442 = vand.u32 %v130, 4294901760
  %2443 = vmatprep.subr.mxu0 %v2442
  %v2444 = vand.u32 %v129, 4294901760
  %2445 = vmatpush1.msra.mxu0 %v2444
  %v2446 = vand.u32 %v132, 4294901760
  %2447 = vmatprep.subr.mxu0 %v2446
  %v2448 = vand.u32 %v131, 4294901760
  %2449 = vmatpush1.msra.mxu0 %v2448
  %v2450 = vand.u32 %v134, 4294901760
  %2451 = vmatprep.subr.mxu0 %v2450
  %v2452 = vand.u32 %v133, 4294901760
  %2453 = vmatpush1.msra.mxu0 %v2452
  %v2454 = vand.u32 %v136, 4294901760
  %2455 = vmatprep.subr.mxu0 %v2454
  %v2456 = vand.u32 %v135, 4294901760
  %2457 = vmatpush1.msra.mxu0 %v2456
  %v2458 = vand.u32 %v138, 4294901760
  %2459 = vmatprep.subr.mxu0 %v2458
  %v2460 = vand.u32 %v137, 4294901760
  %2461 = vmatpush1.msra.mxu0 %v2460
  %v2462 = vand.u32 %v140, 4294901760
  %2463 = vmatprep.subr.mxu0 %v2462
  %v2464 = vand.u32 %v139, 4294901760
  %2465 = vmatpush1.msra.mxu0 %v2464
  %v2466 = vand.u32 %v287, 4294901760
  %v2467 = vsub.f32 %v287, %v2466
  %v2468 = vand.u32 %v2467, 4294901760
  %2469 = vmatprep.mubr.f32.mxu0 %v2468
  %v2470 = vand.u32 %v285, 4294901760
  %v2471 = vsub.f32 %v285, %v2470
  %v2472 = vand.u32 %v2471, 4294901760
  %2473 = vmatmul.mubr.f32.gmra.mrb[0].mxu0 %v2472
  %v2474 = vpop.f32.mrb[0].mxu0
  %v2475 = vadd.f32 %v2334, %v2474
  %v2476 = vpop.f32.mrb[0].mxu0
  %v2477 = vadd.f32 %v2336, %v2476
  %2478 = vdwg.mxu0
  %v2479 = vand.u32 %v78, 4294901760
  %v2480 = vsub.f32 %v78, %v2479
  %v2481 = vand.u32 %v2480, 4294901760
  %2482 = vmatprep.subr.mxu0 %v2481
  %v2483 = vand.u32 %v77, 4294901760
  %v2484 = vsub.f32 %v77, %v2483
  %v2485 = vand.u32 %v2484, 4294901760
  %2486 = vmatpush1.msra.mxu0 %v2485
  %v2487 = vand.u32 %v80, 4294901760
  %v2488 = vsub.f32 %v80, %v2487
  %v2489 = vand.u32 %v2488, 4294901760
  %2490 = vmatprep.subr.mxu0 %v2489
  %v2491 = vand.u32 %v79, 4294901760
  %v2492 = vsub.f32 %v79, %v2491
  %v2493 = vand.u32 %v2492, 4294901760
  %2494 = vmatpush1.msra.mxu0 %v2493
  %v2495 = vand.u32 %v82, 4294901760
  %v2496 = vsub.f32 %v82, %v2495
  %v2497 = vand.u32 %v2496, 4294901760
  %2498 = vmatprep.subr.mxu0 %v2497
  %v2499 = vand.u32 %v81, 4294901760
  %v2500 = vsub.f32 %v81, %v2499
  %v2501 = vand.u32 %v2500, 4294901760
  %2502 = vmatpush1.msra.mxu0 %v2501
  %v2503 = vand.u32 %v84, 4294901760
  %v2504 = vsub.f32 %v84, %v2503
  %v2505 = vand.u32 %v2504, 4294901760
  %2506 = vmatprep.subr.mxu0 %v2505
  %v2507 = vand.u32 %v83, 4294901760
  %v2508 = vsub.f32 %v83, %v2507
  %v2509 = vand.u32 %v2508, 4294901760
  %2510 = vmatpush1.msra.mxu0 %v2509
  %v2511 = vand.u32 %v86, 4294901760
  %v2512 = vsub.f32 %v86, %v2511
  %v2513 = vand.u32 %v2512, 4294901760
  %2514 = vmatprep.subr.mxu0 %v2513
  %v2515 = vand.u32 %v85, 4294901760
  %v2516 = vsub.f32 %v85, %v2515
  %v2517 = vand.u32 %v2516, 4294901760
  %2518 = vmatpush1.msra.mxu0 %v2517
  %v2519 = vand.u32 %v88, 4294901760
  %v2520 = vsub.f32 %v88, %v2519
  %v2521 = vand.u32 %v2520, 4294901760
  %2522 = vmatprep.subr.mxu0 %v2521
  %v2523 = vand.u32 %v87, 4294901760
  %v2524 = vsub.f32 %v87, %v2523
  %v2525 = vand.u32 %v2524, 4294901760
  %2526 = vmatpush1.msra.mxu0 %v2525
  %v2527 = vand.u32 %v90, 4294901760
  %v2528 = vsub.f32 %v90, %v2527
  %v2529 = vand.u32 %v2528, 4294901760
  %2530 = vmatprep.subr.mxu0 %v2529
  %v2531 = vand.u32 %v89, 4294901760
  %v2532 = vsub.f32 %v89, %v2531
  %v2533 = vand.u32 %v2532, 4294901760
  %2534 = vmatpush1.msra.mxu0 %v2533
  %v2535 = vand.u32 %v92, 4294901760
  %v2536 = vsub.f32 %v92, %v2535
  %v2537 = vand.u32 %v2536, 4294901760
  %2538 = vmatprep.subr.mxu0 %v2537
  %v2539 = vand.u32 %v91, 4294901760
  %v2540 = vsub.f32 %v91, %v2539
  %v2541 = vand.u32 %v2540, 4294901760
  %2542 = vmatpush1.msra.mxu0 %v2541
  %v2543 = vand.u32 %v94, 4294901760
  %v2544 = vsub.f32 %v94, %v2543
  %v2545 = vand.u32 %v2544, 4294901760
  %2546 = vmatprep.subr.mxu0 %v2545
  %v2547 = vand.u32 %v93, 4294901760
  %v2548 = vsub.f32 %v93, %v2547
  %v2549 = vand.u32 %v2548, 4294901760
  %2550 = vmatpush1.msra.mxu0 %v2549
  %v2551 = vand.u32 %v96, 4294901760
  %v2552 = vsub.f32 %v96, %v2551
  %v2553 = vand.u32 %v2552, 4294901760
  %2554 = vmatprep.subr.mxu0 %v2553
  %v2555 = vand.u32 %v95, 4294901760
  %v2556 = vsub.f32 %v95, %v2555
  %v2557 = vand.u32 %v2556, 4294901760
  %2558 = vmatpush1.msra.mxu0 %v2557
  %v2559 = vand.u32 %v98, 4294901760
  %v2560 = vsub.f32 %v98, %v2559
  %v2561 = vand.u32 %v2560, 4294901760
  %2562 = vmatprep.subr.mxu0 %v2561
  %v2563 = vand.u32 %v97, 4294901760
  %v2564 = vsub.f32 %v97, %v2563
  %v2565 = vand.u32 %v2564, 4294901760
  %2566 = vmatpush1.msra.mxu0 %v2565
  %v2567 = vand.u32 %v100, 4294901760
  %v2568 = vsub.f32 %v100, %v2567
  %v2569 = vand.u32 %v2568, 4294901760
  %2570 = vmatprep.subr.mxu0 %v2569
  %v2571 = vand.u32 %v99, 4294901760
  %v2572 = vsub.f32 %v99, %v2571
  %v2573 = vand.u32 %v2572, 4294901760
  %2574 = vmatpush1.msra.mxu0 %v2573
  %v2575 = vand.u32 %v102, 4294901760
  %v2576 = vsub.f32 %v102, %v2575
  %v2577 = vand.u32 %v2576, 4294901760
  %2578 = vmatprep.subr.mxu0 %v2577
  %v2579 = vand.u32 %v101, 4294901760
  %v2580 = vsub.f32 %v101, %v2579
  %v2581 = vand.u32 %v2580, 4294901760
  %2582 = vmatpush1.msra.mxu0 %v2581
  %v2583 = vand.u32 %v104, 4294901760
  %v2584 = vsub.f32 %v104, %v2583
  %v2585 = vand.u32 %v2584, 4294901760
  %2586 = vmatprep.subr.mxu0 %v2585
  %v2587 = vand.u32 %v103, 4294901760
  %v2588 = vsub.f32 %v103, %v2587
  %v2589 = vand.u32 %v2588, 4294901760
  %2590 = vmatpush1.msra.mxu0 %v2589
  %v2591 = vand.u32 %v106, 4294901760
  %v2592 = vsub.f32 %v106, %v2591
  %v2593 = vand.u32 %v2592, 4294901760
  %2594 = vmatprep.subr.mxu0 %v2593
  %v2595 = vand.u32 %v105, 4294901760
  %v2596 = vsub.f32 %v105, %v2595
  %v2597 = vand.u32 %v2596, 4294901760
  %2598 = vmatpush1.msra.mxu0 %v2597
  %v2599 = vand.u32 %v108, 4294901760
  %v2600 = vsub.f32 %v108, %v2599
  %v2601 = vand.u32 %v2600, 4294901760
  %2602 = vmatprep.subr.mxu0 %v2601
  %v2603 = vand.u32 %v107, 4294901760
  %v2604 = vsub.f32 %v107, %v2603
  %v2605 = vand.u32 %v2604, 4294901760
  %2606 = vmatpush1.msra.mxu0 %v2605
  %v2607 = vand.u32 %v110, 4294901760
  %v2608 = vsub.f32 %v110, %v2607
  %v2609 = vand.u32 %v2608, 4294901760
  %2610 = vmatprep.subr.mxu0 %v2609
  %v2611 = vand.u32 %v109, 4294901760
  %v2612 = vsub.f32 %v109, %v2611
  %v2613 = vand.u32 %v2612, 4294901760
  %2614 = vmatpush1.msra.mxu0 %v2613
  %v2615 = vand.u32 %v112, 4294901760
  %v2616 = vsub.f32 %v112, %v2615
  %v2617 = vand.u32 %v2616, 4294901760
  %2618 = vmatprep.subr.mxu0 %v2617
  %v2619 = vand.u32 %v111, 4294901760
  %v2620 = vsub.f32 %v111, %v2619
  %v2621 = vand.u32 %v2620, 4294901760
  %2622 = vmatpush1.msra.mxu0 %v2621
  %v2623 = vand.u32 %v114, 4294901760
  %v2624 = vsub.f32 %v114, %v2623
  %v2625 = vand.u32 %v2624, 4294901760
  %2626 = vmatprep.subr.mxu0 %v2625
  %v2627 = vand.u32 %v113, 4294901760
  %v2628 = vsub.f32 %v113, %v2627
  %v2629 = vand.u32 %v2628, 4294901760
  %2630 = vmatpush1.msra.mxu0 %v2629
  %v2631 = vand.u32 %v116, 4294901760
  %v2632 = vsub.f32 %v116, %v2631
  %v2633 = vand.u32 %v2632, 4294901760
  %2634 = vmatprep.subr.mxu0 %v2633
  %v2635 = vand.u32 %v115, 4294901760
  %v2636 = vsub.f32 %v115, %v2635
  %v2637 = vand.u32 %v2636, 4294901760
  %2638 = vmatpush1.msra.mxu0 %v2637
  %v2639 = vand.u32 %v118, 4294901760
  %v2640 = vsub.f32 %v118, %v2639
  %v2641 = vand.u32 %v2640, 4294901760
  %2642 = vmatprep.subr.mxu0 %v2641
  %v2643 = vand.u32 %v117, 4294901760
  %v2644 = vsub.f32 %v117, %v2643
  %v2645 = vand.u32 %v2644, 4294901760
  %2646 = vmatpush1.msra.mxu0 %v2645
  %v2647 = vand.u32 %v120, 4294901760
  %v2648 = vsub.f32 %v120, %v2647
  %v2649 = vand.u32 %v2648, 4294901760
  %2650 = vmatprep.subr.mxu0 %v2649
  %v2651 = vand.u32 %v119, 4294901760
  %v2652 = vsub.f32 %v119, %v2651
  %v2653 = vand.u32 %v2652, 4294901760
  %2654 = vmatpush1.msra.mxu0 %v2653
  %v2655 = vand.u32 %v122, 4294901760
  %v2656 = vsub.f32 %v122, %v2655
  %v2657 = vand.u32 %v2656, 4294901760
  %2658 = vmatprep.subr.mxu0 %v2657
  %v2659 = vand.u32 %v121, 4294901760
  %v2660 = vsub.f32 %v121, %v2659
  %v2661 = vand.u32 %v2660, 4294901760
  %2662 = vmatpush1.msra.mxu0 %v2661
  %v2663 = vand.u32 %v124, 4294901760
  %v2664 = vsub.f32 %v124, %v2663
  %v2665 = vand.u32 %v2664, 4294901760
  %2666 = vmatprep.subr.mxu0 %v2665
  %v2667 = vand.u32 %v123, 4294901760
  %v2668 = vsub.f32 %v123, %v2667
  %v2669 = vand.u32 %v2668, 4294901760
  %2670 = vmatpush1.msra.mxu0 %v2669
  %v2671 = vand.u32 %v126, 4294901760
  %v2672 = vsub.f32 %v126, %v2671
  %v2673 = vand.u32 %v2672, 4294901760
  %2674 = vmatprep.subr.mxu0 %v2673
  %v2675 = vand.u32 %v125, 4294901760
  %v2676 = vsub.f32 %v125, %v2675
  %v2677 = vand.u32 %v2676, 4294901760
  %2678 = vmatpush1.msra.mxu0 %v2677
  %v2679 = vand.u32 %v128, 4294901760
  %v2680 = vsub.f32 %v128, %v2679
  %v2681 = vand.u32 %v2680, 4294901760
  %2682 = vmatprep.subr.mxu0 %v2681
  %v2683 = vand.u32 %v127, 4294901760
  %v2684 = vsub.f32 %v127, %v2683
  %v2685 = vand.u32 %v2684, 4294901760
  %2686 = vmatpush1.msra.mxu0 %v2685
  %v2687 = vand.u32 %v130, 4294901760
  %v2688 = vsub.f32 %v130, %v2687
  %v2689 = vand.u32 %v2688, 4294901760
  %2690 = vmatprep.subr.mxu0 %v2689
  %v2691 = vand.u32 %v129, 4294901760
  %v2692 = vsub.f32 %v129, %v2691
  %v2693 = vand.u32 %v2692, 4294901760
  %2694 = vmatpush1.msra.mxu0 %v2693
  %v2695 = vand.u32 %v132, 4294901760
  %v2696 = vsub.f32 %v132, %v2695
  %v2697 = vand.u32 %v2696, 4294901760
  %2698 = vmatprep.subr.mxu0 %v2697
  %v2699 = vand.u32 %v131, 4294901760
  %v2700 = vsub.f32 %v131, %v2699
  %v2701 = vand.u32 %v2700, 4294901760
  %2702 = vmatpush1.msra.mxu0 %v2701
  %v2703 = vand.u32 %v134, 4294901760
  %v2704 = vsub.f32 %v134, %v2703
  %v2705 = vand.u32 %v2704, 4294901760
  %2706 = vmatprep.subr.mxu0 %v2705
  %v2707 = vand.u32 %v133, 4294901760
  %v2708 = vsub.f32 %v133, %v2707
  %v2709 = vand.u32 %v2708, 4294901760
  %2710 = vmatpush1.msra.mxu0 %v2709
  %v2711 = vand.u32 %v136, 4294901760
  %v2712 = vsub.f32 %v136, %v2711
  %v2713 = vand.u32 %v2712, 4294901760
  %2714 = vmatprep.subr.mxu0 %v2713
  %v2715 = vand.u32 %v135, 4294901760
  %v2716 = vsub.f32 %v135, %v2715
  %v2717 = vand.u32 %v2716, 4294901760
  %2718 = vmatpush1.msra.mxu0 %v2717
  %v2719 = vand.u32 %v138, 4294901760
  %v2720 = vsub.f32 %v138, %v2719
  %v2721 = vand.u32 %v2720, 4294901760
  %2722 = vmatprep.subr.mxu0 %v2721
  %v2723 = vand.u32 %v137, 4294901760
  %v2724 = vsub.f32 %v137, %v2723
  %v2725 = vand.u32 %v2724, 4294901760
  %2726 = vmatpush1.msra.mxu0 %v2725
  %v2727 = vand.u32 %v140, 4294901760
  %v2728 = vsub.f32 %v140, %v2727
  %v2729 = vand.u32 %v2728, 4294901760
  %2730 = vmatprep.subr.mxu0 %v2729
  %v2731 = vand.u32 %v139, 4294901760
  %v2732 = vsub.f32 %v139, %v2731
  %v2733 = vand.u32 %v2732, 4294901760
  %2734 = vmatpush1.msra.mxu0 %v2733
  %v2735 = vand.u32 %v287, 4294901760
  %2736 = vmatprep.mubr.f32.mxu0 %v2735
  %v2737 = vand.u32 %v285, 4294901760
  %2738 = vmatmul.mubr.f32.gmra.mrb[0].mxu0 %v2737
  %v2739 = vpop.f32.mrb[0].mxu0
  %v2740 = vadd.f32 %v2475, %v2739
  %v2741 = vpop.f32.mrb[0].mxu0
  %v2742 = vadd.f32 %v2477, %v2741
  %2743 = vdwg.mxu0
  %v2744 = vand.u32 %v78, 4294901760
  %2745 = vmatprep.subr.mxu0 %v2744
  %v2746 = vand.u32 %v77, 4294901760
  %2747 = vmatpush1.msra.mxu0 %v2746
  %v2748 = vand.u32 %v80, 4294901760
  %2749 = vmatprep.subr.mxu0 %v2748
  %v2750 = vand.u32 %v79, 4294901760
  %2751 = vmatpush1.msra.mxu0 %v2750
  %v2752 = vand.u32 %v82, 4294901760
  %2753 = vmatprep.subr.mxu0 %v2752
  %v2754 = vand.u32 %v81, 4294901760
  %2755 = vmatpush1.msra.mxu0 %v2754
  %v2756 = vand.u32 %v84, 4294901760
  %2757 = vmatprep.subr.mxu0 %v2756
  %v2758 = vand.u32 %v83, 4294901760
  %2759 = vmatpush1.msra.mxu0 %v2758
  %v2760 = vand.u32 %v86, 4294901760
  %2761 = vmatprep.subr.mxu0 %v2760
  %v2762 = vand.u32 %v85, 4294901760
  %2763 = vmatpush1.msra.mxu0 %v2762
  %v2764 = vand.u32 %v88, 4294901760
  %2765 = vmatprep.subr.mxu0 %v2764
  %v2766 = vand.u32 %v87, 4294901760
  %2767 = vmatpush1.msra.mxu0 %v2766
  %v2768 = vand.u32 %v90, 4294901760
  %2769 = vmatprep.subr.mxu0 %v2768
  %v2770 = vand.u32 %v89, 4294901760
  %2771 = vmatpush1.msra.mxu0 %v2770
  %v2772 = vand.u32 %v92, 4294901760
  %2773 = vmatprep.subr.mxu0 %v2772
  %v2774 = vand.u32 %v91, 4294901760
  %2775 = vmatpush1.msra.mxu0 %v2774
  %v2776 = vand.u32 %v94, 4294901760
  %2777 = vmatprep.subr.mxu0 %v2776
  %v2778 = vand.u32 %v93, 4294901760
  %2779 = vmatpush1.msra.mxu0 %v2778
  %v2780 = vand.u32 %v96, 4294901760
  %2781 = vmatprep.subr.mxu0 %v2780
  %v2782 = vand.u32 %v95, 4294901760
  %2783 = vmatpush1.msra.mxu0 %v2782
  %v2784 = vand.u32 %v98, 4294901760
  %2785 = vmatprep.subr.mxu0 %v2784
  %v2786 = vand.u32 %v97, 4294901760
  %2787 = vmatpush1.msra.mxu0 %v2786
  %v2788 = vand.u32 %v100, 4294901760
  %2789 = vmatprep.subr.mxu0 %v2788
  %v2790 = vand.u32 %v99, 4294901760
  %2791 = vmatpush1.msra.mxu0 %v2790
  %v2792 = vand.u32 %v102, 4294901760
  %2793 = vmatprep.subr.mxu0 %v2792
  %v2794 = vand.u32 %v101, 4294901760
  %2795 = vmatpush1.msra.mxu0 %v2794
  %v2796 = vand.u32 %v104, 4294901760
  %2797 = vmatprep.subr.mxu0 %v2796
  %v2798 = vand.u32 %v103, 4294901760
  %2799 = vmatpush1.msra.mxu0 %v2798
  %v2800 = vand.u32 %v106, 4294901760
  %2801 = vmatprep.subr.mxu0 %v2800
  %v2802 = vand.u32 %v105, 4294901760
  %2803 = vmatpush1.msra.mxu0 %v2802
  %v2804 = vand.u32 %v108, 4294901760
  %2805 = vmatprep.subr.mxu0 %v2804
  %v2806 = vand.u32 %v107, 4294901760
  %2807 = vmatpush1.msra.mxu0 %v2806
  %v2808 = vand.u32 %v110, 4294901760
  %2809 = vmatprep.subr.mxu0 %v2808
  %v2810 = vand.u32 %v109, 4294901760
  %2811 = vmatpush1.msra.mxu0 %v2810
  %v2812 = vand.u32 %v112, 4294901760
  %2813 = vmatprep.subr.mxu0 %v2812
  %v2814 = vand.u32 %v111, 4294901760
  %2815 = vmatpush1.msra.mxu0 %v2814
  %v2816 = vand.u32 %v114, 4294901760
  %2817 = vmatprep.subr.mxu0 %v2816
  %v2818 = vand.u32 %v113, 4294901760
  %2819 = vmatpush1.msra.mxu0 %v2818
  %v2820 = vand.u32 %v116, 4294901760
  %2821 = vmatprep.subr.mxu0 %v2820
  %v2822 = vand.u32 %v115, 4294901760
  %2823 = vmatpush1.msra.mxu0 %v2822
  %v2824 = vand.u32 %v118, 4294901760
  %2825 = vmatprep.subr.mxu0 %v2824
  %v2826 = vand.u32 %v117, 4294901760
  %2827 = vmatpush1.msra.mxu0 %v2826
  %v2828 = vand.u32 %v120, 4294901760
  %2829 = vmatprep.subr.mxu0 %v2828
  %v2830 = vand.u32 %v119, 4294901760
  %2831 = vmatpush1.msra.mxu0 %v2830
  %v2832 = vand.u32 %v122, 4294901760
  %2833 = vmatprep.subr.mxu0 %v2832
  %v2834 = vand.u32 %v121, 4294901760
  %2835 = vmatpush1.msra.mxu0 %v2834
  %v2836 = vand.u32 %v124, 4294901760
  %2837 = vmatprep.subr.mxu0 %v2836
  %v2838 = vand.u32 %v123, 4294901760
  %2839 = vmatpush1.msra.mxu0 %v2838
  %v2840 = vand.u32 %v126, 4294901760
  %2841 = vmatprep.subr.mxu0 %v2840
  %v2842 = vand.u32 %v125, 4294901760
  %2843 = vmatpush1.msra.mxu0 %v2842
  %v2844 = vand.u32 %v128, 4294901760
  %2845 = vmatprep.subr.mxu0 %v2844
  %v2846 = vand.u32 %v127, 4294901760
  %2847 = vmatpush1.msra.mxu0 %v2846
  %v2848 = vand.u32 %v130, 4294901760
  %2849 = vmatprep.subr.mxu0 %v2848
  %v2850 = vand.u32 %v129, 4294901760
  %2851 = vmatpush1.msra.mxu0 %v2850
  %v2852 = vand.u32 %v132, 4294901760
  %2853 = vmatprep.subr.mxu0 %v2852
  %v2854 = vand.u32 %v131, 4294901760
  %2855 = vmatpush1.msra.mxu0 %v2854
  %v2856 = vand.u32 %v134, 4294901760
  %2857 = vmatprep.subr.mxu0 %v2856
  %v2858 = vand.u32 %v133, 4294901760
  %2859 = vmatpush1.msra.mxu0 %v2858
  %v2860 = vand.u32 %v136, 4294901760
  %2861 = vmatprep.subr.mxu0 %v2860
  %v2862 = vand.u32 %v135, 4294901760
  %2863 = vmatpush1.msra.mxu0 %v2862
  %v2864 = vand.u32 %v138, 4294901760
  %2865 = vmatprep.subr.mxu0 %v2864
  %v2866 = vand.u32 %v137, 4294901760
  %2867 = vmatpush1.msra.mxu0 %v2866
  %v2868 = vand.u32 %v140, 4294901760
  %2869 = vmatprep.subr.mxu0 %v2868
  %v2870 = vand.u32 %v139, 4294901760
  %2871 = vmatpush1.msra.mxu0 %v2870
  %v2872 = vand.u32 %v287, 4294901760
  %2873 = vmatprep.mubr.f32.mxu0 %v2872
  %v2874 = vand.u32 %v285, 4294901760
  %2875 = vmatmul.mubr.f32.gmra.mrb[0].mxu0 %v2874
  %v2876 = vpop.f32.mrb[0].mxu0
  %v2877 = vadd.f32 %v2740, %v2876
  %v2878 = vpop.f32.mrb[0].mxu0
  %v2879 = vadd.f32 %v2742, %v2878
  %2880 = vdwg.mxu0
  %v2881 = vand.u32 %v142, 4294901760
  %2882 = vmatprep.subr.mxu0 %v2881
  %v2883 = vand.u32 %v141, 4294901760
  %2884 = vmatpush1.msra.mxu0 %v2883
  %v2885 = vand.u32 %v144, 4294901760
  %2886 = vmatprep.subr.mxu0 %v2885
  %v2887 = vand.u32 %v143, 4294901760
  %2888 = vmatpush1.msra.mxu0 %v2887
  %v2889 = vand.u32 %v146, 4294901760
  %2890 = vmatprep.subr.mxu0 %v2889
  %v2891 = vand.u32 %v145, 4294901760
  %2892 = vmatpush1.msra.mxu0 %v2891
  %v2893 = vand.u32 %v148, 4294901760
  %2894 = vmatprep.subr.mxu0 %v2893
  %v2895 = vand.u32 %v147, 4294901760
  %2896 = vmatpush1.msra.mxu0 %v2895
  %v2897 = vand.u32 %v150, 4294901760
  %2898 = vmatprep.subr.mxu0 %v2897
  %v2899 = vand.u32 %v149, 4294901760
  %2900 = vmatpush1.msra.mxu0 %v2899
  %v2901 = vand.u32 %v152, 4294901760
  %2902 = vmatprep.subr.mxu0 %v2901
  %v2903 = vand.u32 %v151, 4294901760
  %2904 = vmatpush1.msra.mxu0 %v2903
  %v2905 = vand.u32 %v154, 4294901760
  %2906 = vmatprep.subr.mxu0 %v2905
  %v2907 = vand.u32 %v153, 4294901760
  %2908 = vmatpush1.msra.mxu0 %v2907
  %v2909 = vand.u32 %v156, 4294901760
  %2910 = vmatprep.subr.mxu0 %v2909
  %v2911 = vand.u32 %v155, 4294901760
  %2912 = vmatpush1.msra.mxu0 %v2911
  %v2913 = vand.u32 %v158, 4294901760
  %2914 = vmatprep.subr.mxu0 %v2913
  %v2915 = vand.u32 %v157, 4294901760
  %2916 = vmatpush1.msra.mxu0 %v2915
  %v2917 = vand.u32 %v160, 4294901760
  %2918 = vmatprep.subr.mxu0 %v2917
  %v2919 = vand.u32 %v159, 4294901760
  %2920 = vmatpush1.msra.mxu0 %v2919
  %v2921 = vand.u32 %v162, 4294901760
  %2922 = vmatprep.subr.mxu0 %v2921
  %v2923 = vand.u32 %v161, 4294901760
  %2924 = vmatpush1.msra.mxu0 %v2923
  %v2925 = vand.u32 %v164, 4294901760
  %2926 = vmatprep.subr.mxu0 %v2925
  %v2927 = vand.u32 %v163, 4294901760
  %2928 = vmatpush1.msra.mxu0 %v2927
  %v2929 = vand.u32 %v166, 4294901760
  %2930 = vmatprep.subr.mxu0 %v2929
  %v2931 = vand.u32 %v165, 4294901760
  %2932 = vmatpush1.msra.mxu0 %v2931
  %v2933 = vand.u32 %v168, 4294901760
  %2934 = vmatprep.subr.mxu0 %v2933
  %v2935 = vand.u32 %v167, 4294901760
  %2936 = vmatpush1.msra.mxu0 %v2935
  %v2937 = vand.u32 %v170, 4294901760
  %2938 = vmatprep.subr.mxu0 %v2937
  %v2939 = vand.u32 %v169, 4294901760
  %2940 = vmatpush1.msra.mxu0 %v2939
  %v2941 = vand.u32 %v172, 4294901760
  %2942 = vmatprep.subr.mxu0 %v2941
  %v2943 = vand.u32 %v171, 4294901760
  %2944 = vmatpush1.msra.mxu0 %v2943
  %v2945 = vand.u32 %v174, 4294901760
  %2946 = vmatprep.subr.mxu0 %v2945
  %v2947 = vand.u32 %v173, 4294901760
  %2948 = vmatpush1.msra.mxu0 %v2947
  %v2949 = vand.u32 %v176, 4294901760
  %2950 = vmatprep.subr.mxu0 %v2949
  %v2951 = vand.u32 %v175, 4294901760
  %2952 = vmatpush1.msra.mxu0 %v2951
  %v2953 = vand.u32 %v178, 4294901760
  %2954 = vmatprep.subr.mxu0 %v2953
  %v2955 = vand.u32 %v177, 4294901760
  %2956 = vmatpush1.msra.mxu0 %v2955
  %v2957 = vand.u32 %v180, 4294901760
  %2958 = vmatprep.subr.mxu0 %v2957
  %v2959 = vand.u32 %v179, 4294901760
  %2960 = vmatpush1.msra.mxu0 %v2959
  %v2961 = vand.u32 %v182, 4294901760
  %2962 = vmatprep.subr.mxu0 %v2961
  %v2963 = vand.u32 %v181, 4294901760
  %2964 = vmatpush1.msra.mxu0 %v2963
  %v2965 = vand.u32 %v184, 4294901760
  %2966 = vmatprep.subr.mxu0 %v2965
  %v2967 = vand.u32 %v183, 4294901760
  %2968 = vmatpush1.msra.mxu0 %v2967
  %v2969 = vand.u32 %v186, 4294901760
  %2970 = vmatprep.subr.mxu0 %v2969
  %v2971 = vand.u32 %v185, 4294901760
  %2972 = vmatpush1.msra.mxu0 %v2971
  %v2973 = vand.u32 %v188, 4294901760
  %2974 = vmatprep.subr.mxu0 %v2973
  %v2975 = vand.u32 %v187, 4294901760
  %2976 = vmatpush1.msra.mxu0 %v2975
  %v2977 = vand.u32 %v190, 4294901760
  %2978 = vmatprep.subr.mxu0 %v2977
  %v2979 = vand.u32 %v189, 4294901760
  %2980 = vmatpush1.msra.mxu0 %v2979
  %v2981 = vand.u32 %v192, 4294901760
  %2982 = vmatprep.subr.mxu0 %v2981
  %v2983 = vand.u32 %v191, 4294901760
  %2984 = vmatpush1.msra.mxu0 %v2983
  %v2985 = vand.u32 %v194, 4294901760
  %2986 = vmatprep.subr.mxu0 %v2985
  %v2987 = vand.u32 %v193, 4294901760
  %2988 = vmatpush1.msra.mxu0 %v2987
  %v2989 = vand.u32 %v196, 4294901760
  %2990 = vmatprep.subr.mxu0 %v2989
  %v2991 = vand.u32 %v195, 4294901760
  %2992 = vmatpush1.msra.mxu0 %v2991
  %v2993 = vand.u32 %v198, 4294901760
  %2994 = vmatprep.subr.mxu0 %v2993
  %v2995 = vand.u32 %v197, 4294901760
  %2996 = vmatpush1.msra.mxu0 %v2995
  %v2997 = vand.u32 %v200, 4294901760
  %2998 = vmatprep.subr.mxu0 %v2997
  %v2999 = vand.u32 %v199, 4294901760
  %3000 = vmatpush1.msra.mxu0 %v2999
  %v3001 = vand.u32 %v202, 4294901760
  %3002 = vmatprep.subr.mxu0 %v3001
  %v3003 = vand.u32 %v201, 4294901760
  %3004 = vmatpush1.msra.mxu0 %v3003
  %v3005 = vand.u32 %v204, 4294901760
  %3006 = vmatprep.subr.mxu0 %v3005
  %v3007 = vand.u32 %v203, 4294901760
  %3008 = vmatpush1.msra.mxu0 %v3007
  %v3009 = vand.u32 %v303, 4294901760
  %v3010 = vsub.f32 %v303, %v3009
  %v3011 = vand.u32 %v3010, 4294901760
  %v3012 = vsub.f32 %v3010, %v3011
  %v3013 = vand.u32 %v3012, 4294901760
  %3014 = vmatprep.mubr.f32.mxu0 %v3013
  %v3015 = vand.u32 %v295, 4294901760
  %v3016 = vsub.f32 %v295, %v3015
  %v3017 = vand.u32 %v3016, 4294901760
  %v3018 = vsub.f32 %v3016, %v3017
  %v3019 = vand.u32 %v3018, 4294901760
  %3020 = vmatmul.mubr.f32.gmra.mrb[0].mxu0 %v3019
  %v3021 = vpop.f32.mrb[0].mxu0
  %v3022 = vadd.f32 %v2877, %v3021
  %v3023 = vpop.f32.mrb[0].mxu0
  %v3024 = vadd.f32 %v2879, %v3023
  %3025 = vdwg.mxu0
  %v3026 = vand.u32 %v142, 4294901760
  %v3027 = vsub.f32 %v142, %v3026
  %v3028 = vand.u32 %v3027, 4294901760
  %v3029 = vsub.f32 %v3027, %v3028
  %v3030 = vand.u32 %v3029, 4294901760
  %3031 = vmatprep.subr.mxu0 %v3030
  %v3032 = vand.u32 %v141, 4294901760
  %v3033 = vsub.f32 %v141, %v3032
  %v3034 = vand.u32 %v3033, 4294901760
  %v3035 = vsub.f32 %v3033, %v3034
  %v3036 = vand.u32 %v3035, 4294901760
  %3037 = vmatpush1.msra.mxu0 %v3036
  %v3038 = vand.u32 %v144, 4294901760
  %v3039 = vsub.f32 %v144, %v3038
  %v3040 = vand.u32 %v3039, 4294901760
  %v3041 = vsub.f32 %v3039, %v3040
  %v3042 = vand.u32 %v3041, 4294901760
  %3043 = vmatprep.subr.mxu0 %v3042
  %v3044 = vand.u32 %v143, 4294901760
  %v3045 = vsub.f32 %v143, %v3044
  %v3046 = vand.u32 %v3045, 4294901760
  %v3047 = vsub.f32 %v3045, %v3046
  %v3048 = vand.u32 %v3047, 4294901760
  %3049 = vmatpush1.msra.mxu0 %v3048
  %v3050 = vand.u32 %v146, 4294901760
  %v3051 = vsub.f32 %v146, %v3050
  %v3052 = vand.u32 %v3051, 4294901760
  %v3053 = vsub.f32 %v3051, %v3052
  %v3054 = vand.u32 %v3053, 4294901760
  %3055 = vmatprep.subr.mxu0 %v3054
  %v3056 = vand.u32 %v145, 4294901760
  %v3057 = vsub.f32 %v145, %v3056
  %v3058 = vand.u32 %v3057, 4294901760
  %v3059 = vsub.f32 %v3057, %v3058
  %v3060 = vand.u32 %v3059, 4294901760
  %3061 = vmatpush1.msra.mxu0 %v3060
  %v3062 = vand.u32 %v148, 4294901760
  %v3063 = vsub.f32 %v148, %v3062
  %v3064 = vand.u32 %v3063, 4294901760
  %v3065 = vsub.f32 %v3063, %v3064
  %v3066 = vand.u32 %v3065, 4294901760
  %3067 = vmatprep.subr.mxu0 %v3066
  %v3068 = vand.u32 %v147, 4294901760
  %v3069 = vsub.f32 %v147, %v3068
  %v3070 = vand.u32 %v3069, 4294901760
  %v3071 = vsub.f32 %v3069, %v3070
  %v3072 = vand.u32 %v3071, 4294901760
  %3073 = vmatpush1.msra.mxu0 %v3072
  %v3074 = vand.u32 %v150, 4294901760
  %v3075 = vsub.f32 %v150, %v3074
  %v3076 = vand.u32 %v3075, 4294901760
  %v3077 = vsub.f32 %v3075, %v3076
  %v3078 = vand.u32 %v3077, 4294901760
  %3079 = vmatprep.subr.mxu0 %v3078
  %v3080 = vand.u32 %v149, 4294901760
  %v3081 = vsub.f32 %v149, %v3080
  %v3082 = vand.u32 %v3081, 4294901760
  %v3083 = vsub.f32 %v3081, %v3082
  %v3084 = vand.u32 %v3083, 4294901760
  %3085 = vmatpush1.msra.mxu0 %v3084
  %v3086 = vand.u32 %v152, 4294901760
  %v3087 = vsub.f32 %v152, %v3086
  %v3088 = vand.u32 %v3087, 4294901760
  %v3089 = vsub.f32 %v3087, %v3088
  %v3090 = vand.u32 %v3089, 4294901760
  %3091 = vmatprep.subr.mxu0 %v3090
  %v3092 = vand.u32 %v151, 4294901760
  %v3093 = vsub.f32 %v151, %v3092
  %v3094 = vand.u32 %v3093, 4294901760
  %v3095 = vsub.f32 %v3093, %v3094
  %v3096 = vand.u32 %v3095, 4294901760
  %3097 = vmatpush1.msra.mxu0 %v3096
  %v3098 = vand.u32 %v154, 4294901760
  %v3099 = vsub.f32 %v154, %v3098
  %v3100 = vand.u32 %v3099, 4294901760
  %v3101 = vsub.f32 %v3099, %v3100
  %v3102 = vand.u32 %v3101, 4294901760
  %3103 = vmatprep.subr.mxu0 %v3102
  %v3104 = vand.u32 %v153, 4294901760
  %v3105 = vsub.f32 %v153, %v3104
  %v3106 = vand.u32 %v3105, 4294901760
  %v3107 = vsub.f32 %v3105, %v3106
  %v3108 = vand.u32 %v3107, 4294901760
  %3109 = vmatpush1.msra.mxu0 %v3108
  %v3110 = vand.u32 %v156, 4294901760
  %v3111 = vsub.f32 %v156, %v3110
  %v3112 = vand.u32 %v3111, 4294901760
  %v3113 = vsub.f32 %v3111, %v3112
  %v3114 = vand.u32 %v3113, 4294901760
  %3115 = vmatprep.subr.mxu0 %v3114
  %v3116 = vand.u32 %v155, 4294901760
  %v3117 = vsub.f32 %v155, %v3116
  %v3118 = vand.u32 %v3117, 4294901760
  %v3119 = vsub.f32 %v3117, %v3118
  %v3120 = vand.u32 %v3119, 4294901760
  %3121 = vmatpush1.msra.mxu0 %v3120
  %v3122 = vand.u32 %v158, 4294901760
  %v3123 = vsub.f32 %v158, %v3122
  %v3124 = vand.u32 %v3123, 4294901760
  %v3125 = vsub.f32 %v3123, %v3124
  %v3126 = vand.u32 %v3125, 4294901760
  %3127 = vmatprep.subr.mxu0 %v3126
  %v3128 = vand.u32 %v157, 4294901760
  %v3129 = vsub.f32 %v157, %v3128
  %v3130 = vand.u32 %v3129, 4294901760
  %v3131 = vsub.f32 %v3129, %v3130
  %v3132 = vand.u32 %v3131, 4294901760
  %3133 = vmatpush1.msra.mxu0 %v3132
  %v3134 = vand.u32 %v160, 4294901760
  %v3135 = vsub.f32 %v160, %v3134
  %v3136 = vand.u32 %v3135, 4294901760
  %v3137 = vsub.f32 %v3135, %v3136
  %v3138 = vand.u32 %v3137, 4294901760
  %3139 = vmatprep.subr.mxu0 %v3138
  %v3140 = vand.u32 %v159, 4294901760
  %v3141 = vsub.f32 %v159, %v3140
  %v3142 = vand.u32 %v3141, 4294901760
  %v3143 = vsub.f32 %v3141, %v3142
  %v3144 = vand.u32 %v3143, 4294901760
  %3145 = vmatpush1.msra.mxu0 %v3144
  %v3146 = vand.u32 %v162, 4294901760
  %v3147 = vsub.f32 %v162, %v3146
  %v3148 = vand.u32 %v3147, 4294901760
  %v3149 = vsub.f32 %v3147, %v3148
  %v3150 = vand.u32 %v3149, 4294901760
  %3151 = vmatprep.subr.mxu0 %v3150
  %v3152 = vand.u32 %v161, 4294901760
  %v3153 = vsub.f32 %v161, %v3152
  %v3154 = vand.u32 %v3153, 4294901760
  %v3155 = vsub.f32 %v3153, %v3154
  %v3156 = vand.u32 %v3155, 4294901760
  %3157 = vmatpush1.msra.mxu0 %v3156
  %v3158 = vand.u32 %v164, 4294901760
  %v3159 = vsub.f32 %v164, %v3158
  %v3160 = vand.u32 %v3159, 4294901760
  %v3161 = vsub.f32 %v3159, %v3160
  %v3162 = vand.u32 %v3161, 4294901760
  %3163 = vmatprep.subr.mxu0 %v3162
  %v3164 = vand.u32 %v163, 4294901760
  %v3165 = vsub.f32 %v163, %v3164
  %v3166 = vand.u32 %v3165, 4294901760
  %v3167 = vsub.f32 %v3165, %v3166
  %v3168 = vand.u32 %v3167, 4294901760
  %3169 = vmatpush1.msra.mxu0 %v3168
  %v3170 = vand.u32 %v166, 4294901760
  %v3171 = vsub.f32 %v166, %v3170
  %v3172 = vand.u32 %v3171, 4294901760
  %v3173 = vsub.f32 %v3171, %v3172
  %v3174 = vand.u32 %v3173, 4294901760
  %3175 = vmatprep.subr.mxu0 %v3174
  %v3176 = vand.u32 %v165, 4294901760
  %v3177 = vsub.f32 %v165, %v3176
  %v3178 = vand.u32 %v3177, 4294901760
  %v3179 = vsub.f32 %v3177, %v3178
  %v3180 = vand.u32 %v3179, 4294901760
  %3181 = vmatpush1.msra.mxu0 %v3180
  %v3182 = vand.u32 %v168, 4294901760
  %v3183 = vsub.f32 %v168, %v3182
  %v3184 = vand.u32 %v3183, 4294901760
  %v3185 = vsub.f32 %v3183, %v3184
  %v3186 = vand.u32 %v3185, 4294901760
  %3187 = vmatprep.subr.mxu0 %v3186
  %v3188 = vand.u32 %v167, 4294901760
  %v3189 = vsub.f32 %v167, %v3188
  %v3190 = vand.u32 %v3189, 4294901760
  %v3191 = vsub.f32 %v3189, %v3190
  %v3192 = vand.u32 %v3191, 4294901760
  %3193 = vmatpush1.msra.mxu0 %v3192
  %v3194 = vand.u32 %v170, 4294901760
  %v3195 = vsub.f32 %v170, %v3194
  %v3196 = vand.u32 %v3195, 4294901760
  %v3197 = vsub.f32 %v3195, %v3196
  %v3198 = vand.u32 %v3197, 4294901760
  %3199 = vmatprep.subr.mxu0 %v3198
  %v3200 = vand.u32 %v169, 4294901760
  %v3201 = vsub.f32 %v169, %v3200
  %v3202 = vand.u32 %v3201, 4294901760
  %v3203 = vsub.f32 %v3201, %v3202
  %v3204 = vand.u32 %v3203, 4294901760
  %3205 = vmatpush1.msra.mxu0 %v3204
  %v3206 = vand.u32 %v172, 4294901760
  %v3207 = vsub.f32 %v172, %v3206
  %v3208 = vand.u32 %v3207, 4294901760
  %v3209 = vsub.f32 %v3207, %v3208
  %v3210 = vand.u32 %v3209, 4294901760
  %3211 = vmatprep.subr.mxu0 %v3210
  %v3212 = vand.u32 %v171, 4294901760
  %v3213 = vsub.f32 %v171, %v3212
  %v3214 = vand.u32 %v3213, 4294901760
  %v3215 = vsub.f32 %v3213, %v3214
  %v3216 = vand.u32 %v3215, 4294901760
  %3217 = vmatpush1.msra.mxu0 %v3216
  %v3218 = vand.u32 %v174, 4294901760
  %v3219 = vsub.f32 %v174, %v3218
  %v3220 = vand.u32 %v3219, 4294901760
  %v3221 = vsub.f32 %v3219, %v3220
  %v3222 = vand.u32 %v3221, 4294901760
  %3223 = vmatprep.subr.mxu0 %v3222
  %v3224 = vand.u32 %v173, 4294901760
  %v3225 = vsub.f32 %v173, %v3224
  %v3226 = vand.u32 %v3225, 4294901760
  %v3227 = vsub.f32 %v3225, %v3226
  %v3228 = vand.u32 %v3227, 4294901760
  %3229 = vmatpush1.msra.mxu0 %v3228
  %v3230 = vand.u32 %v176, 4294901760
  %v3231 = vsub.f32 %v176, %v3230
  %v3232 = vand.u32 %v3231, 4294901760
  %v3233 = vsub.f32 %v3231, %v3232
  %v3234 = vand.u32 %v3233, 4294901760
  %3235 = vmatprep.subr.mxu0 %v3234
  %v3236 = vand.u32 %v175, 4294901760
  %v3237 = vsub.f32 %v175, %v3236
  %v3238 = vand.u32 %v3237, 4294901760
  %v3239 = vsub.f32 %v3237, %v3238
  %v3240 = vand.u32 %v3239, 4294901760
  %3241 = vmatpush1.msra.mxu0 %v3240
  %v3242 = vand.u32 %v178, 4294901760
  %v3243 = vsub.f32 %v178, %v3242
  %v3244 = vand.u32 %v3243, 4294901760
  %v3245 = vsub.f32 %v3243, %v3244
  %v3246 = vand.u32 %v3245, 4294901760
  %3247 = vmatprep.subr.mxu0 %v3246
  %v3248 = vand.u32 %v177, 4294901760
  %v3249 = vsub.f32 %v177, %v3248
  %v3250 = vand.u32 %v3249, 4294901760
  %v3251 = vsub.f32 %v3249, %v3250
  %v3252 = vand.u32 %v3251, 4294901760
  %3253 = vmatpush1.msra.mxu0 %v3252
  %v3254 = vand.u32 %v180, 4294901760
  %v3255 = vsub.f32 %v180, %v3254
  %v3256 = vand.u32 %v3255, 4294901760
  %v3257 = vsub.f32 %v3255, %v3256
  %v3258 = vand.u32 %v3257, 4294901760
  %3259 = vmatprep.subr.mxu0 %v3258
  %v3260 = vand.u32 %v179, 4294901760
  %v3261 = vsub.f32 %v179, %v3260
  %v3262 = vand.u32 %v3261, 4294901760
  %v3263 = vsub.f32 %v3261, %v3262
  %v3264 = vand.u32 %v3263, 4294901760
  %3265 = vmatpush1.msra.mxu0 %v3264
  %v3266 = vand.u32 %v182, 4294901760
  %v3267 = vsub.f32 %v182, %v3266
  %v3268 = vand.u32 %v3267, 4294901760
  %v3269 = vsub.f32 %v3267, %v3268
  %v3270 = vand.u32 %v3269, 4294901760
  %3271 = vmatprep.subr.mxu0 %v3270
  %v3272 = vand.u32 %v181, 4294901760
  %v3273 = vsub.f32 %v181, %v3272
  %v3274 = vand.u32 %v3273, 4294901760
  %v3275 = vsub.f32 %v3273, %v3274
  %v3276 = vand.u32 %v3275, 4294901760
  %3277 = vmatpush1.msra.mxu0 %v3276
  %v3278 = vand.u32 %v184, 4294901760
  %v3279 = vsub.f32 %v184, %v3278
  %v3280 = vand.u32 %v3279, 4294901760
  %v3281 = vsub.f32 %v3279, %v3280
  %v3282 = vand.u32 %v3281, 4294901760
  %3283 = vmatprep.subr.mxu0 %v3282
  %v3284 = vand.u32 %v183, 4294901760
  %v3285 = vsub.f32 %v183, %v3284
  %v3286 = vand.u32 %v3285, 4294901760
  %v3287 = vsub.f32 %v3285, %v3286
  %v3288 = vand.u32 %v3287, 4294901760
  %3289 = vmatpush1.msra.mxu0 %v3288
  %v3290 = vand.u32 %v186, 4294901760
  %v3291 = vsub.f32 %v186, %v3290
  %v3292 = vand.u32 %v3291, 4294901760
  %v3293 = vsub.f32 %v3291, %v3292
  %v3294 = vand.u32 %v3293, 4294901760
  %3295 = vmatprep.subr.mxu0 %v3294
  %v3296 = vand.u32 %v185, 4294901760
  %v3297 = vsub.f32 %v185, %v3296
  %v3298 = vand.u32 %v3297, 4294901760
  %v3299 = vsub.f32 %v3297, %v3298
  %v3300 = vand.u32 %v3299, 4294901760
  %3301 = vmatpush1.msra.mxu0 %v3300
  %v3302 = vand.u32 %v188, 4294901760
  %v3303 = vsub.f32 %v188, %v3302
  %v3304 = vand.u32 %v3303, 4294901760
  %v3305 = vsub.f32 %v3303, %v3304
  %v3306 = vand.u32 %v3305, 4294901760
  %3307 = vmatprep.subr.mxu0 %v3306
  %v3308 = vand.u32 %v187, 4294901760
  %v3309 = vsub.f32 %v187, %v3308
  %v3310 = vand.u32 %v3309, 4294901760
  %v3311 = vsub.f32 %v3309, %v3310
  %v3312 = vand.u32 %v3311, 4294901760
  %3313 = vmatpush1.msra.mxu0 %v3312
  %v3314 = vand.u32 %v190, 4294901760
  %v3315 = vsub.f32 %v190, %v3314
  %v3316 = vand.u32 %v3315, 4294901760
  %v3317 = vsub.f32 %v3315, %v3316
  %v3318 = vand.u32 %v3317, 4294901760
  %3319 = vmatprep.subr.mxu0 %v3318
  %v3320 = vand.u32 %v189, 4294901760
  %v3321 = vsub.f32 %v189, %v3320
  %v3322 = vand.u32 %v3321, 4294901760
  %v3323 = vsub.f32 %v3321, %v3322
  %v3324 = vand.u32 %v3323, 4294901760
  %3325 = vmatpush1.msra.mxu0 %v3324
  %v3326 = vand.u32 %v192, 4294901760
  %v3327 = vsub.f32 %v192, %v3326
  %v3328 = vand.u32 %v3327, 4294901760
  %v3329 = vsub.f32 %v3327, %v3328
  %v3330 = vand.u32 %v3329, 4294901760
  %3331 = vmatprep.subr.mxu0 %v3330
  %v3332 = vand.u32 %v191, 4294901760
  %v3333 = vsub.f32 %v191, %v3332
  %v3334 = vand.u32 %v3333, 4294901760
  %v3335 = vsub.f32 %v3333, %v3334
  %v3336 = vand.u32 %v3335, 4294901760
  %3337 = vmatpush1.msra.mxu0 %v3336
  %v3338 = vand.u32 %v194, 4294901760
  %v3339 = vsub.f32 %v194, %v3338
  %v3340 = vand.u32 %v3339, 4294901760
  %v3341 = vsub.f32 %v3339, %v3340
  %v3342 = vand.u32 %v3341, 4294901760
  %3343 = vmatprep.subr.mxu0 %v3342
  %v3344 = vand.u32 %v193, 4294901760
  %v3345 = vsub.f32 %v193, %v3344
  %v3346 = vand.u32 %v3345, 4294901760
  %v3347 = vsub.f32 %v3345, %v3346
  %v3348 = vand.u32 %v3347, 4294901760
  %3349 = vmatpush1.msra.mxu0 %v3348
  %v3350 = vand.u32 %v196, 4294901760
  %v3351 = vsub.f32 %v196, %v3350
  %v3352 = vand.u32 %v3351, 4294901760
  %v3353 = vsub.f32 %v3351, %v3352
  %v3354 = vand.u32 %v3353, 4294901760
  %3355 = vmatprep.subr.mxu0 %v3354
  %v3356 = vand.u32 %v195, 4294901760
  %v3357 = vsub.f32 %v195, %v3356
  %v3358 = vand.u32 %v3357, 4294901760
  %v3359 = vsub.f32 %v3357, %v3358
  %v3360 = vand.u32 %v3359, 4294901760
  %3361 = vmatpush1.msra.mxu0 %v3360
  %v3362 = vand.u32 %v198, 4294901760
  %v3363 = vsub.f32 %v198, %v3362
  %v3364 = vand.u32 %v3363, 4294901760
  %v3365 = vsub.f32 %v3363, %v3364
  %v3366 = vand.u32 %v3365, 4294901760
  %3367 = vmatprep.subr.mxu0 %v3366
  %v3368 = vand.u32 %v197, 4294901760
  %v3369 = vsub.f32 %v197, %v3368
  %v3370 = vand.u32 %v3369, 4294901760
  %v3371 = vsub.f32 %v3369, %v3370
  %v3372 = vand.u32 %v3371, 4294901760
  %3373 = vmatpush1.msra.mxu0 %v3372
  %v3374 = vand.u32 %v200, 4294901760
  %v3375 = vsub.f32 %v200, %v3374
  %v3376 = vand.u32 %v3375, 4294901760
  %v3377 = vsub.f32 %v3375, %v3376
  %v3378 = vand.u32 %v3377, 4294901760
  %3379 = vmatprep.subr.mxu0 %v3378
  %v3380 = vand.u32 %v199, 4294901760
  %v3381 = vsub.f32 %v199, %v3380
  %v3382 = vand.u32 %v3381, 4294901760
  %v3383 = vsub.f32 %v3381, %v3382
  %v3384 = vand.u32 %v3383, 4294901760
  %3385 = vmatpush1.msra.mxu0 %v3384
  %v3386 = vand.u32 %v202, 4294901760
  %v3387 = vsub.f32 %v202, %v3386
  %v3388 = vand.u32 %v3387, 4294901760
  %v3389 = vsub.f32 %v3387, %v3388
  %v3390 = vand.u32 %v3389, 4294901760
  %3391 = vmatprep.subr.mxu0 %v3390
  %v3392 = vand.u32 %v201, 4294901760
  %v3393 = vsub.f32 %v201, %v3392
  %v3394 = vand.u32 %v3393, 4294901760
  %v3395 = vsub.f32 %v3393, %v3394
  %v3396 = vand.u32 %v3395, 4294901760
  %3397 = vmatpush1.msra.mxu0 %v3396
  %v3398 = vand.u32 %v204, 4294901760
  %v3399 = vsub.f32 %v204, %v3398
  %v3400 = vand.u32 %v3399, 4294901760
  %v3401 = vsub.f32 %v3399, %v3400
  %v3402 = vand.u32 %v3401, 4294901760
  %3403 = vmatprep.subr.mxu0 %v3402
  %v3404 = vand.u32 %v203, 4294901760
  %v3405 = vsub.f32 %v203, %v3404
  %v3406 = vand.u32 %v3405, 4294901760
  %v3407 = vsub.f32 %v3405, %v3406
  %v3408 = vand.u32 %v3407, 4294901760
  %3409 = vmatpush1.msra.mxu0 %v3408
  %v3410 = vand.u32 %v303, 4294901760
  %3411 = vmatprep.mubr.f32.mxu0 %v3410
  %v3412 = vand.u32 %v295, 4294901760
  %3413 = vmatmul.mubr.f32.gmra.mrb[0].mxu0 %v3412
  %v3414 = vpop.f32.mrb[0].mxu0
  %v3415 = vadd.f32 %v3022, %v3414
  %v3416 = vpop.f32.mrb[0].mxu0
  %v3417 = vadd.f32 %v3024, %v3416
  %3418 = vdwg.mxu0
  %v3419 = vand.u32 %v142, 4294901760
  %v3420 = vsub.f32 %v142, %v3419
  %3421 = vmatprep.subr.mxu0 %v3420
  %v3422 = vand.u32 %v141, 4294901760
  %v3423 = vsub.f32 %v141, %v3422
  %3424 = vmatpush1.msra.mxu0 %v3423
  %v3425 = vand.u32 %v144, 4294901760
  %v3426 = vsub.f32 %v144, %v3425
  %3427 = vmatprep.subr.mxu0 %v3426
  %v3428 = vand.u32 %v143, 4294901760
  %v3429 = vsub.f32 %v143, %v3428
  %3430 = vmatpush1.msra.mxu0 %v3429
  %v3431 = vand.u32 %v146, 4294901760
  %v3432 = vsub.f32 %v146, %v3431
  %3433 = vmatprep.subr.mxu0 %v3432
  %v3434 = vand.u32 %v145, 4294901760
  %v3435 = vsub.f32 %v145, %v3434
  %3436 = vmatpush1.msra.mxu0 %v3435
  %v3437 = vand.u32 %v148, 4294901760
  %v3438 = vsub.f32 %v148, %v3437
  %3439 = vmatprep.subr.mxu0 %v3438
  %v3440 = vand.u32 %v147, 4294901760
  %v3441 = vsub.f32 %v147, %v3440
  %3442 = vmatpush1.msra.mxu0 %v3441
  %v3443 = vand.u32 %v150, 4294901760
  %v3444 = vsub.f32 %v150, %v3443
  %3445 = vmatprep.subr.mxu0 %v3444
  %v3446 = vand.u32 %v149, 4294901760
  %v3447 = vsub.f32 %v149, %v3446
  %3448 = vmatpush1.msra.mxu0 %v3447
  %v3449 = vand.u32 %v152, 4294901760
  %v3450 = vsub.f32 %v152, %v3449
  %3451 = vmatprep.subr.mxu0 %v3450
  %v3452 = vand.u32 %v151, 4294901760
  %v3453 = vsub.f32 %v151, %v3452
  %3454 = vmatpush1.msra.mxu0 %v3453
  %v3455 = vand.u32 %v154, 4294901760
  %v3456 = vsub.f32 %v154, %v3455
  %3457 = vmatprep.subr.mxu0 %v3456
  %v3458 = vand.u32 %v153, 4294901760
  %v3459 = vsub.f32 %v153, %v3458
  %3460 = vmatpush1.msra.mxu0 %v3459
  %v3461 = vand.u32 %v156, 4294901760
  %v3462 = vsub.f32 %v156, %v3461
  %3463 = vmatprep.subr.mxu0 %v3462
  %v3464 = vand.u32 %v155, 4294901760
  %v3465 = vsub.f32 %v155, %v3464
  %3466 = vmatpush1.msra.mxu0 %v3465
  %v3467 = vand.u32 %v158, 4294901760
  %v3468 = vsub.f32 %v158, %v3467
  %3469 = vmatprep.subr.mxu0 %v3468
  %v3470 = vand.u32 %v157, 4294901760
  %v3471 = vsub.f32 %v157, %v3470
  %3472 = vmatpush1.msra.mxu0 %v3471
  %v3473 = vand.u32 %v160, 4294901760
  %v3474 = vsub.f32 %v160, %v3473
  %3475 = vmatprep.subr.mxu0 %v3474
  %v3476 = vand.u32 %v159, 4294901760
  %v3477 = vsub.f32 %v159, %v3476
  %3478 = vmatpush1.msra.mxu0 %v3477
  %v3479 = vand.u32 %v162, 4294901760
  %v3480 = vsub.f32 %v162, %v3479
  %3481 = vmatprep.subr.mxu0 %v3480
  %v3482 = vand.u32 %v161, 4294901760
  %v3483 = vsub.f32 %v161, %v3482
  %3484 = vmatpush1.msra.mxu0 %v3483
  %v3485 = vand.u32 %v164, 4294901760
  %v3486 = vsub.f32 %v164, %v3485
  %3487 = vmatprep.subr.mxu0 %v3486
  %v3488 = vand.u32 %v163, 4294901760
  %v3489 = vsub.f32 %v163, %v3488
  %3490 = vmatpush1.msra.mxu0 %v3489
  %v3491 = vand.u32 %v166, 4294901760
  %v3492 = vsub.f32 %v166, %v3491
  %3493 = vmatprep.subr.mxu0 %v3492
  %v3494 = vand.u32 %v165, 4294901760
  %v3495 = vsub.f32 %v165, %v3494
  %3496 = vmatpush1.msra.mxu0 %v3495
  %v3497 = vand.u32 %v168, 4294901760
  %v3498 = vsub.f32 %v168, %v3497
  %3499 = vmatprep.subr.mxu0 %v3498
  %v3500 = vand.u32 %v167, 4294901760
  %v3501 = vsub.f32 %v167, %v3500
  %3502 = vmatpush1.msra.mxu0 %v3501
  %v3503 = vand.u32 %v170, 4294901760
  %v3504 = vsub.f32 %v170, %v3503
  %3505 = vmatprep.subr.mxu0 %v3504
  %v3506 = vand.u32 %v169, 4294901760
  %v3507 = vsub.f32 %v169, %v3506
  %3508 = vmatpush1.msra.mxu0 %v3507
  %v3509 = vand.u32 %v172, 4294901760
  %v3510 = vsub.f32 %v172, %v3509
  %3511 = vmatprep.subr.mxu0 %v3510
  %v3512 = vand.u32 %v171, 4294901760
  %v3513 = vsub.f32 %v171, %v3512
  %3514 = vmatpush1.msra.mxu0 %v3513
  %v3515 = vand.u32 %v174, 4294901760
  %v3516 = vsub.f32 %v174, %v3515
  %3517 = vmatprep.subr.mxu0 %v3516
  %v3518 = vand.u32 %v173, 4294901760
  %v3519 = vsub.f32 %v173, %v3518
  %3520 = vmatpush1.msra.mxu0 %v3519
  %v3521 = vand.u32 %v176, 4294901760
  %v3522 = vsub.f32 %v176, %v3521
  %3523 = vmatprep.subr.mxu0 %v3522
  %v3524 = vand.u32 %v175, 4294901760
  %v3525 = vsub.f32 %v175, %v3524
  %3526 = vmatpush1.msra.mxu0 %v3525
  %v3527 = vand.u32 %v178, 4294901760
  %v3528 = vsub.f32 %v178, %v3527
  %3529 = vmatprep.subr.mxu0 %v3528
  %v3530 = vand.u32 %v177, 4294901760
  %v3531 = vsub.f32 %v177, %v3530
  %3532 = vmatpush1.msra.mxu0 %v3531
  %v3533 = vand.u32 %v180, 4294901760
  %v3534 = vsub.f32 %v180, %v3533
  %3535 = vmatprep.subr.mxu0 %v3534
  %v3536 = vand.u32 %v179, 4294901760
  %v3537 = vsub.f32 %v179, %v3536
  %3538 = vmatpush1.msra.mxu0 %v3537
  %v3539 = vand.u32 %v182, 4294901760
  %v3540 = vsub.f32 %v182, %v3539
  %3541 = vmatprep.subr.mxu0 %v3540
  %v3542 = vand.u32 %v181, 4294901760
  %v3543 = vsub.f32 %v181, %v3542
  %3544 = vmatpush1.msra.mxu0 %v3543
  %v3545 = vand.u32 %v184, 4294901760
  %v3546 = vsub.f32 %v184, %v3545
  %3547 = vmatprep.subr.mxu0 %v3546
  %v3548 = vand.u32 %v183, 4294901760
  %v3549 = vsub.f32 %v183, %v3548
  %3550 = vmatpush1.msra.mxu0 %v3549
  %v3551 = vand.u32 %v186, 4294901760
  %v3552 = vsub.f32 %v186, %v3551
  %3553 = vmatprep.subr.mxu0 %v3552
  %v3554 = vand.u32 %v185, 4294901760
  %v3555 = vsub.f32 %v185, %v3554
  %3556 = vmatpush1.msra.mxu0 %v3555
  %v3557 = vand.u32 %v188, 4294901760
  %v3558 = vsub.f32 %v188, %v3557
  %3559 = vmatprep.subr.mxu0 %v3558
  %v3560 = vand.u32 %v187, 4294901760
  %v3561 = vsub.f32 %v187, %v3560
  %3562 = vmatpush1.msra.mxu0 %v3561
  %v3563 = vand.u32 %v190, 4294901760
  %v3564 = vsub.f32 %v190, %v3563
  %3565 = vmatprep.subr.mxu0 %v3564
  %v3566 = vand.u32 %v189, 4294901760
  %v3567 = vsub.f32 %v189, %v3566
  %3568 = vmatpush1.msra.mxu0 %v3567
  %v3569 = vand.u32 %v192, 4294901760
  %v3570 = vsub.f32 %v192, %v3569
  %3571 = vmatprep.subr.mxu0 %v3570
  %v3572 = vand.u32 %v191, 4294901760
  %v3573 = vsub.f32 %v191, %v3572
  %3574 = vmatpush1.msra.mxu0 %v3573
  %v3575 = vand.u32 %v194, 4294901760
  %v3576 = vsub.f32 %v194, %v3575
  %3577 = vmatprep.subr.mxu0 %v3576
  %v3578 = vand.u32 %v193, 4294901760
  %v3579 = vsub.f32 %v193, %v3578
  %3580 = vmatpush1.msra.mxu0 %v3579
  %v3581 = vand.u32 %v196, 4294901760
  %v3582 = vsub.f32 %v196, %v3581
  %3583 = vmatprep.subr.mxu0 %v3582
  %v3584 = vand.u32 %v195, 4294901760
  %v3585 = vsub.f32 %v195, %v3584
  %3586 = vmatpush1.msra.mxu0 %v3585
  %v3587 = vand.u32 %v198, 4294901760
  %v3588 = vsub.f32 %v198, %v3587
  %3589 = vmatprep.subr.mxu0 %v3588
  %v3590 = vand.u32 %v197, 4294901760
  %v3591 = vsub.f32 %v197, %v3590
  %3592 = vmatpush1.msra.mxu0 %v3591
  %v3593 = vand.u32 %v200, 4294901760
  %v3594 = vsub.f32 %v200, %v3593
  %3595 = vmatprep.subr.mxu0 %v3594
  %v3596 = vand.u32 %v199, 4294901760
  %v3597 = vsub.f32 %v199, %v3596
  %3598 = vmatpush1.msra.mxu0 %v3597
  %v3599 = vand.u32 %v202, 4294901760
  %v3600 = vsub.f32 %v202, %v3599
  %3601 = vmatprep.subr.mxu0 %v3600
  %v3602 = vand.u32 %v201, 4294901760
  %v3603 = vsub.f32 %v201, %v3602
  %3604 = vmatpush1.msra.mxu0 %v3603
  %v3605 = vand.u32 %v204, 4294901760
  %v3606 = vsub.f32 %v204, %v3605
  %3607 = vmatprep.subr.mxu0 %v3606
  %v3608 = vand.u32 %v203, 4294901760
  %v3609 = vsub.f32 %v203, %v3608
  %3610 = vmatpush1.msra.mxu0 %v3609
  %v3611 = vand.u32 %v303, 4294901760
  %v3612 = vsub.f32 %v303, %v3611
  %3613 = vmatprep.mubr.f32.mxu0 %v3612
  %v3614 = vand.u32 %v295, 4294901760
  %v3615 = vsub.f32 %v295, %v3614
  %3616 = vmatmul.mubr.f32.gmra.mrb[0].mxu0 %v3615
  %v3617 = vpop.f32.mrb[0].mxu0
  %v3618 = vadd.f32 %v3415, %v3617
  %v3619 = vpop.f32.mrb[0].mxu0
  %v3620 = vadd.f32 %v3417, %v3619
  %3621 = vdwg.mxu0
  %v3622 = vand.u32 %v142, 4294901760
  %3623 = vmatprep.subr.mxu0 %v3622
  %v3624 = vand.u32 %v141, 4294901760
  %3625 = vmatpush1.msra.mxu0 %v3624
  %v3626 = vand.u32 %v144, 4294901760
  %3627 = vmatprep.subr.mxu0 %v3626
  %v3628 = vand.u32 %v143, 4294901760
  %3629 = vmatpush1.msra.mxu0 %v3628
  %v3630 = vand.u32 %v146, 4294901760
  %3631 = vmatprep.subr.mxu0 %v3630
  %v3632 = vand.u32 %v145, 4294901760
  %3633 = vmatpush1.msra.mxu0 %v3632
  %v3634 = vand.u32 %v148, 4294901760
  %3635 = vmatprep.subr.mxu0 %v3634
  %v3636 = vand.u32 %v147, 4294901760
  %3637 = vmatpush1.msra.mxu0 %v3636
  %v3638 = vand.u32 %v150, 4294901760
  %3639 = vmatprep.subr.mxu0 %v3638
  %v3640 = vand.u32 %v149, 4294901760
  %3641 = vmatpush1.msra.mxu0 %v3640
  %v3642 = vand.u32 %v152, 4294901760
  %3643 = vmatprep.subr.mxu0 %v3642
  %v3644 = vand.u32 %v151, 4294901760
  %3645 = vmatpush1.msra.mxu0 %v3644
  %v3646 = vand.u32 %v154, 4294901760
  %3647 = vmatprep.subr.mxu0 %v3646
  %v3648 = vand.u32 %v153, 4294901760
  %3649 = vmatpush1.msra.mxu0 %v3648
  %v3650 = vand.u32 %v156, 4294901760
  %3651 = vmatprep.subr.mxu0 %v3650
  %v3652 = vand.u32 %v155, 4294901760
  %3653 = vmatpush1.msra.mxu0 %v3652
  %v3654 = vand.u32 %v158, 4294901760
  %3655 = vmatprep.subr.mxu0 %v3654
  %v3656 = vand.u32 %v157, 4294901760
  %3657 = vmatpush1.msra.mxu0 %v3656
  %v3658 = vand.u32 %v160, 4294901760
  %3659 = vmatprep.subr.mxu0 %v3658
  %v3660 = vand.u32 %v159, 4294901760
  %3661 = vmatpush1.msra.mxu0 %v3660
  %v3662 = vand.u32 %v162, 4294901760
  %3663 = vmatprep.subr.mxu0 %v3662
  %v3664 = vand.u32 %v161, 4294901760
  %3665 = vmatpush1.msra.mxu0 %v3664
  %v3666 = vand.u32 %v164, 4294901760
  %3667 = vmatprep.subr.mxu0 %v3666
  %v3668 = vand.u32 %v163, 4294901760
  %3669 = vmatpush1.msra.mxu0 %v3668
  %v3670 = vand.u32 %v166, 4294901760
  %3671 = vmatprep.subr.mxu0 %v3670
  %v3672 = vand.u32 %v165, 4294901760
  %3673 = vmatpush1.msra.mxu0 %v3672
  %v3674 = vand.u32 %v168, 4294901760
  %3675 = vmatprep.subr.mxu0 %v3674
  %v3676 = vand.u32 %v167, 4294901760
  %3677 = vmatpush1.msra.mxu0 %v3676
  %v3678 = vand.u32 %v170, 4294901760
  %3679 = vmatprep.subr.mxu0 %v3678
  %v3680 = vand.u32 %v169, 4294901760
  %3681 = vmatpush1.msra.mxu0 %v3680
  %v3682 = vand.u32 %v172, 4294901760
  %3683 = vmatprep.subr.mxu0 %v3682
  %v3684 = vand.u32 %v171, 4294901760
  %3685 = vmatpush1.msra.mxu0 %v3684
  %v3686 = vand.u32 %v174, 4294901760
  %3687 = vmatprep.subr.mxu0 %v3686
  %v3688 = vand.u32 %v173, 4294901760
  %3689 = vmatpush1.msra.mxu0 %v3688
  %v3690 = vand.u32 %v176, 4294901760
  %3691 = vmatprep.subr.mxu0 %v3690
  %v3692 = vand.u32 %v175, 4294901760
  %3693 = vmatpush1.msra.mxu0 %v3692
  %v3694 = vand.u32 %v178, 4294901760
  %3695 = vmatprep.subr.mxu0 %v3694
  %v3696 = vand.u32 %v177, 4294901760
  %3697 = vmatpush1.msra.mxu0 %v3696
  %v3698 = vand.u32 %v180, 4294901760
  %3699 = vmatprep.subr.mxu0 %v3698
  %v3700 = vand.u32 %v179, 4294901760
  %3701 = vmatpush1.msra.mxu0 %v3700
  %v3702 = vand.u32 %v182, 4294901760
  %3703 = vmatprep.subr.mxu0 %v3702
  %v3704 = vand.u32 %v181, 4294901760
  %3705 = vmatpush1.msra.mxu0 %v3704
  %v3706 = vand.u32 %v184, 4294901760
  %3707 = vmatprep.subr.mxu0 %v3706
  %v3708 = vand.u32 %v183, 4294901760
  %3709 = vmatpush1.msra.mxu0 %v3708
  %v3710 = vand.u32 %v186, 4294901760
  %3711 = vmatprep.subr.mxu0 %v3710
  %v3712 = vand.u32 %v185, 4294901760
  %3713 = vmatpush1.msra.mxu0 %v3712
  %v3714 = vand.u32 %v188, 4294901760
  %3715 = vmatprep.subr.mxu0 %v3714
  %v3716 = vand.u32 %v187, 4294901760
  %3717 = vmatpush1.msra.mxu0 %v3716
  %v3718 = vand.u32 %v190, 4294901760
  %3719 = vmatprep.subr.mxu0 %v3718
  %v3720 = vand.u32 %v189, 4294901760
  %3721 = vmatpush1.msra.mxu0 %v3720
  %v3722 = vand.u32 %v192, 4294901760
  %3723 = vmatprep.subr.mxu0 %v3722
  %v3724 = vand.u32 %v191, 4294901760
  %3725 = vmatpush1.msra.mxu0 %v3724
  %v3726 = vand.u32 %v194, 4294901760
  %3727 = vmatprep.subr.mxu0 %v3726
  %v3728 = vand.u32 %v193, 4294901760
  %3729 = vmatpush1.msra.mxu0 %v3728
  %v3730 = vand.u32 %v196, 4294901760
  %3731 = vmatprep.subr.mxu0 %v3730
  %v3732 = vand.u32 %v195, 4294901760
  %3733 = vmatpush1.msra.mxu0 %v3732
  %v3734 = vand.u32 %v198, 4294901760
  %3735 = vmatprep.subr.mxu0 %v3734
  %v3736 = vand.u32 %v197, 4294901760
  %3737 = vmatpush1.msra.mxu0 %v3736
  %v3738 = vand.u32 %v200, 4294901760
  %3739 = vmatprep.subr.mxu0 %v3738
  %v3740 = vand.u32 %v199, 4294901760
  %3741 = vmatpush1.msra.mxu0 %v3740
  %v3742 = vand.u32 %v202, 4294901760
  %3743 = vmatprep.subr.mxu0 %v3742
  %v3744 = vand.u32 %v201, 4294901760
  %3745 = vmatpush1.msra.mxu0 %v3744
  %v3746 = vand.u32 %v204, 4294901760
  %3747 = vmatprep.subr.mxu0 %v3746
  %v3748 = vand.u32 %v203, 4294901760
  %3749 = vmatpush1.msra.mxu0 %v3748
  %v3750 = vand.u32 %v303, 4294901760
  %v3751 = vsub.f32 %v303, %v3750
  %v3752 = vand.u32 %v3751, 4294901760
  %3753 = vmatprep.mubr.f32.mxu0 %v3752
  %v3754 = vand.u32 %v295, 4294901760
  %v3755 = vsub.f32 %v295, %v3754
  %v3756 = vand.u32 %v3755, 4294901760
  %3757 = vmatmul.mubr.f32.gmra.mrb[0].mxu0 %v3756
  %v3758 = vpop.f32.mrb[0].mxu0
  %v3759 = vadd.f32 %v3618, %v3758
  %v3760 = vpop.f32.mrb[0].mxu0
  %v3761 = vadd.f32 %v3620, %v3760
  %3762 = vdwg.mxu0
  %v3763 = vand.u32 %v142, 4294901760
  %v3764 = vsub.f32 %v142, %v3763
  %v3765 = vand.u32 %v3764, 4294901760
  %3766 = vmatprep.subr.mxu0 %v3765
  %v3767 = vand.u32 %v141, 4294901760
  %v3768 = vsub.f32 %v141, %v3767
  %v3769 = vand.u32 %v3768, 4294901760
  %3770 = vmatpush1.msra.mxu0 %v3769
  %v3771 = vand.u32 %v144, 4294901760
  %v3772 = vsub.f32 %v144, %v3771
  %v3773 = vand.u32 %v3772, 4294901760
  %3774 = vmatprep.subr.mxu0 %v3773
  %v3775 = vand.u32 %v143, 4294901760
  %v3776 = vsub.f32 %v143, %v3775
  %v3777 = vand.u32 %v3776, 4294901760
  %3778 = vmatpush1.msra.mxu0 %v3777
  %v3779 = vand.u32 %v146, 4294901760
  %v3780 = vsub.f32 %v146, %v3779
  %v3781 = vand.u32 %v3780, 4294901760
  %3782 = vmatprep.subr.mxu0 %v3781
  %v3783 = vand.u32 %v145, 4294901760
  %v3784 = vsub.f32 %v145, %v3783
  %v3785 = vand.u32 %v3784, 4294901760
  %3786 = vmatpush1.msra.mxu0 %v3785
  %v3787 = vand.u32 %v148, 4294901760
  %v3788 = vsub.f32 %v148, %v3787
  %v3789 = vand.u32 %v3788, 4294901760
  %3790 = vmatprep.subr.mxu0 %v3789
  %v3791 = vand.u32 %v147, 4294901760
  %v3792 = vsub.f32 %v147, %v3791
  %v3793 = vand.u32 %v3792, 4294901760
  %3794 = vmatpush1.msra.mxu0 %v3793
  %v3795 = vand.u32 %v150, 4294901760
  %v3796 = vsub.f32 %v150, %v3795
  %v3797 = vand.u32 %v3796, 4294901760
  %3798 = vmatprep.subr.mxu0 %v3797
  %v3799 = vand.u32 %v149, 4294901760
  %v3800 = vsub.f32 %v149, %v3799
  %v3801 = vand.u32 %v3800, 4294901760
  %3802 = vmatpush1.msra.mxu0 %v3801
  %v3803 = vand.u32 %v152, 4294901760
  %v3804 = vsub.f32 %v152, %v3803
  %v3805 = vand.u32 %v3804, 4294901760
  %3806 = vmatprep.subr.mxu0 %v3805
  %v3807 = vand.u32 %v151, 4294901760
  %v3808 = vsub.f32 %v151, %v3807
  %v3809 = vand.u32 %v3808, 4294901760
  %3810 = vmatpush1.msra.mxu0 %v3809
  %v3811 = vand.u32 %v154, 4294901760
  %v3812 = vsub.f32 %v154, %v3811
  %v3813 = vand.u32 %v3812, 4294901760
  %3814 = vmatprep.subr.mxu0 %v3813
  %v3815 = vand.u32 %v153, 4294901760
  %v3816 = vsub.f32 %v153, %v3815
  %v3817 = vand.u32 %v3816, 4294901760
  %3818 = vmatpush1.msra.mxu0 %v3817
  %v3819 = vand.u32 %v156, 4294901760
  %v3820 = vsub.f32 %v156, %v3819
  %v3821 = vand.u32 %v3820, 4294901760
  %3822 = vmatprep.subr.mxu0 %v3821
  %v3823 = vand.u32 %v155, 4294901760
  %v3824 = vsub.f32 %v155, %v3823
  %v3825 = vand.u32 %v3824, 4294901760
  %3826 = vmatpush1.msra.mxu0 %v3825
  %v3827 = vand.u32 %v158, 4294901760
  %v3828 = vsub.f32 %v158, %v3827
  %v3829 = vand.u32 %v3828, 4294901760
  %3830 = vmatprep.subr.mxu0 %v3829
  %v3831 = vand.u32 %v157, 4294901760
  %v3832 = vsub.f32 %v157, %v3831
  %v3833 = vand.u32 %v3832, 4294901760
  %3834 = vmatpush1.msra.mxu0 %v3833
  %v3835 = vand.u32 %v160, 4294901760
  %v3836 = vsub.f32 %v160, %v3835
  %v3837 = vand.u32 %v3836, 4294901760
  %3838 = vmatprep.subr.mxu0 %v3837
  %v3839 = vand.u32 %v159, 4294901760
  %v3840 = vsub.f32 %v159, %v3839
  %v3841 = vand.u32 %v3840, 4294901760
  %3842 = vmatpush1.msra.mxu0 %v3841
  %v3843 = vand.u32 %v162, 4294901760
  %v3844 = vsub.f32 %v162, %v3843
  %v3845 = vand.u32 %v3844, 4294901760
  %3846 = vmatprep.subr.mxu0 %v3845
  %v3847 = vand.u32 %v161, 4294901760
  %v3848 = vsub.f32 %v161, %v3847
  %v3849 = vand.u32 %v3848, 4294901760
  %3850 = vmatpush1.msra.mxu0 %v3849
  %v3851 = vand.u32 %v164, 4294901760
  %v3852 = vsub.f32 %v164, %v3851
  %v3853 = vand.u32 %v3852, 4294901760
  %3854 = vmatprep.subr.mxu0 %v3853
  %v3855 = vand.u32 %v163, 4294901760
  %v3856 = vsub.f32 %v163, %v3855
  %v3857 = vand.u32 %v3856, 4294901760
  %3858 = vmatpush1.msra.mxu0 %v3857
  %v3859 = vand.u32 %v166, 4294901760
  %v3860 = vsub.f32 %v166, %v3859
  %v3861 = vand.u32 %v3860, 4294901760
  %3862 = vmatprep.subr.mxu0 %v3861
  %v3863 = vand.u32 %v165, 4294901760
  %v3864 = vsub.f32 %v165, %v3863
  %v3865 = vand.u32 %v3864, 4294901760
  %3866 = vmatpush1.msra.mxu0 %v3865
  %v3867 = vand.u32 %v168, 4294901760
  %v3868 = vsub.f32 %v168, %v3867
  %v3869 = vand.u32 %v3868, 4294901760
  %3870 = vmatprep.subr.mxu0 %v3869
  %v3871 = vand.u32 %v167, 4294901760
  %v3872 = vsub.f32 %v167, %v3871
  %v3873 = vand.u32 %v3872, 4294901760
  %3874 = vmatpush1.msra.mxu0 %v3873
  %v3875 = vand.u32 %v170, 4294901760
  %v3876 = vsub.f32 %v170, %v3875
  %v3877 = vand.u32 %v3876, 4294901760
  %3878 = vmatprep.subr.mxu0 %v3877
  %v3879 = vand.u32 %v169, 4294901760
  %v3880 = vsub.f32 %v169, %v3879
  %v3881 = vand.u32 %v3880, 4294901760
  %3882 = vmatpush1.msra.mxu0 %v3881
  %v3883 = vand.u32 %v172, 4294901760
  %v3884 = vsub.f32 %v172, %v3883
  %v3885 = vand.u32 %v3884, 4294901760
  %3886 = vmatprep.subr.mxu0 %v3885
  %v3887 = vand.u32 %v171, 4294901760
  %v3888 = vsub.f32 %v171, %v3887
  %v3889 = vand.u32 %v3888, 4294901760
  %3890 = vmatpush1.msra.mxu0 %v3889
  %v3891 = vand.u32 %v174, 4294901760
  %v3892 = vsub.f32 %v174, %v3891
  %v3893 = vand.u32 %v3892, 4294901760
  %3894 = vmatprep.subr.mxu0 %v3893
  %v3895 = vand.u32 %v173, 4294901760
  %v3896 = vsub.f32 %v173, %v3895
  %v3897 = vand.u32 %v3896, 4294901760
  %3898 = vmatpush1.msra.mxu0 %v3897
  %v3899 = vand.u32 %v176, 4294901760
  %v3900 = vsub.f32 %v176, %v3899
  %v3901 = vand.u32 %v3900, 4294901760
  %3902 = vmatprep.subr.mxu0 %v3901
  %v3903 = vand.u32 %v175, 4294901760
  %v3904 = vsub.f32 %v175, %v3903
  %v3905 = vand.u32 %v3904, 4294901760
  %3906 = vmatpush1.msra.mxu0 %v3905
  %v3907 = vand.u32 %v178, 4294901760
  %v3908 = vsub.f32 %v178, %v3907
  %v3909 = vand.u32 %v3908, 4294901760
  %3910 = vmatprep.subr.mxu0 %v3909
  %v3911 = vand.u32 %v177, 4294901760
  %v3912 = vsub.f32 %v177, %v3911
  %v3913 = vand.u32 %v3912, 4294901760
  %3914 = vmatpush1.msra.mxu0 %v3913
  %v3915 = vand.u32 %v180, 4294901760
  %v3916 = vsub.f32 %v180, %v3915
  %v3917 = vand.u32 %v3916, 4294901760
  %3918 = vmatprep.subr.mxu0 %v3917
  %v3919 = vand.u32 %v179, 4294901760
  %v3920 = vsub.f32 %v179, %v3919
  %v3921 = vand.u32 %v3920, 4294901760
  %3922 = vmatpush1.msra.mxu0 %v3921
  %v3923 = vand.u32 %v182, 4294901760
  %v3924 = vsub.f32 %v182, %v3923
  %v3925 = vand.u32 %v3924, 4294901760
  %3926 = vmatprep.subr.mxu0 %v3925
  %v3927 = vand.u32 %v181, 4294901760
  %v3928 = vsub.f32 %v181, %v3927
  %v3929 = vand.u32 %v3928, 4294901760
  %3930 = vmatpush1.msra.mxu0 %v3929
  %v3931 = vand.u32 %v184, 4294901760
  %v3932 = vsub.f32 %v184, %v3931
  %v3933 = vand.u32 %v3932, 4294901760
  %3934 = vmatprep.subr.mxu0 %v3933
  %v3935 = vand.u32 %v183, 4294901760
  %v3936 = vsub.f32 %v183, %v3935
  %v3937 = vand.u32 %v3936, 4294901760
  %3938 = vmatpush1.msra.mxu0 %v3937
  %v3939 = vand.u32 %v186, 4294901760
  %v3940 = vsub.f32 %v186, %v3939
  %v3941 = vand.u32 %v3940, 4294901760
  %3942 = vmatprep.subr.mxu0 %v3941
  %v3943 = vand.u32 %v185, 4294901760
  %v3944 = vsub.f32 %v185, %v3943
  %v3945 = vand.u32 %v3944, 4294901760
  %3946 = vmatpush1.msra.mxu0 %v3945
  %v3947 = vand.u32 %v188, 4294901760
  %v3948 = vsub.f32 %v188, %v3947
  %v3949 = vand.u32 %v3948, 4294901760
  %3950 = vmatprep.subr.mxu0 %v3949
  %v3951 = vand.u32 %v187, 4294901760
  %v3952 = vsub.f32 %v187, %v3951
  %v3953 = vand.u32 %v3952, 4294901760
  %3954 = vmatpush1.msra.mxu0 %v3953
  %v3955 = vand.u32 %v190, 4294901760
  %v3956 = vsub.f32 %v190, %v3955
  %v3957 = vand.u32 %v3956, 4294901760
  %3958 = vmatprep.subr.mxu0 %v3957
  %v3959 = vand.u32 %v189, 4294901760
  %v3960 = vsub.f32 %v189, %v3959
  %v3961 = vand.u32 %v3960, 4294901760
  %3962 = vmatpush1.msra.mxu0 %v3961
  %v3963 = vand.u32 %v192, 4294901760
  %v3964 = vsub.f32 %v192, %v3963
  %v3965 = vand.u32 %v3964, 4294901760
  %3966 = vmatprep.subr.mxu0 %v3965
  %v3967 = vand.u32 %v191, 4294901760
  %v3968 = vsub.f32 %v191, %v3967
  %v3969 = vand.u32 %v3968, 4294901760
  %3970 = vmatpush1.msra.mxu0 %v3969
  %v3971 = vand.u32 %v194, 4294901760
  %v3972 = vsub.f32 %v194, %v3971
  %v3973 = vand.u32 %v3972, 4294901760
  %3974 = vmatprep.subr.mxu0 %v3973
  %v3975 = vand.u32 %v193, 4294901760
  %v3976 = vsub.f32 %v193, %v3975
  %v3977 = vand.u32 %v3976, 4294901760
  %3978 = vmatpush1.msra.mxu0 %v3977
  %v3979 = vand.u32 %v196, 4294901760
  %v3980 = vsub.f32 %v196, %v3979
  %v3981 = vand.u32 %v3980, 4294901760
  %3982 = vmatprep.subr.mxu0 %v3981
  %v3983 = vand.u32 %v195, 4294901760
  %v3984 = vsub.f32 %v195, %v3983
  %v3985 = vand.u32 %v3984, 4294901760
  %3986 = vmatpush1.msra.mxu0 %v3985
  %v3987 = vand.u32 %v198, 4294901760
  %v3988 = vsub.f32 %v198, %v3987
  %v3989 = vand.u32 %v3988, 4294901760
  %3990 = vmatprep.subr.mxu0 %v3989
  %v3991 = vand.u32 %v197, 4294901760
  %v3992 = vsub.f32 %v197, %v3991
  %v3993 = vand.u32 %v3992, 4294901760
  %3994 = vmatpush1.msra.mxu0 %v3993
  %v3995 = vand.u32 %v200, 4294901760
  %v3996 = vsub.f32 %v200, %v3995
  %v3997 = vand.u32 %v3996, 4294901760
  %3998 = vmatprep.subr.mxu0 %v3997
  %v3999 = vand.u32 %v199, 4294901760
  %v4000 = vsub.f32 %v199, %v3999
  %v4001 = vand.u32 %v4000, 4294901760
  %4002 = vmatpush1.msra.mxu0 %v4001
  %v4003 = vand.u32 %v202, 4294901760
  %v4004 = vsub.f32 %v202, %v4003
  %v4005 = vand.u32 %v4004, 4294901760
  %4006 = vmatprep.subr.mxu0 %v4005
  %v4007 = vand.u32 %v201, 4294901760
  %v4008 = vsub.f32 %v201, %v4007
  %v4009 = vand.u32 %v4008, 4294901760
  %4010 = vmatpush1.msra.mxu0 %v4009
  %v4011 = vand.u32 %v204, 4294901760
  %v4012 = vsub.f32 %v204, %v4011
  %v4013 = vand.u32 %v4012, 4294901760
  %4014 = vmatprep.subr.mxu0 %v4013
  %v4015 = vand.u32 %v203, 4294901760
  %v4016 = vsub.f32 %v203, %v4015
  %v4017 = vand.u32 %v4016, 4294901760
  %4018 = vmatpush1.msra.mxu0 %v4017
  %v4019 = vand.u32 %v303, 4294901760
  %4020 = vmatprep.mubr.f32.mxu0 %v4019
  %v4021 = vand.u32 %v295, 4294901760
  %4022 = vmatmul.mubr.f32.gmra.mrb[0].mxu0 %v4021
  %v4023 = vpop.f32.mrb[0].mxu0
  %v4024 = vadd.f32 %v3759, %v4023
  %v4025 = vpop.f32.mrb[0].mxu0
  %v4026 = vadd.f32 %v3761, %v4025
  %4027 = vdwg.mxu0
  %v4028 = vand.u32 %v142, 4294901760
  %4029 = vmatprep.subr.mxu0 %v4028
  %v4030 = vand.u32 %v141, 4294901760
  %4031 = vmatpush1.msra.mxu0 %v4030
  %v4032 = vand.u32 %v144, 4294901760
  %4033 = vmatprep.subr.mxu0 %v4032
  %v4034 = vand.u32 %v143, 4294901760
  %4035 = vmatpush1.msra.mxu0 %v4034
  %v4036 = vand.u32 %v146, 4294901760
  %4037 = vmatprep.subr.mxu0 %v4036
  %v4038 = vand.u32 %v145, 4294901760
  %4039 = vmatpush1.msra.mxu0 %v4038
  %v4040 = vand.u32 %v148, 4294901760
  %4041 = vmatprep.subr.mxu0 %v4040
  %v4042 = vand.u32 %v147, 4294901760
  %4043 = vmatpush1.msra.mxu0 %v4042
  %v4044 = vand.u32 %v150, 4294901760
  %4045 = vmatprep.subr.mxu0 %v4044
  %v4046 = vand.u32 %v149, 4294901760
  %4047 = vmatpush1.msra.mxu0 %v4046
  %v4048 = vand.u32 %v152, 4294901760
  %4049 = vmatprep.subr.mxu0 %v4048
  %v4050 = vand.u32 %v151, 4294901760
  %4051 = vmatpush1.msra.mxu0 %v4050
  %v4052 = vand.u32 %v154, 4294901760
  %4053 = vmatprep.subr.mxu0 %v4052
  %v4054 = vand.u32 %v153, 4294901760
  %4055 = vmatpush1.msra.mxu0 %v4054
  %v4056 = vand.u32 %v156, 4294901760
  %4057 = vmatprep.subr.mxu0 %v4056
  %v4058 = vand.u32 %v155, 4294901760
  %4059 = vmatpush1.msra.mxu0 %v4058
  %v4060 = vand.u32 %v158, 4294901760
  %4061 = vmatprep.subr.mxu0 %v4060
  %v4062 = vand.u32 %v157, 4294901760
  %4063 = vmatpush1.msra.mxu0 %v4062
  %v4064 = vand.u32 %v160, 4294901760
  %4065 = vmatprep.subr.mxu0 %v4064
  %v4066 = vand.u32 %v159, 4294901760
  %4067 = vmatpush1.msra.mxu0 %v4066
  %v4068 = vand.u32 %v162, 4294901760
  %4069 = vmatprep.subr.mxu0 %v4068
  %v4070 = vand.u32 %v161, 4294901760
  %4071 = vmatpush1.msra.mxu0 %v4070
  %v4072 = vand.u32 %v164, 4294901760
  %4073 = vmatprep.subr.mxu0 %v4072
  %v4074 = vand.u32 %v163, 4294901760
  %4075 = vmatpush1.msra.mxu0 %v4074
  %v4076 = vand.u32 %v166, 4294901760
  %4077 = vmatprep.subr.mxu0 %v4076
  %v4078 = vand.u32 %v165, 4294901760
  %4079 = vmatpush1.msra.mxu0 %v4078
  %v4080 = vand.u32 %v168, 4294901760
  %4081 = vmatprep.subr.mxu0 %v4080
  %v4082 = vand.u32 %v167, 4294901760
  %4083 = vmatpush1.msra.mxu0 %v4082
  %v4084 = vand.u32 %v170, 4294901760
  %4085 = vmatprep.subr.mxu0 %v4084
  %v4086 = vand.u32 %v169, 4294901760
  %4087 = vmatpush1.msra.mxu0 %v4086
  %v4088 = vand.u32 %v172, 4294901760
  %4089 = vmatprep.subr.mxu0 %v4088
  %v4090 = vand.u32 %v171, 4294901760
  %4091 = vmatpush1.msra.mxu0 %v4090
  %v4092 = vand.u32 %v174, 4294901760
  %4093 = vmatprep.subr.mxu0 %v4092
  %v4094 = vand.u32 %v173, 4294901760
  %4095 = vmatpush1.msra.mxu0 %v4094
  %v4096 = vand.u32 %v176, 4294901760
  %4097 = vmatprep.subr.mxu0 %v4096
  %v4098 = vand.u32 %v175, 4294901760
  %4099 = vmatpush1.msra.mxu0 %v4098
  %v4100 = vand.u32 %v178, 4294901760
  %4101 = vmatprep.subr.mxu0 %v4100
  %v4102 = vand.u32 %v177, 4294901760
  %4103 = vmatpush1.msra.mxu0 %v4102
  %v4104 = vand.u32 %v180, 4294901760
  %4105 = vmatprep.subr.mxu0 %v4104
  %v4106 = vand.u32 %v179, 4294901760
  %4107 = vmatpush1.msra.mxu0 %v4106
  %v4108 = vand.u32 %v182, 4294901760
  %4109 = vmatprep.subr.mxu0 %v4108
  %v4110 = vand.u32 %v181, 4294901760
  %4111 = vmatpush1.msra.mxu0 %v4110
  %v4112 = vand.u32 %v184, 4294901760
  %4113 = vmatprep.subr.mxu0 %v4112
  %v4114 = vand.u32 %v183, 4294901760
  %4115 = vmatpush1.msra.mxu0 %v4114
  %v4116 = vand.u32 %v186, 4294901760
  %4117 = vmatprep.subr.mxu0 %v4116
  %v4118 = vand.u32 %v185, 4294901760
  %4119 = vmatpush1.msra.mxu0 %v4118
  %v4120 = vand.u32 %v188, 4294901760
  %4121 = vmatprep.subr.mxu0 %v4120
  %v4122 = vand.u32 %v187, 4294901760
  %4123 = vmatpush1.msra.mxu0 %v4122
  %v4124 = vand.u32 %v190, 4294901760
  %4125 = vmatprep.subr.mxu0 %v4124
  %v4126 = vand.u32 %v189, 4294901760
  %4127 = vmatpush1.msra.mxu0 %v4126
  %v4128 = vand.u32 %v192, 4294901760
  %4129 = vmatprep.subr.mxu0 %v4128
  %v4130 = vand.u32 %v191, 4294901760
  %4131 = vmatpush1.msra.mxu0 %v4130
  %v4132 = vand.u32 %v194, 4294901760
  %4133 = vmatprep.subr.mxu0 %v4132
  %v4134 = vand.u32 %v193, 4294901760
  %4135 = vmatpush1.msra.mxu0 %v4134
  %v4136 = vand.u32 %v196, 4294901760
  %4137 = vmatprep.subr.mxu0 %v4136
  %v4138 = vand.u32 %v195, 4294901760
  %4139 = vmatpush1.msra.mxu0 %v4138
  %v4140 = vand.u32 %v198, 4294901760
  %4141 = vmatprep.subr.mxu0 %v4140
  %v4142 = vand.u32 %v197, 4294901760
  %4143 = vmatpush1.msra.mxu0 %v4142
  %v4144 = vand.u32 %v200, 4294901760
  %4145 = vmatprep.subr.mxu0 %v4144
  %v4146 = vand.u32 %v199, 4294901760
  %4147 = vmatpush1.msra.mxu0 %v4146
  %v4148 = vand.u32 %v202, 4294901760
  %4149 = vmatprep.subr.mxu0 %v4148
  %v4150 = vand.u32 %v201, 4294901760
  %4151 = vmatpush1.msra.mxu0 %v4150
  %v4152 = vand.u32 %v204, 4294901760
  %4153 = vmatprep.subr.mxu0 %v4152
  %v4154 = vand.u32 %v203, 4294901760
  %4155 = vmatpush1.msra.mxu0 %v4154
  %v4156 = vand.u32 %v303, 4294901760
  %4157 = vmatprep.mubr.f32.mxu0 %v4156
  %v4158 = vand.u32 %v295, 4294901760
  %4159 = vmatmul.mubr.f32.gmra.mrb[0].mxu0 %v4158
  %v4160 = vpop.f32.mrb[0].mxu0
  %v4161 = vadd.f32 %v4024, %v4160
  %v4162 = vpop.f32.mrb[0].mxu0
  %v4163 = vadd.f32 %v4026, %v4162
  %4164 = vdwg.mxu0
  %v4165 = vand.u32 %v206, 4294901760
  %4166 = vmatprep.subr.mxu0 %v4165
  %v4167 = vand.u32 %v205, 4294901760
  %4168 = vmatpush1.msra.mxu0 %v4167
  %v4169 = vand.u32 %v208, 4294901760
  %4170 = vmatprep.subr.mxu0 %v4169
  %v4171 = vand.u32 %v207, 4294901760
  %4172 = vmatpush1.msra.mxu0 %v4171
  %v4173 = vand.u32 %v210, 4294901760
  %4174 = vmatprep.subr.mxu0 %v4173
  %v4175 = vand.u32 %v209, 4294901760
  %4176 = vmatpush1.msra.mxu0 %v4175
  %v4177 = vand.u32 %v212, 4294901760
  %4178 = vmatprep.subr.mxu0 %v4177
  %v4179 = vand.u32 %v211, 4294901760
  %4180 = vmatpush1.msra.mxu0 %v4179
  %v4181 = vand.u32 %v214, 4294901760
  %4182 = vmatprep.subr.mxu0 %v4181
  %v4183 = vand.u32 %v213, 4294901760
  %4184 = vmatpush1.msra.mxu0 %v4183
  %v4185 = vand.u32 %v216, 4294901760
  %4186 = vmatprep.subr.mxu0 %v4185
  %v4187 = vand.u32 %v215, 4294901760
  %4188 = vmatpush1.msra.mxu0 %v4187
  %v4189 = vand.u32 %v218, 4294901760
  %4190 = vmatprep.subr.mxu0 %v4189
  %v4191 = vand.u32 %v217, 4294901760
  %4192 = vmatpush1.msra.mxu0 %v4191
  %v4193 = vand.u32 %v220, 4294901760
  %4194 = vmatprep.subr.mxu0 %v4193
  %v4195 = vand.u32 %v219, 4294901760
  %4196 = vmatpush1.msra.mxu0 %v4195
  %v4197 = vand.u32 %v222, 4294901760
  %4198 = vmatprep.subr.mxu0 %v4197
  %v4199 = vand.u32 %v221, 4294901760
  %4200 = vmatpush1.msra.mxu0 %v4199
  %v4201 = vand.u32 %v224, 4294901760
  %4202 = vmatprep.subr.mxu0 %v4201
  %v4203 = vand.u32 %v223, 4294901760
  %4204 = vmatpush1.msra.mxu0 %v4203
  %v4205 = vand.u32 %v226, 4294901760
  %4206 = vmatprep.subr.mxu0 %v4205
  %v4207 = vand.u32 %v225, 4294901760
  %4208 = vmatpush1.msra.mxu0 %v4207
  %v4209 = vand.u32 %v228, 4294901760
  %4210 = vmatprep.subr.mxu0 %v4209
  %v4211 = vand.u32 %v227, 4294901760
  %4212 = vmatpush1.msra.mxu0 %v4211
  %v4213 = vand.u32 %v230, 4294901760
  %4214 = vmatprep.subr.mxu0 %v4213
  %v4215 = vand.u32 %v229, 4294901760
  %4216 = vmatpush1.msra.mxu0 %v4215
  %v4217 = vand.u32 %v232, 4294901760
  %4218 = vmatprep.subr.mxu0 %v4217
  %v4219 = vand.u32 %v231, 4294901760
  %4220 = vmatpush1.msra.mxu0 %v4219
  %v4221 = vand.u32 %v234, 4294901760
  %4222 = vmatprep.subr.mxu0 %v4221
  %v4223 = vand.u32 %v233, 4294901760
  %4224 = vmatpush1.msra.mxu0 %v4223
  %v4225 = vand.u32 %v236, 4294901760
  %4226 = vmatprep.subr.mxu0 %v4225
  %v4227 = vand.u32 %v235, 4294901760
  %4228 = vmatpush1.msra.mxu0 %v4227
  %v4229 = vand.u32 %v238, 4294901760
  %4230 = vmatprep.subr.mxu0 %v4229
  %v4231 = vand.u32 %v237, 4294901760
  %4232 = vmatpush1.msra.mxu0 %v4231
  %v4233 = vand.u32 %v240, 4294901760
  %4234 = vmatprep.subr.mxu0 %v4233
  %v4235 = vand.u32 %v239, 4294901760
  %4236 = vmatpush1.msra.mxu0 %v4235
  %v4237 = vand.u32 %v242, 4294901760
  %4238 = vmatprep.subr.mxu0 %v4237
  %v4239 = vand.u32 %v241, 4294901760
  %4240 = vmatpush1.msra.mxu0 %v4239
  %v4241 = vand.u32 %v244, 4294901760
  %4242 = vmatprep.subr.mxu0 %v4241
  %v4243 = vand.u32 %v243, 4294901760
  %4244 = vmatpush1.msra.mxu0 %v4243
  %v4245 = vand.u32 %v246, 4294901760
  %4246 = vmatprep.subr.mxu0 %v4245
  %v4247 = vand.u32 %v245, 4294901760
  %4248 = vmatpush1.msra.mxu0 %v4247
  %v4249 = vand.u32 %v248, 4294901760
  %4250 = vmatprep.subr.mxu0 %v4249
  %v4251 = vand.u32 %v247, 4294901760
  %4252 = vmatpush1.msra.mxu0 %v4251
  %v4253 = vand.u32 %v250, 4294901760
  %4254 = vmatprep.subr.mxu0 %v4253
  %v4255 = vand.u32 %v249, 4294901760
  %4256 = vmatpush1.msra.mxu0 %v4255
  %v4257 = vand.u32 %v252, 4294901760
  %4258 = vmatprep.subr.mxu0 %v4257
  %v4259 = vand.u32 %v251, 4294901760
  %4260 = vmatpush1.msra.mxu0 %v4259
  %v4261 = vand.u32 %v254, 4294901760
  %4262 = vmatprep.subr.mxu0 %v4261
  %v4263 = vand.u32 %v253, 4294901760
  %4264 = vmatpush1.msra.mxu0 %v4263
  %v4265 = vand.u32 %v256, 4294901760
  %4266 = vmatprep.subr.mxu0 %v4265
  %v4267 = vand.u32 %v255, 4294901760
  %4268 = vmatpush1.msra.mxu0 %v4267
  %v4269 = vand.u32 %v258, 4294901760
  %4270 = vmatprep.subr.mxu0 %v4269
  %v4271 = vand.u32 %v257, 4294901760
  %4272 = vmatpush1.msra.mxu0 %v4271
  %v4273 = vand.u32 %v260, 4294901760
  %4274 = vmatprep.subr.mxu0 %v4273
  %v4275 = vand.u32 %v259, 4294901760
  %4276 = vmatpush1.msra.mxu0 %v4275
  %v4277 = vand.u32 %v262, 4294901760
  %4278 = vmatprep.subr.mxu0 %v4277
  %v4279 = vand.u32 %v261, 4294901760
  %4280 = vmatpush1.msra.mxu0 %v4279
  %v4281 = vand.u32 %v264, 4294901760
  %4282 = vmatprep.subr.mxu0 %v4281
  %v4283 = vand.u32 %v263, 4294901760
  %4284 = vmatpush1.msra.mxu0 %v4283
  %v4285 = vand.u32 %v266, 4294901760
  %4286 = vmatprep.subr.mxu0 %v4285
  %v4287 = vand.u32 %v265, 4294901760
  %4288 = vmatpush1.msra.mxu0 %v4287
  %v4289 = vand.u32 %v268, 4294901760
  %4290 = vmatprep.subr.mxu0 %v4289
  %v4291 = vand.u32 %v267, 4294901760
  %4292 = vmatpush1.msra.mxu0 %v4291
  %v4293 = vand.u32 %v304, 4294901760
  %v4294 = vsub.f32 %v304, %v4293
  %v4295 = vand.u32 %v4294, 4294901760
  %v4296 = vsub.f32 %v4294, %v4295
  %v4297 = vand.u32 %v4296, 4294901760
  %4298 = vmatprep.mubr.f32.mxu0 %v4297
  %v4299 = vand.u32 %v302, 4294901760
  %v4300 = vsub.f32 %v302, %v4299
  %v4301 = vand.u32 %v4300, 4294901760
  %v4302 = vsub.f32 %v4300, %v4301
  %v4303 = vand.u32 %v4302, 4294901760
  %4304 = vmatmul.mubr.f32.gmra.mrb[0].mxu0 %v4303
  %v4305 = vpop.f32.mrb[0].mxu0
  %v4306 = vadd.f32 %v4161, %v4305
  %v4307 = vpop.f32.mrb[0].mxu0
  %v4308 = vadd.f32 %v4163, %v4307
  %4309 = vdwg.mxu0
  %v4310 = vand.u32 %v206, 4294901760
  %v4311 = vsub.f32 %v206, %v4310
  %v4312 = vand.u32 %v4311, 4294901760
  %v4313 = vsub.f32 %v4311, %v4312
  %v4314 = vand.u32 %v4313, 4294901760
  %4315 = vmatprep.subr.mxu0 %v4314
  %v4316 = vand.u32 %v205, 4294901760
  %v4317 = vsub.f32 %v205, %v4316
  %v4318 = vand.u32 %v4317, 4294901760
  %v4319 = vsub.f32 %v4317, %v4318
  %v4320 = vand.u32 %v4319, 4294901760
  %4321 = vmatpush1.msra.mxu0 %v4320
  %v4322 = vand.u32 %v208, 4294901760
  %v4323 = vsub.f32 %v208, %v4322
  %v4324 = vand.u32 %v4323, 4294901760
  %v4325 = vsub.f32 %v4323, %v4324
  %v4326 = vand.u32 %v4325, 4294901760
  %4327 = vmatprep.subr.mxu0 %v4326
  %v4328 = vand.u32 %v207, 4294901760
  %v4329 = vsub.f32 %v207, %v4328
  %v4330 = vand.u32 %v4329, 4294901760
  %v4331 = vsub.f32 %v4329, %v4330
  %v4332 = vand.u32 %v4331, 4294901760
  %4333 = vmatpush1.msra.mxu0 %v4332
  %v4334 = vand.u32 %v210, 4294901760
  %v4335 = vsub.f32 %v210, %v4334
  %v4336 = vand.u32 %v4335, 4294901760
  %v4337 = vsub.f32 %v4335, %v4336
  %v4338 = vand.u32 %v4337, 4294901760
  %4339 = vmatprep.subr.mxu0 %v4338
  %v4340 = vand.u32 %v209, 4294901760
  %v4341 = vsub.f32 %v209, %v4340
  %v4342 = vand.u32 %v4341, 4294901760
  %v4343 = vsub.f32 %v4341, %v4342
  %v4344 = vand.u32 %v4343, 4294901760
  %4345 = vmatpush1.msra.mxu0 %v4344
  %v4346 = vand.u32 %v212, 4294901760
  %v4347 = vsub.f32 %v212, %v4346
  %v4348 = vand.u32 %v4347, 4294901760
  %v4349 = vsub.f32 %v4347, %v4348
  %v4350 = vand.u32 %v4349, 4294901760
  %4351 = vmatprep.subr.mxu0 %v4350
  %v4352 = vand.u32 %v211, 4294901760
  %v4353 = vsub.f32 %v211, %v4352
  %v4354 = vand.u32 %v4353, 4294901760
  %v4355 = vsub.f32 %v4353, %v4354
  %v4356 = vand.u32 %v4355, 4294901760
  %4357 = vmatpush1.msra.mxu0 %v4356
  %v4358 = vand.u32 %v214, 4294901760
  %v4359 = vsub.f32 %v214, %v4358
  %v4360 = vand.u32 %v4359, 4294901760
  %v4361 = vsub.f32 %v4359, %v4360
  %v4362 = vand.u32 %v4361, 4294901760
  %4363 = vmatprep.subr.mxu0 %v4362
  %v4364 = vand.u32 %v213, 4294901760
  %v4365 = vsub.f32 %v213, %v4364
  %v4366 = vand.u32 %v4365, 4294901760
  %v4367 = vsub.f32 %v4365, %v4366
  %v4368 = vand.u32 %v4367, 4294901760
  %4369 = vmatpush1.msra.mxu0 %v4368
  %v4370 = vand.u32 %v216, 4294901760
  %v4371 = vsub.f32 %v216, %v4370
  %v4372 = vand.u32 %v4371, 4294901760
  %v4373 = vsub.f32 %v4371, %v4372
  %v4374 = vand.u32 %v4373, 4294901760
  %4375 = vmatprep.subr.mxu0 %v4374
  %v4376 = vand.u32 %v215, 4294901760
  %v4377 = vsub.f32 %v215, %v4376
  %v4378 = vand.u32 %v4377, 4294901760
  %v4379 = vsub.f32 %v4377, %v4378
  %v4380 = vand.u32 %v4379, 4294901760
  %4381 = vmatpush1.msra.mxu0 %v4380
  %v4382 = vand.u32 %v218, 4294901760
  %v4383 = vsub.f32 %v218, %v4382
  %v4384 = vand.u32 %v4383, 4294901760
  %v4385 = vsub.f32 %v4383, %v4384
  %v4386 = vand.u32 %v4385, 4294901760
  %4387 = vmatprep.subr.mxu0 %v4386
  %v4388 = vand.u32 %v217, 4294901760
  %v4389 = vsub.f32 %v217, %v4388
  %v4390 = vand.u32 %v4389, 4294901760
  %v4391 = vsub.f32 %v4389, %v4390
  %v4392 = vand.u32 %v4391, 4294901760
  %4393 = vmatpush1.msra.mxu0 %v4392
  %v4394 = vand.u32 %v220, 4294901760
  %v4395 = vsub.f32 %v220, %v4394
  %v4396 = vand.u32 %v4395, 4294901760
  %v4397 = vsub.f32 %v4395, %v4396
  %v4398 = vand.u32 %v4397, 4294901760
  %4399 = vmatprep.subr.mxu0 %v4398
  %v4400 = vand.u32 %v219, 4294901760
  %v4401 = vsub.f32 %v219, %v4400
  %v4402 = vand.u32 %v4401, 4294901760
  %v4403 = vsub.f32 %v4401, %v4402
  %v4404 = vand.u32 %v4403, 4294901760
  %4405 = vmatpush1.msra.mxu0 %v4404
  %v4406 = vand.u32 %v222, 4294901760
  %v4407 = vsub.f32 %v222, %v4406
  %v4408 = vand.u32 %v4407, 4294901760
  %v4409 = vsub.f32 %v4407, %v4408
  %v4410 = vand.u32 %v4409, 4294901760
  %4411 = vmatprep.subr.mxu0 %v4410
  %v4412 = vand.u32 %v221, 4294901760
  %v4413 = vsub.f32 %v221, %v4412
  %v4414 = vand.u32 %v4413, 4294901760
  %v4415 = vsub.f32 %v4413, %v4414
  %v4416 = vand.u32 %v4415, 4294901760
  %4417 = vmatpush1.msra.mxu0 %v4416
  %v4418 = vand.u32 %v224, 4294901760
  %v4419 = vsub.f32 %v224, %v4418
  %v4420 = vand.u32 %v4419, 4294901760
  %v4421 = vsub.f32 %v4419, %v4420
  %v4422 = vand.u32 %v4421, 4294901760
  %4423 = vmatprep.subr.mxu0 %v4422
  %v4424 = vand.u32 %v223, 4294901760
  %v4425 = vsub.f32 %v223, %v4424
  %v4426 = vand.u32 %v4425, 4294901760
  %v4427 = vsub.f32 %v4425, %v4426
  %v4428 = vand.u32 %v4427, 4294901760
  %4429 = vmatpush1.msra.mxu0 %v4428
  %v4430 = vand.u32 %v226, 4294901760
  %v4431 = vsub.f32 %v226, %v4430
  %v4432 = vand.u32 %v4431, 4294901760
  %v4433 = vsub.f32 %v4431, %v4432
  %v4434 = vand.u32 %v4433, 4294901760
  %4435 = vmatprep.subr.mxu0 %v4434
  %v4436 = vand.u32 %v225, 4294901760
  %v4437 = vsub.f32 %v225, %v4436
  %v4438 = vand.u32 %v4437, 4294901760
  %v4439 = vsub.f32 %v4437, %v4438
  %v4440 = vand.u32 %v4439, 4294901760
  %4441 = vmatpush1.msra.mxu0 %v4440
  %v4442 = vand.u32 %v228, 4294901760
  %v4443 = vsub.f32 %v228, %v4442
  %v4444 = vand.u32 %v4443, 4294901760
  %v4445 = vsub.f32 %v4443, %v4444
  %v4446 = vand.u32 %v4445, 4294901760
  %4447 = vmatprep.subr.mxu0 %v4446
  %v4448 = vand.u32 %v227, 4294901760
  %v4449 = vsub.f32 %v227, %v4448
  %v4450 = vand.u32 %v4449, 4294901760
  %v4451 = vsub.f32 %v4449, %v4450
  %v4452 = vand.u32 %v4451, 4294901760
  %4453 = vmatpush1.msra.mxu0 %v4452
  %v4454 = vand.u32 %v230, 4294901760
  %v4455 = vsub.f32 %v230, %v4454
  %v4456 = vand.u32 %v4455, 4294901760
  %v4457 = vsub.f32 %v4455, %v4456
  %v4458 = vand.u32 %v4457, 4294901760
  %4459 = vmatprep.subr.mxu0 %v4458
  %v4460 = vand.u32 %v229, 4294901760
  %v4461 = vsub.f32 %v229, %v4460
  %v4462 = vand.u32 %v4461, 4294901760
  %v4463 = vsub.f32 %v4461, %v4462
  %v4464 = vand.u32 %v4463, 4294901760
  %4465 = vmatpush1.msra.mxu0 %v4464
  %v4466 = vand.u32 %v232, 4294901760
  %v4467 = vsub.f32 %v232, %v4466
  %v4468 = vand.u32 %v4467, 4294901760
  %v4469 = vsub.f32 %v4467, %v4468
  %v4470 = vand.u32 %v4469, 4294901760
  %4471 = vmatprep.subr.mxu0 %v4470
  %v4472 = vand.u32 %v231, 4294901760
  %v4473 = vsub.f32 %v231, %v4472
  %v4474 = vand.u32 %v4473, 4294901760
  %v4475 = vsub.f32 %v4473, %v4474
  %v4476 = vand.u32 %v4475, 4294901760
  %4477 = vmatpush1.msra.mxu0 %v4476
  %v4478 = vand.u32 %v234, 4294901760
  %v4479 = vsub.f32 %v234, %v4478
  %v4480 = vand.u32 %v4479, 4294901760
  %v4481 = vsub.f32 %v4479, %v4480
  %v4482 = vand.u32 %v4481, 4294901760
  %4483 = vmatprep.subr.mxu0 %v4482
  %v4484 = vand.u32 %v233, 4294901760
  %v4485 = vsub.f32 %v233, %v4484
  %v4486 = vand.u32 %v4485, 4294901760
  %v4487 = vsub.f32 %v4485, %v4486
  %v4488 = vand.u32 %v4487, 4294901760
  %4489 = vmatpush1.msra.mxu0 %v4488
  %v4490 = vand.u32 %v236, 4294901760
  %v4491 = vsub.f32 %v236, %v4490
  %v4492 = vand.u32 %v4491, 4294901760
  %v4493 = vsub.f32 %v4491, %v4492
  %v4494 = vand.u32 %v4493, 4294901760
  %4495 = vmatprep.subr.mxu0 %v4494
  %v4496 = vand.u32 %v235, 4294901760
  %v4497 = vsub.f32 %v235, %v4496
  %v4498 = vand.u32 %v4497, 4294901760
  %v4499 = vsub.f32 %v4497, %v4498
  %v4500 = vand.u32 %v4499, 4294901760
  %4501 = vmatpush1.msra.mxu0 %v4500
  %v4502 = vand.u32 %v238, 4294901760
  %v4503 = vsub.f32 %v238, %v4502
  %v4504 = vand.u32 %v4503, 4294901760
  %v4505 = vsub.f32 %v4503, %v4504
  %v4506 = vand.u32 %v4505, 4294901760
  %4507 = vmatprep.subr.mxu0 %v4506
  %v4508 = vand.u32 %v237, 4294901760
  %v4509 = vsub.f32 %v237, %v4508
  %v4510 = vand.u32 %v4509, 4294901760
  %v4511 = vsub.f32 %v4509, %v4510
  %v4512 = vand.u32 %v4511, 4294901760
  %4513 = vmatpush1.msra.mxu0 %v4512
  %v4514 = vand.u32 %v240, 4294901760
  %v4515 = vsub.f32 %v240, %v4514
  %v4516 = vand.u32 %v4515, 4294901760
  %v4517 = vsub.f32 %v4515, %v4516
  %v4518 = vand.u32 %v4517, 4294901760
  %4519 = vmatprep.subr.mxu0 %v4518
  %v4520 = vand.u32 %v239, 4294901760
  %v4521 = vsub.f32 %v239, %v4520
  %v4522 = vand.u32 %v4521, 4294901760
  %v4523 = vsub.f32 %v4521, %v4522
  %v4524 = vand.u32 %v4523, 4294901760
  %4525 = vmatpush1.msra.mxu0 %v4524
  %v4526 = vand.u32 %v242, 4294901760
  %v4527 = vsub.f32 %v242, %v4526
  %v4528 = vand.u32 %v4527, 4294901760
  %v4529 = vsub.f32 %v4527, %v4528
  %v4530 = vand.u32 %v4529, 4294901760
  %4531 = vmatprep.subr.mxu0 %v4530
  %v4532 = vand.u32 %v241, 4294901760
  %v4533 = vsub.f32 %v241, %v4532
  %v4534 = vand.u32 %v4533, 4294901760
  %v4535 = vsub.f32 %v4533, %v4534
  %v4536 = vand.u32 %v4535, 4294901760
  %4537 = vmatpush1.msra.mxu0 %v4536
  %v4538 = vand.u32 %v244, 4294901760
  %v4539 = vsub.f32 %v244, %v4538
  %v4540 = vand.u32 %v4539, 4294901760
  %v4541 = vsub.f32 %v4539, %v4540
  %v4542 = vand.u32 %v4541, 4294901760
  %4543 = vmatprep.subr.mxu0 %v4542
  %v4544 = vand.u32 %v243, 4294901760
  %v4545 = vsub.f32 %v243, %v4544
  %v4546 = vand.u32 %v4545, 4294901760
  %v4547 = vsub.f32 %v4545, %v4546
  %v4548 = vand.u32 %v4547, 4294901760
  %4549 = vmatpush1.msra.mxu0 %v4548
  %v4550 = vand.u32 %v246, 4294901760
  %v4551 = vsub.f32 %v246, %v4550
  %v4552 = vand.u32 %v4551, 4294901760
  %v4553 = vsub.f32 %v4551, %v4552
  %v4554 = vand.u32 %v4553, 4294901760
  %4555 = vmatprep.subr.mxu0 %v4554
  %v4556 = vand.u32 %v245, 4294901760
  %v4557 = vsub.f32 %v245, %v4556
  %v4558 = vand.u32 %v4557, 4294901760
  %v4559 = vsub.f32 %v4557, %v4558
  %v4560 = vand.u32 %v4559, 4294901760
  %4561 = vmatpush1.msra.mxu0 %v4560
  %v4562 = vand.u32 %v248, 4294901760
  %v4563 = vsub.f32 %v248, %v4562
  %v4564 = vand.u32 %v4563, 4294901760
  %v4565 = vsub.f32 %v4563, %v4564
  %v4566 = vand.u32 %v4565, 4294901760
  %4567 = vmatprep.subr.mxu0 %v4566
  %v4568 = vand.u32 %v247, 4294901760
  %v4569 = vsub.f32 %v247, %v4568
  %v4570 = vand.u32 %v4569, 4294901760
  %v4571 = vsub.f32 %v4569, %v4570
  %v4572 = vand.u32 %v4571, 4294901760
  %4573 = vmatpush1.msra.mxu0 %v4572
  %v4574 = vand.u32 %v250, 4294901760
  %v4575 = vsub.f32 %v250, %v4574
  %v4576 = vand.u32 %v4575, 4294901760
  %v4577 = vsub.f32 %v4575, %v4576
  %v4578 = vand.u32 %v4577, 4294901760
  %4579 = vmatprep.subr.mxu0 %v4578
  %v4580 = vand.u32 %v249, 4294901760
  %v4581 = vsub.f32 %v249, %v4580
  %v4582 = vand.u32 %v4581, 4294901760
  %v4583 = vsub.f32 %v4581, %v4582
  %v4584 = vand.u32 %v4583, 4294901760
  %4585 = vmatpush1.msra.mxu0 %v4584
  %v4586 = vand.u32 %v252, 4294901760
  %v4587 = vsub.f32 %v252, %v4586
  %v4588 = vand.u32 %v4587, 4294901760
  %v4589 = vsub.f32 %v4587, %v4588
  %v4590 = vand.u32 %v4589, 4294901760
  %4591 = vmatprep.subr.mxu0 %v4590
  %v4592 = vand.u32 %v251, 4294901760
  %v4593 = vsub.f32 %v251, %v4592
  %v4594 = vand.u32 %v4593, 4294901760
  %v4595 = vsub.f32 %v4593, %v4594
  %v4596 = vand.u32 %v4595, 4294901760
  %4597 = vmatpush1.msra.mxu0 %v4596
  %v4598 = vand.u32 %v254, 4294901760
  %v4599 = vsub.f32 %v254, %v4598
  %v4600 = vand.u32 %v4599, 4294901760
  %v4601 = vsub.f32 %v4599, %v4600
  %v4602 = vand.u32 %v4601, 4294901760
  %4603 = vmatprep.subr.mxu0 %v4602
  %v4604 = vand.u32 %v253, 4294901760
  %v4605 = vsub.f32 %v253, %v4604
  %v4606 = vand.u32 %v4605, 4294901760
  %v4607 = vsub.f32 %v4605, %v4606
  %v4608 = vand.u32 %v4607, 4294901760
  %4609 = vmatpush1.msra.mxu0 %v4608
  %v4610 = vand.u32 %v256, 4294901760
  %v4611 = vsub.f32 %v256, %v4610
  %v4612 = vand.u32 %v4611, 4294901760
  %v4613 = vsub.f32 %v4611, %v4612
  %v4614 = vand.u32 %v4613, 4294901760
  %4615 = vmatprep.subr.mxu0 %v4614
  %v4616 = vand.u32 %v255, 4294901760
  %v4617 = vsub.f32 %v255, %v4616
  %v4618 = vand.u32 %v4617, 4294901760
  %v4619 = vsub.f32 %v4617, %v4618
  %v4620 = vand.u32 %v4619, 4294901760
  %4621 = vmatpush1.msra.mxu0 %v4620
  %v4622 = vand.u32 %v258, 4294901760
  %v4623 = vsub.f32 %v258, %v4622
  %v4624 = vand.u32 %v4623, 4294901760
  %v4625 = vsub.f32 %v4623, %v4624
  %v4626 = vand.u32 %v4625, 4294901760
  %4627 = vmatprep.subr.mxu0 %v4626
  %v4628 = vand.u32 %v257, 4294901760
  %v4629 = vsub.f32 %v257, %v4628
  %v4630 = vand.u32 %v4629, 4294901760
  %v4631 = vsub.f32 %v4629, %v4630
  %v4632 = vand.u32 %v4631, 4294901760
  %4633 = vmatpush1.msra.mxu0 %v4632
  %v4634 = vand.u32 %v260, 4294901760
  %v4635 = vsub.f32 %v260, %v4634
  %v4636 = vand.u32 %v4635, 4294901760
  %v4637 = vsub.f32 %v4635, %v4636
  %v4638 = vand.u32 %v4637, 4294901760
  %4639 = vmatprep.subr.mxu0 %v4638
  %v4640 = vand.u32 %v259, 4294901760
  %v4641 = vsub.f32 %v259, %v4640
  %v4642 = vand.u32 %v4641, 4294901760
  %v4643 = vsub.f32 %v4641, %v4642
  %v4644 = vand.u32 %v4643, 4294901760
  %4645 = vmatpush1.msra.mxu0 %v4644
  %v4646 = vand.u32 %v262, 4294901760
  %v4647 = vsub.f32 %v262, %v4646
  %v4648 = vand.u32 %v4647, 4294901760
  %v4649 = vsub.f32 %v4647, %v4648
  %v4650 = vand.u32 %v4649, 4294901760
  %4651 = vmatprep.subr.mxu0 %v4650
  %v4652 = vand.u32 %v261, 4294901760
  %v4653 = vsub.f32 %v261, %v4652
  %v4654 = vand.u32 %v4653, 4294901760
  %v4655 = vsub.f32 %v4653, %v4654
  %v4656 = vand.u32 %v4655, 4294901760
  %4657 = vmatpush1.msra.mxu0 %v4656
  %v4658 = vand.u32 %v264, 4294901760
  %v4659 = vsub.f32 %v264, %v4658
  %v4660 = vand.u32 %v4659, 4294901760
  %v4661 = vsub.f32 %v4659, %v4660
  %v4662 = vand.u32 %v4661, 4294901760
  %4663 = vmatprep.subr.mxu0 %v4662
  %v4664 = vand.u32 %v263, 4294901760
  %v4665 = vsub.f32 %v263, %v4664
  %v4666 = vand.u32 %v4665, 4294901760
  %v4667 = vsub.f32 %v4665, %v4666
  %v4668 = vand.u32 %v4667, 4294901760
  %4669 = vmatpush1.msra.mxu0 %v4668
  %v4670 = vand.u32 %v266, 4294901760
  %v4671 = vsub.f32 %v266, %v4670
  %v4672 = vand.u32 %v4671, 4294901760
  %v4673 = vsub.f32 %v4671, %v4672
  %v4674 = vand.u32 %v4673, 4294901760
  %4675 = vmatprep.subr.mxu0 %v4674
  %v4676 = vand.u32 %v265, 4294901760
  %v4677 = vsub.f32 %v265, %v4676
  %v4678 = vand.u32 %v4677, 4294901760
  %v4679 = vsub.f32 %v4677, %v4678
  %v4680 = vand.u32 %v4679, 4294901760
  %4681 = vmatpush1.msra.mxu0 %v4680
  %v4682 = vand.u32 %v268, 4294901760
  %v4683 = vsub.f32 %v268, %v4682
  %v4684 = vand.u32 %v4683, 4294901760
  %v4685 = vsub.f32 %v4683, %v4684
  %v4686 = vand.u32 %v4685, 4294901760
  %4687 = vmatprep.subr.mxu0 %v4686
  %v4688 = vand.u32 %v267, 4294901760
  %v4689 = vsub.f32 %v267, %v4688
  %v4690 = vand.u32 %v4689, 4294901760
  %v4691 = vsub.f32 %v4689, %v4690
  %v4692 = vand.u32 %v4691, 4294901760
  %4693 = vmatpush1.msra.mxu0 %v4692
  %v4694 = vand.u32 %v304, 4294901760
  %4695 = vmatprep.mubr.f32.mxu0 %v4694
  %v4696 = vand.u32 %v302, 4294901760
  %4697 = vmatmul.mubr.f32.gmra.mrb[0].mxu0 %v4696
  %v4698 = vpop.f32.mrb[0].mxu0
  %v4699 = vadd.f32 %v4306, %v4698
  %v4700 = vpop.f32.mrb[0].mxu0
  %v4701 = vadd.f32 %v4308, %v4700
  %4702 = vdwg.mxu0
  %v4703 = vand.u32 %v206, 4294901760
  %v4704 = vsub.f32 %v206, %v4703
  %4705 = vmatprep.subr.mxu0 %v4704
  %v4706 = vand.u32 %v205, 4294901760
  %v4707 = vsub.f32 %v205, %v4706
  %4708 = vmatpush1.msra.mxu0 %v4707
  %v4709 = vand.u32 %v208, 4294901760
  %v4710 = vsub.f32 %v208, %v4709
  %4711 = vmatprep.subr.mxu0 %v4710
  %v4712 = vand.u32 %v207, 4294901760
  %v4713 = vsub.f32 %v207, %v4712
  %4714 = vmatpush1.msra.mxu0 %v4713
  %v4715 = vand.u32 %v210, 4294901760
  %v4716 = vsub.f32 %v210, %v4715
  %4717 = vmatprep.subr.mxu0 %v4716
  %v4718 = vand.u32 %v209, 4294901760
  %v4719 = vsub.f32 %v209, %v4718
  %4720 = vmatpush1.msra.mxu0 %v4719
  %v4721 = vand.u32 %v212, 4294901760
  %v4722 = vsub.f32 %v212, %v4721
  %4723 = vmatprep.subr.mxu0 %v4722
  %v4724 = vand.u32 %v211, 4294901760
  %v4725 = vsub.f32 %v211, %v4724
  %4726 = vmatpush1.msra.mxu0 %v4725
  %v4727 = vand.u32 %v214, 4294901760
  %v4728 = vsub.f32 %v214, %v4727
  %4729 = vmatprep.subr.mxu0 %v4728
  %v4730 = vand.u32 %v213, 4294901760
  %v4731 = vsub.f32 %v213, %v4730
  %4732 = vmatpush1.msra.mxu0 %v4731
  %v4733 = vand.u32 %v216, 4294901760
  %v4734 = vsub.f32 %v216, %v4733
  %4735 = vmatprep.subr.mxu0 %v4734
  %v4736 = vand.u32 %v215, 4294901760
  %v4737 = vsub.f32 %v215, %v4736
  %4738 = vmatpush1.msra.mxu0 %v4737
  %v4739 = vand.u32 %v218, 4294901760
  %v4740 = vsub.f32 %v218, %v4739
  %4741 = vmatprep.subr.mxu0 %v4740
  %v4742 = vand.u32 %v217, 4294901760
  %v4743 = vsub.f32 %v217, %v4742
  %4744 = vmatpush1.msra.mxu0 %v4743
  %v4745 = vand.u32 %v220, 4294901760
  %v4746 = vsub.f32 %v220, %v4745
  %4747 = vmatprep.subr.mxu0 %v4746
  %v4748 = vand.u32 %v219, 4294901760
  %v4749 = vsub.f32 %v219, %v4748
  %4750 = vmatpush1.msra.mxu0 %v4749
  %v4751 = vand.u32 %v222, 4294901760
  %v4752 = vsub.f32 %v222, %v4751
  %4753 = vmatprep.subr.mxu0 %v4752
  %v4754 = vand.u32 %v221, 4294901760
  %v4755 = vsub.f32 %v221, %v4754
  %4756 = vmatpush1.msra.mxu0 %v4755
  %v4757 = vand.u32 %v224, 4294901760
  %v4758 = vsub.f32 %v224, %v4757
  %4759 = vmatprep.subr.mxu0 %v4758
  %v4760 = vand.u32 %v223, 4294901760
  %v4761 = vsub.f32 %v223, %v4760
  %4762 = vmatpush1.msra.mxu0 %v4761
  %v4763 = vand.u32 %v226, 4294901760
  %v4764 = vsub.f32 %v226, %v4763
  %4765 = vmatprep.subr.mxu0 %v4764
  %v4766 = vand.u32 %v225, 4294901760
  %v4767 = vsub.f32 %v225, %v4766
  %4768 = vmatpush1.msra.mxu0 %v4767
  %v4769 = vand.u32 %v228, 4294901760
  %v4770 = vsub.f32 %v228, %v4769
  %4771 = vmatprep.subr.mxu0 %v4770
  %v4772 = vand.u32 %v227, 4294901760
  %v4773 = vsub.f32 %v227, %v4772
  %4774 = vmatpush1.msra.mxu0 %v4773
  %v4775 = vand.u32 %v230, 4294901760
  %v4776 = vsub.f32 %v230, %v4775
  %4777 = vmatprep.subr.mxu0 %v4776
  %v4778 = vand.u32 %v229, 4294901760
  %v4779 = vsub.f32 %v229, %v4778
  %4780 = vmatpush1.msra.mxu0 %v4779
  %v4781 = vand.u32 %v232, 4294901760
  %v4782 = vsub.f32 %v232, %v4781
  %4783 = vmatprep.subr.mxu0 %v4782
  %v4784 = vand.u32 %v231, 4294901760
  %v4785 = vsub.f32 %v231, %v4784
  %4786 = vmatpush1.msra.mxu0 %v4785
  %v4787 = vand.u32 %v234, 4294901760
  %v4788 = vsub.f32 %v234, %v4787
  %4789 = vmatprep.subr.mxu0 %v4788
  %v4790 = vand.u32 %v233, 4294901760
  %v4791 = vsub.f32 %v233, %v4790
  %4792 = vmatpush1.msra.mxu0 %v4791
  %v4793 = vand.u32 %v236, 4294901760
  %v4794 = vsub.f32 %v236, %v4793
  %4795 = vmatprep.subr.mxu0 %v4794
  %v4796 = vand.u32 %v235, 4294901760
  %v4797 = vsub.f32 %v235, %v4796
  %4798 = vmatpush1.msra.mxu0 %v4797
  %v4799 = vand.u32 %v238, 4294901760
  %v4800 = vsub.f32 %v238, %v4799
  %4801 = vmatprep.subr.mxu0 %v4800
  %v4802 = vand.u32 %v237, 4294901760
  %v4803 = vsub.f32 %v237, %v4802
  %4804 = vmatpush1.msra.mxu0 %v4803
  %v4805 = vand.u32 %v240, 4294901760
  %v4806 = vsub.f32 %v240, %v4805
  %4807 = vmatprep.subr.mxu0 %v4806
  %v4808 = vand.u32 %v239, 4294901760
  %v4809 = vsub.f32 %v239, %v4808
  %4810 = vmatpush1.msra.mxu0 %v4809
  %v4811 = vand.u32 %v242, 4294901760
  %v4812 = vsub.f32 %v242, %v4811
  %4813 = vmatprep.subr.mxu0 %v4812
  %v4814 = vand.u32 %v241, 4294901760
  %v4815 = vsub.f32 %v241, %v4814
  %4816 = vmatpush1.msra.mxu0 %v4815
  %v4817 = vand.u32 %v244, 4294901760
  %v4818 = vsub.f32 %v244, %v4817
  %4819 = vmatprep.subr.mxu0 %v4818
  %v4820 = vand.u32 %v243, 4294901760
  %v4821 = vsub.f32 %v243, %v4820
  %4822 = vmatpush1.msra.mxu0 %v4821
  %v4823 = vand.u32 %v246, 4294901760
  %v4824 = vsub.f32 %v246, %v4823
  %4825 = vmatprep.subr.mxu0 %v4824
  %v4826 = vand.u32 %v245, 4294901760
  %v4827 = vsub.f32 %v245, %v4826
  %4828 = vmatpush1.msra.mxu0 %v4827
  %v4829 = vand.u32 %v248, 4294901760
  %v4830 = vsub.f32 %v248, %v4829
  %4831 = vmatprep.subr.mxu0 %v4830
  %v4832 = vand.u32 %v247, 4294901760
  %v4833 = vsub.f32 %v247, %v4832
  %4834 = vmatpush1.msra.mxu0 %v4833
  %v4835 = vand.u32 %v250, 4294901760
  %v4836 = vsub.f32 %v250, %v4835
  %4837 = vmatprep.subr.mxu0 %v4836
  %v4838 = vand.u32 %v249, 4294901760
  %v4839 = vsub.f32 %v249, %v4838
  %4840 = vmatpush1.msra.mxu0 %v4839
  %v4841 = vand.u32 %v252, 4294901760
  %v4842 = vsub.f32 %v252, %v4841
  %4843 = vmatprep.subr.mxu0 %v4842
  %v4844 = vand.u32 %v251, 4294901760
  %v4845 = vsub.f32 %v251, %v4844
  %4846 = vmatpush1.msra.mxu0 %v4845
  %v4847 = vand.u32 %v254, 4294901760
  %v4848 = vsub.f32 %v254, %v4847
  %4849 = vmatprep.subr.mxu0 %v4848
  %v4850 = vand.u32 %v253, 4294901760
  %v4851 = vsub.f32 %v253, %v4850
  %4852 = vmatpush1.msra.mxu0 %v4851
  %v4853 = vand.u32 %v256, 4294901760
  %v4854 = vsub.f32 %v256, %v4853
  %4855 = vmatprep.subr.mxu0 %v4854
  %v4856 = vand.u32 %v255, 4294901760
  %v4857 = vsub.f32 %v255, %v4856
  %4858 = vmatpush1.msra.mxu0 %v4857
  %v4859 = vand.u32 %v258, 4294901760
  %v4860 = vsub.f32 %v258, %v4859
  %4861 = vmatprep.subr.mxu0 %v4860
  %v4862 = vand.u32 %v257, 4294901760
  %v4863 = vsub.f32 %v257, %v4862
  %4864 = vmatpush1.msra.mxu0 %v4863
  %v4865 = vand.u32 %v260, 4294901760
  %v4866 = vsub.f32 %v260, %v4865
  %4867 = vmatprep.subr.mxu0 %v4866
  %v4868 = vand.u32 %v259, 4294901760
  %v4869 = vsub.f32 %v259, %v4868
  %4870 = vmatpush1.msra.mxu0 %v4869
  %v4871 = vand.u32 %v262, 4294901760
  %v4872 = vsub.f32 %v262, %v4871
  %4873 = vmatprep.subr.mxu0 %v4872
  %v4874 = vand.u32 %v261, 4294901760
  %v4875 = vsub.f32 %v261, %v4874
  %4876 = vmatpush1.msra.mxu0 %v4875
  %v4877 = vand.u32 %v264, 4294901760
  %v4878 = vsub.f32 %v264, %v4877
  %4879 = vmatprep.subr.mxu0 %v4878
  %v4880 = vand.u32 %v263, 4294901760
  %v4881 = vsub.f32 %v263, %v4880
  %4882 = vmatpush1.msra.mxu0 %v4881
  %v4883 = vand.u32 %v266, 4294901760
  %v4884 = vsub.f32 %v266, %v4883
  %4885 = vmatprep.subr.mxu0 %v4884
  %v4886 = vand.u32 %v265, 4294901760
  %v4887 = vsub.f32 %v265, %v4886
  %4888 = vmatpush1.msra.mxu0 %v4887
  %v4889 = vand.u32 %v268, 4294901760
  %v4890 = vsub.f32 %v268, %v4889
  %4891 = vmatprep.subr.mxu0 %v4890
  %v4892 = vand.u32 %v267, 4294901760
  %v4893 = vsub.f32 %v267, %v4892
  %4894 = vmatpush1.msra.mxu0 %v4893
  %v4895 = vand.u32 %v304, 4294901760
  %v4896 = vsub.f32 %v304, %v4895
  %4897 = vmatprep.mubr.f32.mxu0 %v4896
  %v4898 = vand.u32 %v302, 4294901760
  %v4899 = vsub.f32 %v302, %v4898
  %4900 = vmatmul.mubr.f32.gmra.mrb[0].mxu0 %v4899
  %v4901 = vpop.f32.mrb[0].mxu0
  %v4902 = vadd.f32 %v4699, %v4901
  %v4903 = vpop.f32.mrb[0].mxu0
  %v4904 = vadd.f32 %v4701, %v4903
  %4905 = vdwg.mxu0
  %v4906 = vand.u32 %v206, 4294901760
  %4907 = vmatprep.subr.mxu0 %v4906
  %v4908 = vand.u32 %v205, 4294901760
  %4909 = vmatpush1.msra.mxu0 %v4908
  %v4910 = vand.u32 %v208, 4294901760
  %4911 = vmatprep.subr.mxu0 %v4910
  %v4912 = vand.u32 %v207, 4294901760
  %4913 = vmatpush1.msra.mxu0 %v4912
  %v4914 = vand.u32 %v210, 4294901760
  %4915 = vmatprep.subr.mxu0 %v4914
  %v4916 = vand.u32 %v209, 4294901760
  %4917 = vmatpush1.msra.mxu0 %v4916
  %v4918 = vand.u32 %v212, 4294901760
  %4919 = vmatprep.subr.mxu0 %v4918
  %v4920 = vand.u32 %v211, 4294901760
  %4921 = vmatpush1.msra.mxu0 %v4920
  %v4922 = vand.u32 %v214, 4294901760
  %4923 = vmatprep.subr.mxu0 %v4922
  %v4924 = vand.u32 %v213, 4294901760
  %4925 = vmatpush1.msra.mxu0 %v4924
  %v4926 = vand.u32 %v216, 4294901760
  %4927 = vmatprep.subr.mxu0 %v4926
  %v4928 = vand.u32 %v215, 4294901760
  %4929 = vmatpush1.msra.mxu0 %v4928
  %v4930 = vand.u32 %v218, 4294901760
  %4931 = vmatprep.subr.mxu0 %v4930
  %v4932 = vand.u32 %v217, 4294901760
  %4933 = vmatpush1.msra.mxu0 %v4932
  %v4934 = vand.u32 %v220, 4294901760
  %4935 = vmatprep.subr.mxu0 %v4934
  %v4936 = vand.u32 %v219, 4294901760
  %4937 = vmatpush1.msra.mxu0 %v4936
  %v4938 = vand.u32 %v222, 4294901760
  %4939 = vmatprep.subr.mxu0 %v4938
  %v4940 = vand.u32 %v221, 4294901760
  %4941 = vmatpush1.msra.mxu0 %v4940
  %v4942 = vand.u32 %v224, 4294901760
  %4943 = vmatprep.subr.mxu0 %v4942
  %v4944 = vand.u32 %v223, 4294901760
  %4945 = vmatpush1.msra.mxu0 %v4944
  %v4946 = vand.u32 %v226, 4294901760
  %4947 = vmatprep.subr.mxu0 %v4946
  %v4948 = vand.u32 %v225, 4294901760
  %4949 = vmatpush1.msra.mxu0 %v4948
  %v4950 = vand.u32 %v228, 4294901760
  %4951 = vmatprep.subr.mxu0 %v4950
  %v4952 = vand.u32 %v227, 4294901760
  %4953 = vmatpush1.msra.mxu0 %v4952
  %v4954 = vand.u32 %v230, 4294901760
  %4955 = vmatprep.subr.mxu0 %v4954
  %v4956 = vand.u32 %v229, 4294901760
  %4957 = vmatpush1.msra.mxu0 %v4956
  %v4958 = vand.u32 %v232, 4294901760
  %4959 = vmatprep.subr.mxu0 %v4958
  %v4960 = vand.u32 %v231, 4294901760
  %4961 = vmatpush1.msra.mxu0 %v4960
  %v4962 = vand.u32 %v234, 4294901760
  %4963 = vmatprep.subr.mxu0 %v4962
  %v4964 = vand.u32 %v233, 4294901760
  %4965 = vmatpush1.msra.mxu0 %v4964
  %v4966 = vand.u32 %v236, 4294901760
  %4967 = vmatprep.subr.mxu0 %v4966
  %v4968 = vand.u32 %v235, 4294901760
  %4969 = vmatpush1.msra.mxu0 %v4968
  %v4970 = vand.u32 %v238, 4294901760
  %4971 = vmatprep.subr.mxu0 %v4970
  %v4972 = vand.u32 %v237, 4294901760
  %4973 = vmatpush1.msra.mxu0 %v4972
  %v4974 = vand.u32 %v240, 4294901760
  %4975 = vmatprep.subr.mxu0 %v4974
  %v4976 = vand.u32 %v239, 4294901760
  %4977 = vmatpush1.msra.mxu0 %v4976
  %v4978 = vand.u32 %v242, 4294901760
  %4979 = vmatprep.subr.mxu0 %v4978
  %v4980 = vand.u32 %v241, 4294901760
  %4981 = vmatpush1.msra.mxu0 %v4980
  %v4982 = vand.u32 %v244, 4294901760
  %4983 = vmatprep.subr.mxu0 %v4982
  %v4984 = vand.u32 %v243, 4294901760
  %4985 = vmatpush1.msra.mxu0 %v4984
  %v4986 = vand.u32 %v246, 4294901760
  %4987 = vmatprep.subr.mxu0 %v4986
  %v4988 = vand.u32 %v245, 4294901760
  %4989 = vmatpush1.msra.mxu0 %v4988
  %v4990 = vand.u32 %v248, 4294901760
  %4991 = vmatprep.subr.mxu0 %v4990
  %v4992 = vand.u32 %v247, 4294901760
  %4993 = vmatpush1.msra.mxu0 %v4992
  %v4994 = vand.u32 %v250, 4294901760
  %4995 = vmatprep.subr.mxu0 %v4994
  %v4996 = vand.u32 %v249, 4294901760
  %4997 = vmatpush1.msra.mxu0 %v4996
  %v4998 = vand.u32 %v252, 4294901760
  %4999 = vmatprep.subr.mxu0 %v4998
  %v5000 = vand.u32 %v251, 4294901760
  %5001 = vmatpush1.msra.mxu0 %v5000
  %v5002 = vand.u32 %v254, 4294901760
  %5003 = vmatprep.subr.mxu0 %v5002
  %v5004 = vand.u32 %v253, 4294901760
  %5005 = vmatpush1.msra.mxu0 %v5004
  %v5006 = vand.u32 %v256, 4294901760
  %5007 = vmatprep.subr.mxu0 %v5006
  %v5008 = vand.u32 %v255, 4294901760
  %5009 = vmatpush1.msra.mxu0 %v5008
  %v5010 = vand.u32 %v258, 4294901760
  %5011 = vmatprep.subr.mxu0 %v5010
  %v5012 = vand.u32 %v257, 4294901760
  %5013 = vmatpush1.msra.mxu0 %v5012
  %v5014 = vand.u32 %v260, 4294901760
  %5015 = vmatprep.subr.mxu0 %v5014
  %v5016 = vand.u32 %v259, 4294901760
  %5017 = vmatpush1.msra.mxu0 %v5016
  %v5018 = vand.u32 %v262, 4294901760
  %5019 = vmatprep.subr.mxu0 %v5018
  %v5020 = vand.u32 %v261, 4294901760
  %5021 = vmatpush1.msra.mxu0 %v5020
  %v5022 = vand.u32 %v264, 4294901760
  %5023 = vmatprep.subr.mxu0 %v5022
  %v5024 = vand.u32 %v263, 4294901760
  %5025 = vmatpush1.msra.mxu0 %v5024
  %v5026 = vand.u32 %v266, 4294901760
  %5027 = vmatprep.subr.mxu0 %v5026
  %v5028 = vand.u32 %v265, 4294901760
  %5029 = vmatpush1.msra.mxu0 %v5028
  %v5030 = vand.u32 %v268, 4294901760
  %5031 = vmatprep.subr.mxu0 %v5030
  %v5032 = vand.u32 %v267, 4294901760
  %5033 = vmatpush1.msra.mxu0 %v5032
  %v5034 = vand.u32 %v304, 4294901760
  %v5035 = vsub.f32 %v304, %v5034
  %v5036 = vand.u32 %v5035, 4294901760
  %5037 = vmatprep.mubr.f32.mxu0 %v5036
  %v5038 = vand.u32 %v302, 4294901760
  %v5039 = vsub.f32 %v302, %v5038
  %v5040 = vand.u32 %v5039, 4294901760
  %5041 = vmatmul.mubr.f32.gmra.mrb[0].mxu0 %v5040
  %v5042 = vpop.f32.mrb[0].mxu0
  %v5043 = vadd.f32 %v4902, %v5042
  %v5044 = vpop.f32.mrb[0].mxu0
  %v5045 = vadd.f32 %v4904, %v5044
  %5046 = vdwg.mxu0
  %v5047 = vand.u32 %v206, 4294901760
  %v5048 = vsub.f32 %v206, %v5047
  %v5049 = vand.u32 %v5048, 4294901760
  %5050 = vmatprep.subr.mxu0 %v5049
  %v5051 = vand.u32 %v205, 4294901760
  %v5052 = vsub.f32 %v205, %v5051
  %v5053 = vand.u32 %v5052, 4294901760
  %5054 = vmatpush1.msra.mxu0 %v5053
  %v5055 = vand.u32 %v208, 4294901760
  %v5056 = vsub.f32 %v208, %v5055
  %v5057 = vand.u32 %v5056, 4294901760
  %5058 = vmatprep.subr.mxu0 %v5057
  %v5059 = vand.u32 %v207, 4294901760
  %v5060 = vsub.f32 %v207, %v5059
  %v5061 = vand.u32 %v5060, 4294901760
  %5062 = vmatpush1.msra.mxu0 %v5061
  %v5063 = vand.u32 %v210, 4294901760
  %v5064 = vsub.f32 %v210, %v5063
  %v5065 = vand.u32 %v5064, 4294901760
  %5066 = vmatprep.subr.mxu0 %v5065
  %v5067 = vand.u32 %v209, 4294901760
  %v5068 = vsub.f32 %v209, %v5067
  %v5069 = vand.u32 %v5068, 4294901760
  %5070 = vmatpush1.msra.mxu0 %v5069
  %v5071 = vand.u32 %v212, 4294901760
  %v5072 = vsub.f32 %v212, %v5071
  %v5073 = vand.u32 %v5072, 4294901760
  %5074 = vmatprep.subr.mxu0 %v5073
  %v5075 = vand.u32 %v211, 4294901760
  %v5076 = vsub.f32 %v211, %v5075
  %v5077 = vand.u32 %v5076, 4294901760
  %5078 = vmatpush1.msra.mxu0 %v5077
  %v5079 = vand.u32 %v214, 4294901760
  %v5080 = vsub.f32 %v214, %v5079
  %v5081 = vand.u32 %v5080, 4294901760
  %5082 = vmatprep.subr.mxu0 %v5081
  %v5083 = vand.u32 %v213, 4294901760
  %v5084 = vsub.f32 %v213, %v5083
  %v5085 = vand.u32 %v5084, 4294901760
  %5086 = vmatpush1.msra.mxu0 %v5085
  %v5087 = vand.u32 %v216, 4294901760
  %v5088 = vsub.f32 %v216, %v5087
  %v5089 = vand.u32 %v5088, 4294901760
  %5090 = vmatprep.subr.mxu0 %v5089
  %v5091 = vand.u32 %v215, 4294901760
  %v5092 = vsub.f32 %v215, %v5091
  %v5093 = vand.u32 %v5092, 4294901760
  %5094 = vmatpush1.msra.mxu0 %v5093
  %v5095 = vand.u32 %v218, 4294901760
  %v5096 = vsub.f32 %v218, %v5095
  %v5097 = vand.u32 %v5096, 4294901760
  %5098 = vmatprep.subr.mxu0 %v5097
  %v5099 = vand.u32 %v217, 4294901760
  %v5100 = vsub.f32 %v217, %v5099
  %v5101 = vand.u32 %v5100, 4294901760
  %5102 = vmatpush1.msra.mxu0 %v5101
  %v5103 = vand.u32 %v220, 4294901760
  %v5104 = vsub.f32 %v220, %v5103
  %v5105 = vand.u32 %v5104, 4294901760
  %5106 = vmatprep.subr.mxu0 %v5105
  %v5107 = vand.u32 %v219, 4294901760
  %v5108 = vsub.f32 %v219, %v5107
  %v5109 = vand.u32 %v5108, 4294901760
  %5110 = vmatpush1.msra.mxu0 %v5109
  %v5111 = vand.u32 %v222, 4294901760
  %v5112 = vsub.f32 %v222, %v5111
  %v5113 = vand.u32 %v5112, 4294901760
  %5114 = vmatprep.subr.mxu0 %v5113
  %v5115 = vand.u32 %v221, 4294901760
  %v5116 = vsub.f32 %v221, %v5115
  %v5117 = vand.u32 %v5116, 4294901760
  %5118 = vmatpush1.msra.mxu0 %v5117
  %v5119 = vand.u32 %v224, 4294901760
  %v5120 = vsub.f32 %v224, %v5119
  %v5121 = vand.u32 %v5120, 4294901760
  %5122 = vmatprep.subr.mxu0 %v5121
  %v5123 = vand.u32 %v223, 4294901760
  %v5124 = vsub.f32 %v223, %v5123
  %v5125 = vand.u32 %v5124, 4294901760
  %5126 = vmatpush1.msra.mxu0 %v5125
  %v5127 = vand.u32 %v226, 4294901760
  %v5128 = vsub.f32 %v226, %v5127
  %v5129 = vand.u32 %v5128, 4294901760
  %5130 = vmatprep.subr.mxu0 %v5129
  %v5131 = vand.u32 %v225, 4294901760
  %v5132 = vsub.f32 %v225, %v5131
  %v5133 = vand.u32 %v5132, 4294901760
  %5134 = vmatpush1.msra.mxu0 %v5133
  %v5135 = vand.u32 %v228, 4294901760
  %v5136 = vsub.f32 %v228, %v5135
  %v5137 = vand.u32 %v5136, 4294901760
  %5138 = vmatprep.subr.mxu0 %v5137
  %v5139 = vand.u32 %v227, 4294901760
  %v5140 = vsub.f32 %v227, %v5139
  %v5141 = vand.u32 %v5140, 4294901760
  %5142 = vmatpush1.msra.mxu0 %v5141
  %v5143 = vand.u32 %v230, 4294901760
  %v5144 = vsub.f32 %v230, %v5143
  %v5145 = vand.u32 %v5144, 4294901760
  %5146 = vmatprep.subr.mxu0 %v5145
  %v5147 = vand.u32 %v229, 4294901760
  %v5148 = vsub.f32 %v229, %v5147
  %v5149 = vand.u32 %v5148, 4294901760
  %5150 = vmatpush1.msra.mxu0 %v5149
  %v5151 = vand.u32 %v232, 4294901760
  %v5152 = vsub.f32 %v232, %v5151
  %v5153 = vand.u32 %v5152, 4294901760
  %5154 = vmatprep.subr.mxu0 %v5153
  %v5155 = vand.u32 %v231, 4294901760
  %v5156 = vsub.f32 %v231, %v5155
  %v5157 = vand.u32 %v5156, 4294901760
  %5158 = vmatpush1.msra.mxu0 %v5157
  %v5159 = vand.u32 %v234, 4294901760
  %v5160 = vsub.f32 %v234, %v5159
  %v5161 = vand.u32 %v5160, 4294901760
  %5162 = vmatprep.subr.mxu0 %v5161
  %v5163 = vand.u32 %v233, 4294901760
  %v5164 = vsub.f32 %v233, %v5163
  %v5165 = vand.u32 %v5164, 4294901760
  %5166 = vmatpush1.msra.mxu0 %v5165
  %v5167 = vand.u32 %v236, 4294901760
  %v5168 = vsub.f32 %v236, %v5167
  %v5169 = vand.u32 %v5168, 4294901760
  %5170 = vmatprep.subr.mxu0 %v5169
  %v5171 = vand.u32 %v235, 4294901760
  %v5172 = vsub.f32 %v235, %v5171
  %v5173 = vand.u32 %v5172, 4294901760
  %5174 = vmatpush1.msra.mxu0 %v5173
  %v5175 = vand.u32 %v238, 4294901760
  %v5176 = vsub.f32 %v238, %v5175
  %v5177 = vand.u32 %v5176, 4294901760
  %5178 = vmatprep.subr.mxu0 %v5177
  %v5179 = vand.u32 %v237, 4294901760
  %v5180 = vsub.f32 %v237, %v5179
  %v5181 = vand.u32 %v5180, 4294901760
  %5182 = vmatpush1.msra.mxu0 %v5181
  %v5183 = vand.u32 %v240, 4294901760
  %v5184 = vsub.f32 %v240, %v5183
  %v5185 = vand.u32 %v5184, 4294901760
  %5186 = vmatprep.subr.mxu0 %v5185
  %v5187 = vand.u32 %v239, 4294901760
  %v5188 = vsub.f32 %v239, %v5187
  %v5189 = vand.u32 %v5188, 4294901760
  %5190 = vmatpush1.msra.mxu0 %v5189
  %v5191 = vand.u32 %v242, 4294901760
  %v5192 = vsub.f32 %v242, %v5191
  %v5193 = vand.u32 %v5192, 4294901760
  %5194 = vmatprep.subr.mxu0 %v5193
  %v5195 = vand.u32 %v241, 4294901760
  %v5196 = vsub.f32 %v241, %v5195
  %v5197 = vand.u32 %v5196, 4294901760
  %5198 = vmatpush1.msra.mxu0 %v5197
  %v5199 = vand.u32 %v244, 4294901760
  %v5200 = vsub.f32 %v244, %v5199
  %v5201 = vand.u32 %v5200, 4294901760
  %5202 = vmatprep.subr.mxu0 %v5201
  %v5203 = vand.u32 %v243, 4294901760
  %v5204 = vsub.f32 %v243, %v5203
  %v5205 = vand.u32 %v5204, 4294901760
  %5206 = vmatpush1.msra.mxu0 %v5205
  %v5207 = vand.u32 %v246, 4294901760
  %v5208 = vsub.f32 %v246, %v5207
  %v5209 = vand.u32 %v5208, 4294901760
  %5210 = vmatprep.subr.mxu0 %v5209
  %v5211 = vand.u32 %v245, 4294901760
  %v5212 = vsub.f32 %v245, %v5211
  %v5213 = vand.u32 %v5212, 4294901760
  %5214 = vmatpush1.msra.mxu0 %v5213
  %v5215 = vand.u32 %v248, 4294901760
  %v5216 = vsub.f32 %v248, %v5215
  %v5217 = vand.u32 %v5216, 4294901760
  %5218 = vmatprep.subr.mxu0 %v5217
  %v5219 = vand.u32 %v247, 4294901760
  %v5220 = vsub.f32 %v247, %v5219
  %v5221 = vand.u32 %v5220, 4294901760
  %5222 = vmatpush1.msra.mxu0 %v5221
  %v5223 = vand.u32 %v250, 4294901760
  %v5224 = vsub.f32 %v250, %v5223
  %v5225 = vand.u32 %v5224, 4294901760
  %5226 = vmatprep.subr.mxu0 %v5225
  %v5227 = vand.u32 %v249, 4294901760
  %v5228 = vsub.f32 %v249, %v5227
  %v5229 = vand.u32 %v5228, 4294901760
  %5230 = vmatpush1.msra.mxu0 %v5229
  %v5231 = vand.u32 %v252, 4294901760
  %v5232 = vsub.f32 %v252, %v5231
  %v5233 = vand.u32 %v5232, 4294901760
  %5234 = vmatprep.subr.mxu0 %v5233
  %v5235 = vand.u32 %v251, 4294901760
  %v5236 = vsub.f32 %v251, %v5235
  %v5237 = vand.u32 %v5236, 4294901760
  %5238 = vmatpush1.msra.mxu0 %v5237
  %v5239 = vand.u32 %v254, 4294901760
  %v5240 = vsub.f32 %v254, %v5239
  %v5241 = vand.u32 %v5240, 4294901760
  %5242 = vmatprep.subr.mxu0 %v5241
  %v5243 = vand.u32 %v253, 4294901760
  %v5244 = vsub.f32 %v253, %v5243
  %v5245 = vand.u32 %v5244, 4294901760
  %5246 = vmatpush1.msra.mxu0 %v5245
  %v5247 = vand.u32 %v256, 4294901760
  %v5248 = vsub.f32 %v256, %v5247
  %v5249 = vand.u32 %v5248, 4294901760
  %5250 = vmatprep.subr.mxu0 %v5249
  %v5251 = vand.u32 %v255, 4294901760
  %v5252 = vsub.f32 %v255, %v5251
  %v5253 = vand.u32 %v5252, 4294901760
  %5254 = vmatpush1.msra.mxu0 %v5253
  %v5255 = vand.u32 %v258, 4294901760
  %v5256 = vsub.f32 %v258, %v5255
  %v5257 = vand.u32 %v5256, 4294901760
  %5258 = vmatprep.subr.mxu0 %v5257
  %v5259 = vand.u32 %v257, 4294901760
  %v5260 = vsub.f32 %v257, %v5259
  %v5261 = vand.u32 %v5260, 4294901760
  %5262 = vmatpush1.msra.mxu0 %v5261
  %v5263 = vand.u32 %v260, 4294901760
  %v5264 = vsub.f32 %v260, %v5263
  %v5265 = vand.u32 %v5264, 4294901760
  %5266 = vmatprep.subr.mxu0 %v5265
  %v5267 = vand.u32 %v259, 4294901760
  %v5268 = vsub.f32 %v259, %v5267
  %v5269 = vand.u32 %v5268, 4294901760
  %5270 = vmatpush1.msra.mxu0 %v5269
  %v5271 = vand.u32 %v262, 4294901760
  %v5272 = vsub.f32 %v262, %v5271
  %v5273 = vand.u32 %v5272, 4294901760
  %5274 = vmatprep.subr.mxu0 %v5273
  %v5275 = vand.u32 %v261, 4294901760
  %v5276 = vsub.f32 %v261, %v5275
  %v5277 = vand.u32 %v5276, 4294901760
  %5278 = vmatpush1.msra.mxu0 %v5277
  %v5279 = vand.u32 %v264, 4294901760
  %v5280 = vsub.f32 %v264, %v5279
  %v5281 = vand.u32 %v5280, 4294901760
  %5282 = vmatprep.subr.mxu0 %v5281
  %v5283 = vand.u32 %v263, 4294901760
  %v5284 = vsub.f32 %v263, %v5283
  %v5285 = vand.u32 %v5284, 4294901760
  %5286 = vmatpush1.msra.mxu0 %v5285
  %v5287 = vand.u32 %v266, 4294901760
  %v5288 = vsub.f32 %v266, %v5287
  %v5289 = vand.u32 %v5288, 4294901760
  %5290 = vmatprep.subr.mxu0 %v5289
  %v5291 = vand.u32 %v265, 4294901760
  %v5292 = vsub.f32 %v265, %v5291
  %v5293 = vand.u32 %v5292, 4294901760
  %5294 = vmatpush1.msra.mxu0 %v5293
  %v5295 = vand.u32 %v268, 4294901760
  %v5296 = vsub.f32 %v268, %v5295
  %v5297 = vand.u32 %v5296, 4294901760
  %5298 = vmatprep.subr.mxu0 %v5297
  %v5299 = vand.u32 %v267, 4294901760
  %v5300 = vsub.f32 %v267, %v5299
  %v5301 = vand.u32 %v5300, 4294901760
  %5302 = vmatpush1.msra.mxu0 %v5301
  %v5303 = vand.u32 %v304, 4294901760
  %5304 = vmatprep.mubr.f32.mxu0 %v5303
  %v5305 = vand.u32 %v302, 4294901760
  %5306 = vmatmul.mubr.f32.gmra.mrb[0].mxu0 %v5305
  %v5307 = vpop.f32.mrb[0].mxu0
  %v5308 = vadd.f32 %v5043, %v5307
  %v5309 = vpop.f32.mrb[0].mxu0
  %v5310 = vadd.f32 %v5045, %v5309
  %5311 = vdwg.mxu0
  %v5312 = vand.u32 %v206, 4294901760
  %5313 = vmatprep.subr.mxu0 %v5312
  %v5314 = vand.u32 %v205, 4294901760
  %5315 = vmatpush1.msra.mxu0 %v5314
  %v5316 = vand.u32 %v208, 4294901760
  %5317 = vmatprep.subr.mxu0 %v5316
  %v5318 = vand.u32 %v207, 4294901760
  %5319 = vmatpush1.msra.mxu0 %v5318
  %v5320 = vand.u32 %v210, 4294901760
  %5321 = vmatprep.subr.mxu0 %v5320
  %v5322 = vand.u32 %v209, 4294901760
  %5323 = vmatpush1.msra.mxu0 %v5322
  %v5324 = vand.u32 %v212, 4294901760
  %5325 = vmatprep.subr.mxu0 %v5324
  %v5326 = vand.u32 %v211, 4294901760
  %5327 = vmatpush1.msra.mxu0 %v5326
  %v5328 = vand.u32 %v214, 4294901760
  %5329 = vmatprep.subr.mxu0 %v5328
  %v5330 = vand.u32 %v213, 4294901760
  %5331 = vmatpush1.msra.mxu0 %v5330
  %v5332 = vand.u32 %v216, 4294901760
  %5333 = vmatprep.subr.mxu0 %v5332
  %v5334 = vand.u32 %v215, 4294901760
  %5335 = vmatpush1.msra.mxu0 %v5334
  %v5336 = vand.u32 %v218, 4294901760
  %5337 = vmatprep.subr.mxu0 %v5336
  %v5338 = vand.u32 %v217, 4294901760
  %5339 = vmatpush1.msra.mxu0 %v5338
  %v5340 = vand.u32 %v220, 4294901760
  %5341 = vmatprep.subr.mxu0 %v5340
  %v5342 = vand.u32 %v219, 4294901760
  %5343 = vmatpush1.msra.mxu0 %v5342
  %v5344 = vand.u32 %v222, 4294901760
  %5345 = vmatprep.subr.mxu0 %v5344
  %v5346 = vand.u32 %v221, 4294901760
  %5347 = vmatpush1.msra.mxu0 %v5346
  %v5348 = vand.u32 %v224, 4294901760
  %5349 = vmatprep.subr.mxu0 %v5348
  %v5350 = vand.u32 %v223, 4294901760
  %5351 = vmatpush1.msra.mxu0 %v5350
  %v5352 = vand.u32 %v226, 4294901760
  %5353 = vmatprep.subr.mxu0 %v5352
  %v5354 = vand.u32 %v225, 4294901760
  %5355 = vmatpush1.msra.mxu0 %v5354
  %v5356 = vand.u32 %v228, 4294901760
  %5357 = vmatprep.subr.mxu0 %v5356
  %v5358 = vand.u32 %v227, 4294901760
  %5359 = vmatpush1.msra.mxu0 %v5358
  %v5360 = vand.u32 %v230, 4294901760
  %5361 = vmatprep.subr.mxu0 %v5360
  %v5362 = vand.u32 %v229, 4294901760
  %5363 = vmatpush1.msra.mxu0 %v5362
  %v5364 = vand.u32 %v232, 4294901760
  %5365 = vmatprep.subr.mxu0 %v5364
  %v5366 = vand.u32 %v231, 4294901760
  %5367 = vmatpush1.msra.mxu0 %v5366
  %v5368 = vand.u32 %v234, 4294901760
  %5369 = vmatprep.subr.mxu0 %v5368
  %v5370 = vand.u32 %v233, 4294901760
  %5371 = vmatpush1.msra.mxu0 %v5370
  %v5372 = vand.u32 %v236, 4294901760
  %5373 = vmatprep.subr.mxu0 %v5372
  %v5374 = vand.u32 %v235, 4294901760
  %5375 = vmatpush1.msra.mxu0 %v5374
  %v5376 = vand.u32 %v238, 4294901760
  %5377 = vmatprep.subr.mxu0 %v5376
  %v5378 = vand.u32 %v237, 4294901760
  %5379 = vmatpush1.msra.mxu0 %v5378
  %v5380 = vand.u32 %v240, 4294901760
  %5381 = vmatprep.subr.mxu0 %v5380
  %v5382 = vand.u32 %v239, 4294901760
  %5383 = vmatpush1.msra.mxu0 %v5382
  %v5384 = vand.u32 %v242, 4294901760
  %5385 = vmatprep.subr.mxu0 %v5384
  %v5386 = vand.u32 %v241, 4294901760
  %5387 = vmatpush1.msra.mxu0 %v5386
  %v5388 = vand.u32 %v244, 4294901760
  %5389 = vmatprep.subr.mxu0 %v5388
  %v5390 = vand.u32 %v243, 4294901760
  %5391 = vmatpush1.msra.mxu0 %v5390
  %v5392 = vand.u32 %v246, 4294901760
  %5393 = vmatprep.subr.mxu0 %v5392
  %v5394 = vand.u32 %v245, 4294901760
  %5395 = vmatpush1.msra.mxu0 %v5394
  %v5396 = vand.u32 %v248, 4294901760
  %5397 = vmatprep.subr.mxu0 %v5396
  %v5398 = vand.u32 %v247, 4294901760
  %5399 = vmatpush1.msra.mxu0 %v5398
  %v5400 = vand.u32 %v250, 4294901760
  %5401 = vmatprep.subr.mxu0 %v5400
  %v5402 = vand.u32 %v249, 4294901760
  %5403 = vmatpush1.msra.mxu0 %v5402
  %v5404 = vand.u32 %v252, 4294901760
  %5405 = vmatprep.subr.mxu0 %v5404
  %v5406 = vand.u32 %v251, 4294901760
  %5407 = vmatpush1.msra.mxu0 %v5406
  %v5408 = vand.u32 %v254, 4294901760
  %5409 = vmatprep.subr.mxu0 %v5408
  %v5410 = vand.u32 %v253, 4294901760
  %5411 = vmatpush1.msra.mxu0 %v5410
  %v5412 = vand.u32 %v256, 4294901760
  %5413 = vmatprep.subr.mxu0 %v5412
  %v5414 = vand.u32 %v255, 4294901760
  %5415 = vmatpush1.msra.mxu0 %v5414
  %v5416 = vand.u32 %v258, 4294901760
  %5417 = vmatprep.subr.mxu0 %v5416
  %v5418 = vand.u32 %v257, 4294901760
  %5419 = vmatpush1.msra.mxu0 %v5418
  %v5420 = vand.u32 %v260, 4294901760
  %5421 = vmatprep.subr.mxu0 %v5420
  %v5422 = vand.u32 %v259, 4294901760
  %5423 = vmatpush1.msra.mxu0 %v5422
  %v5424 = vand.u32 %v262, 4294901760
  %5425 = vmatprep.subr.mxu0 %v5424
  %v5426 = vand.u32 %v261, 4294901760
  %5427 = vmatpush1.msra.mxu0 %v5426
  %v5428 = vand.u32 %v264, 4294901760
  %5429 = vmatprep.subr.mxu0 %v5428
  %v5430 = vand.u32 %v263, 4294901760
  %5431 = vmatpush1.msra.mxu0 %v5430
  %v5432 = vand.u32 %v266, 4294901760
  %5433 = vmatprep.subr.mxu0 %v5432
  %v5434 = vand.u32 %v265, 4294901760
  %5435 = vmatpush1.msra.mxu0 %v5434
  %v5436 = vand.u32 %v268, 4294901760
  %5437 = vmatprep.subr.mxu0 %v5436
  %v5438 = vand.u32 %v267, 4294901760
  %5439 = vmatpush1.msra.mxu0 %v5438
  %v5440 = vand.u32 %v304, 4294901760
  %5441 = vmatprep.mubr.f32.mxu0 %v5440
  %v5442 = vand.u32 %v302, 4294901760
  %5443 = vmatmul.mubr.f32.gmra.mrb[0].mxu0 %v5442
  %v5444 = vpop.f32.mrb[0].mxu0
  %v5445 = vadd.f32 %v5308, %v5444
  %v5446 = vpop.f32.mrb[0].mxu0
  %v5447 = vadd.f32 %v5310, %v5446
  %5448 = vdwg.mxu0
  %v5451 = vcombine.low %v5445, %v5447
  %v5453 = vunpack.c.l.s4 1983009808
  %v5454 = vunpack.c.0.s8 %v5453
  %v5455 = vlaneseq
  %v5456 = vshrl.u32 %v5455, 7
  %v5457 = vsub.s32 %v5454, %v5456
  %v5458 = vrot.slane %v5451, %v5457
  %5460 = vst [vmem:[%s2] sm:$0xf] %v5458
  // Predicated region
  $region10: #{transition_forward.1} parent=0 // pred_check
    _
  $region11: #{transition_forward.1} parent=0 // pred_check_branch
    %5462 = sbr.rel (0) target = $region13
  $region12: #{transition_forward.1} parent=0 // pred_region
    _
  $region13: #{transition_forward.1} parent=0 // pred_fallthru
    _
  // Predicated region
  $region14: #{transition_forward.1} parent=0 // pred_check
    _
  $region15: #{transition_forward.1} parent=0 // pred_check_branch
    %5464 = sbr.rel (0) target = $region17
  $region16: #{transition_forward.1} parent=0 // pred_region
    _
  $region17: #{transition_forward.1} parent=0 // pred_fallthru
    _

</llo_original>
